<compile_context>
chip_gen: v6e
topology: v6e:2x2x1
jax: 0.10.0
libtpu: 0.0.40
codegen_flags: <defaults>
</compile_context>

<pallas_src>
import functools

import jax
import jax.numpy as jnp
from jax.experimental import pallas as pl
from jax.experimental.pallas import tpu as pltpu


# ----------------------------------------------------------------------------
# Fused Pallas kernel: conv1..conv5 + LeakyReLU + 0.2-scaled residual
# ----------------------------------------------------------------------------
def _rdb_fused_kernel(x_ref, m_ref,
                      w1_ref, w2_ref, w3_ref, w4_ref, w5_ref,
                      b1_ref, b2_ref, b3_ref, b4_ref, b5_ref,
                      o_ref, sl_ref, sc_ref, sr_ref,
                      *, H, W, blocks, conv_rows):
    # x_ref  : (1, nf, P) f32, P = (H+2)*W, H-halo rows are exact zeros
    # m_ref  : (3, P) bf16  [interior-row mask, col!=0 mask, col!=W-1 mask]
    # wK_ref : (3, Cout, R_K) bf16, grouped by kx; columns block-major (ky, ci)
    # bK_ref : (Cout, 1) f32
    # o_ref  : (1, nf, H*W)
    # sl/sc/sr_ref : (ROWS, P) bf16 scratch — kx=-1 / kx=0 / kx=+1 tap stacks
    # blocks : ((row_off, n_ch, n_rows_padded), ...) for [x, x1, x2, x3, x4]
    # conv_rows : stack-row prefix length each conv contracts over
    P = x_ref.shape[-1]
    HW = H * W

    x_f32 = x_ref[0]                       # (nf, P) f32 (kept for the residual)
    m_all = m_ref[...]                     # (3, P) bf16
    m_int = m_all[0:1, :]                  # 1 on interior rows, 0 on halo rows
    m_l = m_all[1:2, :]                    # 0 where col == 0      (kx = -1 taps)
    m_r = m_all[2:3, :]                    # 0 where col == W - 1  (kx = +1 taps)

    def shift(v, s):
        # y[:, q] = v[:, (q + s) mod P]; wrap-around values only ever land on
        # masked / discarded output positions, so no extra masking needed here.
        k = s % P
        if k == 0:
            return v
        return jnp.concatenate([v[:, k:], v[:, :k]], axis=1)

    def push_block(feat, off, n_rows):
        # feat: (Cb, P) bf16 with halo rows already zero.  Materialise its 9
        # taps once: the 3 row (ky) shifts go to the kx=0 stack; the kx=+-1
        # stacks get the column-shifted, boundary-masked copies.
        rows3 = jnp.concatenate([shift(feat, -W), feat, shift(feat, W)], axis=0)
        pad = n_rows - rows3.shape[0]
        if pad:
            rows3 = jnp.concatenate(
                [rows3, jnp.zeros((pad, P), rows3.dtype)], axis=0)
        sc_ref[off:off + n_rows, :] = rows3
        sl_ref[off:off + n_rows, :] = m_l * shift(rows3, -1)
        sr_ref[off:off + n_rows, :] = m_r * shift(rows3, 1)

    def conv(w_ref, b_ref, rows):
        # 3 MXU matmuls over the aligned row-prefix of the persistent stacks.
        acc = jnp.dot(w_ref[1], sc_ref[0:rows, :],
                      preferred_element_type=jnp.float32)
        acc = acc + jnp.dot(w_ref[0], sl_ref[0:rows, :],
                            preferred_element_type=jnp.float32)
        acc = acc + jnp.dot(w_ref[2], sr_ref[0:rows, :],
                            preferred_element_type=jnp.float32)
        return acc + b_ref[...]

    lrelu = lambda v: jnp.maximum(v, v * 0.2)

    # Seed the stacks with the input block, then grow them densely on-chip.
    push_block(x_f32.astype(jnp.bfloat16), blocks[0][0], blocks[0][2])
    for i, (w_ref, b_ref) in enumerate(((w1_ref, b1_ref), (w2_ref, b2_ref),
                                        (w3_ref, b3_ref), (w4_ref, b4_ref))):
        xi = lrelu(conv(w_ref, b_ref, conv_rows[i])) * m_int   # zero halo rows
        off, _, nrows = blocks[i + 1]
        push_block(xi.astype(jnp.bfloat16), off, nrows)

    x5 = conv(w5_ref, b5_ref, conv_rows[4])                    # (nf, P) f32
    out_pad = x5 * 0.2 + x_f32                                 # fused residual
    # Drop the two halo rows (interior lanes [W, W + H*W)) -> lane-dense store.
    o_ref[0] = out_pad[:, W:W + HW].astype(o_ref.dtype)


# ----------------------------------------------------------------------------
# Wrapper: layout plumbing + pallas_call
# ----------------------------------------------------------------------------
def rdb5c_forward(x_nchw, params):
    N, nf, H, W = x_nchw.shape
    P = (H + 2) * W
    HW = H * W

    # Zero-pad only along H and flatten spatial; the W boundary is handled with
    # column masks baked into the kx=+-1 stacks.  No NCHW<->NHWC transposes.
    x_pad = jnp.pad(x_nchw, ((0, 0), (0, 0), (1, 1), (0, 0))).reshape(N, nf, P)

    pos = jnp.arange(P, dtype=jnp.int32)
    row = pos // W
    col = pos % W
    masks = jnp.stack([
        (row >= 1) & (row <= H),      # interior rows
        col != 0,                     # valid for kx = -1 taps
        col != W - 1,                 # valid for kx = +1 taps
    ], axis=0).astype(jnp.bfloat16)   # exact 0/1 in bf16

    # --- static layout of the persistent tap stacks (block-major, ky, ci) ----
    gc = params["conv1"][0].shape[3]
    block_ch = (nf, gc, gc, gc, gc)              # [x, x1, x2, x3, x4]
    PADR = 16                                    # bf16 sublane-tile granularity
    block_nrows = tuple(((3 * c + PADR - 1) // PADR) * PADR for c in block_ch)
    block_off, o = [], 0
    for r in block_nrows:
        block_off.append(o)
        o += r
    ROWS = o
    blocks = tuple(zip(block_off, block_ch, block_nrows))
    conv_rows = tuple(block_off[i] + block_nrows[i] for i in range(5))

    # --- weights: (ky,kx,ci,co) -> per-kx (co, stack-row), block padded -------
    wgs, bs = [], []
    for i in range(5):
        w, b = params[f"conv{i + 1}"]            # w: (ky, kx, ci, co) f32
        cout = w.shape[3]
        R = conv_rows[i]
        wg = jnp.zeros((3, cout, R), jnp.float32)
        ch = 0
        for bidx in range(i + 1):
            off, cb, _ = blocks[bidx]
            blk = jnp.transpose(w[:, :, ch:ch + cb, :],
                                (1, 3, 0, 2)).reshape(3, cout, 3 * cb)
            wg = wg.at[:, :, off:off + 3 * cb].set(blk)   # pad columns stay 0
            ch += cb
        wgs.append(wg.astype(jnp.bfloat16))
        bs.append(b.reshape(cout, 1).astype(jnp.float32))

    kernel = functools.partial(_rdb_fused_kernel, H=H, W=W,
                               blocks=blocks, conv_rows=conv_rows)

    out_flat = pl.pallas_call(
        kernel,
        out_shape=jax.ShapeDtypeStruct((N, nf, HW), x_nchw.dtype),
        grid=(N,),
        in_specs=[
            pl.BlockSpec((1, nf, P), lambda n: (n, 0, 0)),
            pl.BlockSpec((3, P), lambda n: (0, 0)),
        ] + [pl.BlockSpec(wg.shape, lambda n: (0, 0, 0)) for wg in wgs]
          + [pl.BlockSpec(b.shape, lambda n: (0, 0)) for b in bs],
        out_specs=pl.BlockSpec((1, nf, HW), lambda n: (n, 0, 0)),
        scratch_shapes=[pltpu.VMEM((ROWS, P), jnp.bfloat16) for _ in range(3)],
        compiler_params=pltpu.CompilerParams(
            dimension_semantics=("parallel",),   # batch elems independent (v7x 2-TC)
        ),
    )(x_pad, masks, *wgs, *bs)

    return out_flat.reshape(N, nf, H, W)


# ----------------------------------------------------------------------------
# Parameter init (matches __init__: kaiming_normal fan_in / leaky_relu, bias=0)
# ----------------------------------------------------------------------------
def init_rdb_params(key, nf, gc, dtype=jnp.float32):
    gain = 2.0 ** 0.5  # kaiming gain for leaky_relu with a=0 (PyTorch default)
    shapes = [
        (nf, gc),              # conv1
        (nf + gc, gc),         # conv2
        (nf + 2 * gc, gc),     # conv3
        (nf + 3 * gc, gc),     # conv4
        (nf + 4 * gc, nf),     # conv5
    ]
    params = {}
    for i, (cin, cout) in enumerate(shapes, start=1):
        key, sub = jax.random.split(key)
        fan_in = cin * 3 * 3
        std = gain / (fan_in ** 0.5)
        w = std * jax.random.normal(sub, (3, 3, cin, cout), dtype)  # (ky,kx,ci,co)
        b = jnp.zeros((cout,), dtype)
        params[f"conv{i}"] = (w, b)
    return params


# ----------------------------------------------------------------------------
# Pure-JAX f32 reference (for a silent correctness check)
# ----------------------------------------------------------------------------
def _ref_conv(x_nchw, w, b):
    y = jax.lax.conv_general_dilated(
        x_nchw, w, window_strides=(1, 1), padding="SAME",
        dimension_numbers=("NCHW", "HWIO", "NCHW"))
    return y + b.reshape(1, -1, 1, 1)


def rdb5c_reference(x, params):
    lrelu = lambda v: jnp.where(v >= 0, v, 0.2 * v)
    x1 = lrelu(_ref_conv(x, *params["conv1"]))
    x2 = lrelu(_ref_conv(jnp.concatenate([x, x1], 1), *params["conv2"]))
    x3 = lrelu(_ref_conv(jnp.concatenate([x, x1, x2], 1), *params["conv3"]))
    x4 = lrelu(_ref_conv(jnp.concatenate([x, x1, x2, x3], 1), *params["conv4"]))
    x5 = _ref_conv(jnp.concatenate([x, x1, x2, x3, x4], 1), *params["conv5"])
    return x5 * 0.2 + x


if __name__ == "__main__":
    # Small shapes consistent with the module: nf=8, gc=4, batch=2, spatial=16.
    nf, gc = 8, 4
    N, H, W = 2, 16, 16

    key = jax.random.PRNGKey(0)
    key, xkey = jax.random.split(key)
    x = jax.random.normal(xkey, (N, nf, H, W), jnp.float32)  # NCHW, like PyTorch

    params = init_rdb_params(key, nf, gc)

    out = jax.jit(rdb5c_forward)(x, params)
    out = jax.block_until_ready(out)

    ref = rdb5c_reference(x, params)
    assert out.shape == x.shape
    # bf16 MXU inputs with f32 accumulation -> relaxed tolerance vs f32 reference.
    assert jnp.allclose(out, ref, atol=5e-2, rtol=5e-2), (
        f"mismatch vs reference, max abs err {jnp.max(jnp.abs(out - ref))}")

    print("KERNEL_OK")
</pallas_src>

<mosaic_0001>
module attributes {stable_mosaic.version = 11 : i64} {
  func.func @_rdb_fused_kernel(%arg0: i32, %arg1: memref<1x8x288xf32, #tpu.memory_space<vmem>>, %arg2: memref<3x288xbf16, #tpu.memory_space<vmem>>, %arg3: memref<3x4x32xbf16, #tpu.memory_space<vmem>>, %arg4: memref<3x4x48xbf16, #tpu.memory_space<vmem>>, %arg5: memref<3x4x64xbf16, #tpu.memory_space<vmem>>, %arg6: memref<3x4x80xbf16, #tpu.memory_space<vmem>>, %arg7: memref<3x8x96xbf16, #tpu.memory_space<vmem>>, %arg8: memref<4x1xf32, #tpu.memory_space<vmem>>, %arg9: memref<4x1xf32, #tpu.memory_space<vmem>>, %arg10: memref<4x1xf32, #tpu.memory_space<vmem>>, %arg11: memref<4x1xf32, #tpu.memory_space<vmem>>, %arg12: memref<8x1xf32, #tpu.memory_space<vmem>>, %arg13: memref<1x8x256xf32, #tpu.memory_space<vmem>>, %arg14: memref<96x288xbf16, #tpu.memory_space<vmem>>, %arg15: memref<96x288xbf16, #tpu.memory_space<vmem>>, %arg16: memref<96x288xbf16, #tpu.memory_space<vmem>>) attributes {dimension_semantics = [#tpu.dimension_semantics<parallel>], iteration_bounds = array<i64: 2>, scalar_prefetch = 0 : i64, scratch_operands = 3 : i64, tpu.core_type = #tpu.core_type<tc>, window_params = [{transform_indices = @transform_0, window_bounds = array<i64: 1, 8, 288>}, {pipeline_mode = #tpu.pipeline_mode<synchronous>, transform_indices = @transform_1, window_bounds = array<i64: 3, 288>}, {pipeline_mode = #tpu.pipeline_mode<synchronous>, transform_indices = @transform_2, window_bounds = array<i64: 3, 4, 32>}, {pipeline_mode = #tpu.pipeline_mode<synchronous>, transform_indices = @transform_3, window_bounds = array<i64: 3, 4, 48>}, {pipeline_mode = #tpu.pipeline_mode<synchronous>, transform_indices = @transform_4, window_bounds = array<i64: 3, 4, 64>}, {pipeline_mode = #tpu.pipeline_mode<synchronous>, transform_indices = @transform_5, window_bounds = array<i64: 3, 4, 80>}, {pipeline_mode = #tpu.pipeline_mode<synchronous>, transform_indices = @transform_6, window_bounds = array<i64: 3, 8, 96>}, {pipeline_mode = #tpu.pipeline_mode<synchronous>, transform_indices = @transform_7, window_bounds = array<i64: 4, 1>}, {pipeline_mode = #tpu.pipeline_mode<synchronous>, transform_indices = @transform_8, window_bounds = array<i64: 4, 1>}, {pipeline_mode = #tpu.pipeline_mode<synchronous>, transform_indices = @transform_9, window_bounds = array<i64: 4, 1>}, {pipeline_mode = #tpu.pipeline_mode<synchronous>, transform_indices = @transform_10, window_bounds = array<i64: 4, 1>}, {pipeline_mode = #tpu.pipeline_mode<synchronous>, transform_indices = @transform_11, window_bounds = array<i64: 8, 1>}, {transform_indices = @transform_12, window_bounds = array<i64: 1, 8, 256>}]} {
    %c0 = arith.constant 0 : index
    %c0_0 = arith.constant 0 : index
    %c0_1 = arith.constant 0 : index
    %0 = vector.load %arg1[%c0, %c0_0, %c0_1] : memref<1x8x288xf32, #tpu.memory_space<vmem>>, vector<1x8x288xf32>
    %1 = vector.shape_cast %0 : vector<1x8x288xf32> to vector<8x288xf32>
    %c0_2 = arith.constant 0 : index
    %c0_3 = arith.constant 0 : index
    %2 = vector.load %arg2[%c0_2, %c0_3] : memref<3x288xbf16, #tpu.memory_space<vmem>>, vector<3x288xbf16>
    %3 = vector.extract_strided_slice %2 {offsets = [0, 0], sizes = [1, 288], strides = [1, 1]} : vector<3x288xbf16> to vector<1x288xbf16>
    %4 = vector.extract_strided_slice %2 {offsets = [1, 0], sizes = [1, 288], strides = [1, 1]} : vector<3x288xbf16> to vector<1x288xbf16>
    %5 = vector.extract_strided_slice %2 {offsets = [2, 0], sizes = [1, 288], strides = [1, 1]} : vector<3x288xbf16> to vector<1x288xbf16>
    %6 = arith.truncf %1 : vector<8x288xf32> to vector<8x288xbf16>
    %7 = vector.extract_strided_slice %6 {offsets = [0, 272], sizes = [8, 16], strides = [1, 1]} : vector<8x288xbf16> to vector<8x16xbf16>
    %8 = vector.extract_strided_slice %6 {offsets = [0, 0], sizes = [8, 272], strides = [1, 1]} : vector<8x288xbf16> to vector<8x272xbf16>
    %9 = tpu.concatenate %7, %8 in 1 : vector<8x16xbf16>, vector<8x272xbf16> -> vector<8x288xbf16>
    %10 = vector.extract_strided_slice %6 {offsets = [0, 16], sizes = [8, 272], strides = [1, 1]} : vector<8x288xbf16> to vector<8x272xbf16>
    %11 = vector.extract_strided_slice %6 {offsets = [0, 0], sizes = [8, 16], strides = [1, 1]} : vector<8x288xbf16> to vector<8x16xbf16>
    %12 = tpu.concatenate %10, %11 in 1 : vector<8x272xbf16>, vector<8x16xbf16> -> vector<8x288xbf16>
    %13 = tpu.concatenate %9, %6, %12 in 0 : vector<8x288xbf16>, vector<8x288xbf16>, vector<8x288xbf16> -> vector<24x288xbf16>
    %cst = arith.constant 0.000000e+00 : bf16
    %14 = vector.broadcast %cst : bf16 to vector<8x288xbf16>
    %15 = tpu.concatenate %13, %14 in 0 : vector<24x288xbf16>, vector<8x288xbf16> -> vector<32x288xbf16>
    %c0_4 = arith.constant 0 : index
    %c0_5 = arith.constant 0 : index
    %16 = vector.load %arg15[%c0_4, %c0_5] : memref<96x288xbf16, #tpu.memory_space<vmem>>, vector<32x288xbf16>
    tpu.vector_store %arg15[%c0_4, %c0_5], %15 {strides = array<i32>} : memref<96x288xbf16, #tpu.memory_space<vmem>>, vector<32x288xbf16>,
    %17 = vector.extract_strided_slice %15 {offsets = [0, 287], sizes = [32, 1], strides = [1, 1]} : vector<32x288xbf16> to vector<32x1xbf16>
    %18 = vector.extract_strided_slice %15 {offsets = [0, 0], sizes = [32, 287], strides = [1, 1]} : vector<32x288xbf16> to vector<32x287xbf16>
    %19 = tpu.concatenate %17, %18 in 1 : vector<32x1xbf16>, vector<32x287xbf16> -> vector<32x288xbf16>
    %20 = vector.broadcast %4 : vector<1x288xbf16> to vector<32x288xbf16>
    %21 = arith.mulf %20, %19 : vector<32x288xbf16>
    %c0_6 = arith.constant 0 : index
    %c0_7 = arith.constant 0 : index
    %22 = vector.load %arg14[%c0_6, %c0_7] : memref<96x288xbf16, #tpu.memory_space<vmem>>, vector<32x288xbf16>
    tpu.vector_store %arg14[%c0_6, %c0_7], %21 {strides = array<i32>} : memref<96x288xbf16, #tpu.memory_space<vmem>>, vector<32x288xbf16>,
    %23 = vector.extract_strided_slice %15 {offsets = [0, 1], sizes = [32, 287], strides = [1, 1]} : vector<32x288xbf16> to vector<32x287xbf16>
    %24 = vector.extract_strided_slice %15 {offsets = [0, 0], sizes = [32, 1], strides = [1, 1]} : vector<32x288xbf16> to vector<32x1xbf16>
    %25 = tpu.concatenate %23, %24 in 1 : vector<32x287xbf16>, vector<32x1xbf16> -> vector<32x288xbf16>
    %26 = vector.broadcast %5 : vector<1x288xbf16> to vector<32x288xbf16>
    %27 = arith.mulf %26, %25 : vector<32x288xbf16>
    %c0_8 = arith.constant 0 : index
    %c0_9 = arith.constant 0 : index
    %28 = vector.load %arg16[%c0_8, %c0_9] : memref<96x288xbf16, #tpu.memory_space<vmem>>, vector<32x288xbf16>
    tpu.vector_store %arg16[%c0_8, %c0_9], %27 {strides = array<i32>} : memref<96x288xbf16, #tpu.memory_space<vmem>>, vector<32x288xbf16>,
    %c1 = arith.constant 1 : index
    %c0_10 = arith.constant 0 : index
    %c0_11 = arith.constant 0 : index
    %29 = vector.load %arg3[%c1, %c0_10, %c0_11] : memref<3x4x32xbf16, #tpu.memory_space<vmem>>, vector<1x4x32xbf16>
    %30 = vector.shape_cast %29 : vector<1x4x32xbf16> to vector<4x32xbf16>
    %c0_12 = arith.constant 0 : index
    %c0_13 = arith.constant 0 : index
    %31 = vector.load %arg15[%c0_12, %c0_13] : memref<96x288xbf16, #tpu.memory_space<vmem>>, vector<32x288xbf16>
    %cst_14 = arith.constant dense<0.000000e+00> : vector<4x288xf32>
    %32 = tpu.matmul %30, %31, %cst_14 {dimension_numbers = #tpu.dot_dimension_numbers<[1], [0], [0], [1], [0, 0, 1, 1], [], []>} : vector<4x32xbf16>, vector<32x288xbf16>, vector<4x288xf32> -> vector<4x288xf32>
    %c0_15 = arith.constant 0 : index
    %c0_16 = arith.constant 0 : index
    %c0_17 = arith.constant 0 : index
    %33 = vector.load %arg3[%c0_15, %c0_16, %c0_17] : memref<3x4x32xbf16, #tpu.memory_space<vmem>>, vector<1x4x32xbf16>
    %34 = vector.shape_cast %33 : vector<1x4x32xbf16> to vector<4x32xbf16>
    %c0_18 = arith.constant 0 : index
    %c0_19 = arith.constant 0 : index
    %35 = vector.load %arg14[%c0_18, %c0_19] : memref<96x288xbf16, #tpu.memory_space<vmem>>, vector<32x288xbf16>
    %cst_20 = arith.constant dense<0.000000e+00> : vector<4x288xf32>
    %36 = tpu.matmul %34, %35, %cst_20 {dimension_numbers = #tpu.dot_dimension_numbers<[1], [0], [0], [1], [0, 0, 1, 1], [], []>} : vector<4x32xbf16>, vector<32x288xbf16>, vector<4x288xf32> -> vector<4x288xf32>
    %37 = arith.addf %32, %36 : vector<4x288xf32>
    %c2 = arith.constant 2 : index
    %c0_21 = arith.constant 0 : index
    %c0_22 = arith.constant 0 : index
    %38 = vector.load %arg3[%c2, %c0_21, %c0_22] : memref<3x4x32xbf16, #tpu.memory_space<vmem>>, vector<1x4x32xbf16>
    %39 = vector.shape_cast %38 : vector<1x4x32xbf16> to vector<4x32xbf16>
    %c0_23 = arith.constant 0 : index
    %c0_24 = arith.constant 0 : index
    %40 = vector.load %arg16[%c0_23, %c0_24] : memref<96x288xbf16, #tpu.memory_space<vmem>>, vector<32x288xbf16>
    %cst_25 = arith.constant dense<0.000000e+00> : vector<4x288xf32>
    %41 = tpu.matmul %39, %40, %cst_25 {dimension_numbers = #tpu.dot_dimension_numbers<[1], [0], [0], [1], [0, 0, 1, 1], [], []>} : vector<4x32xbf16>, vector<32x288xbf16>, vector<4x288xf32> -> vector<4x288xf32>
    %42 = arith.addf %37, %41 : vector<4x288xf32>
    %c0_26 = arith.constant 0 : index
    %c0_27 = arith.constant 0 : index
    %43 = vector.load %arg8[%c0_26, %c0_27] : memref<4x1xf32, #tpu.memory_space<vmem>>, vector<4x1xf32>
    %44 = vector.broadcast %43 : vector<4x1xf32> to vector<4x288xf32>
    %45 = arith.addf %42, %44 : vector<4x288xf32>
    %cst_28 = arith.constant 2.000000e-01 : f32
    %46 = vector.broadcast %cst_28 : f32 to vector<4x288xf32>
    %47 = arith.mulf %45, %46 : vector<4x288xf32>
    %48 = arith.maximumf %45, %47 : vector<4x288xf32>
    %49 = arith.extf %3 : vector<1x288xbf16> to vector<1x288xf32>
    %50 = vector.broadcast %49 : vector<1x288xf32> to vector<4x288xf32>
    %51 = arith.mulf %48, %50 : vector<4x288xf32>
    %52 = arith.truncf %51 : vector<4x288xf32> to vector<4x288xbf16>
    %53 = vector.extract_strided_slice %52 {offsets = [0, 272], sizes = [4, 16], strides = [1, 1]} : vector<4x288xbf16> to vector<4x16xbf16>
    %54 = vector.extract_strided_slice %52 {offsets = [0, 0], sizes = [4, 272], strides = [1, 1]} : vector<4x288xbf16> to vector<4x272xbf16>
    %55 = tpu.concatenate %53, %54 in 1 : vector<4x16xbf16>, vector<4x272xbf16> -> vector<4x288xbf16>
    %56 = vector.extract_strided_slice %52 {offsets = [0, 16], sizes = [4, 272], strides = [1, 1]} : vector<4x288xbf16> to vector<4x272xbf16>
    %57 = vector.extract_strided_slice %52 {offsets = [0, 0], sizes = [4, 16], strides = [1, 1]} : vector<4x288xbf16> to vector<4x16xbf16>
    %58 = tpu.concatenate %56, %57 in 1 : vector<4x272xbf16>, vector<4x16xbf16> -> vector<4x288xbf16>
    %59 = tpu.concatenate %55, %52, %58 in 0 : vector<4x288xbf16>, vector<4x288xbf16>, vector<4x288xbf16> -> vector<12x288xbf16>
    %cst_29 = arith.constant 0.000000e+00 : bf16
    %60 = vector.broadcast %cst_29 : bf16 to vector<4x288xbf16>
    %61 = tpu.concatenate %59, %60 in 0 : vector<12x288xbf16>, vector<4x288xbf16> -> vector<16x288xbf16>
    %c32 = arith.constant 32 : index
    %c0_30 = arith.constant 0 : index
    %62 = vector.load %arg15[%c32, %c0_30] : memref<96x288xbf16, #tpu.memory_space<vmem>>, vector<16x288xbf16>
    tpu.vector_store %arg15[%c32, %c0_30], %61 {strides = array<i32>} : memref<96x288xbf16, #tpu.memory_space<vmem>>, vector<16x288xbf16>,
    %63 = vector.extract_strided_slice %61 {offsets = [0, 287], sizes = [16, 1], strides = [1, 1]} : vector<16x288xbf16> to vector<16x1xbf16>
    %64 = vector.extract_strided_slice %61 {offsets = [0, 0], sizes = [16, 287], strides = [1, 1]} : vector<16x288xbf16> to vector<16x287xbf16>
    %65 = tpu.concatenate %63, %64 in 1 : vector<16x1xbf16>, vector<16x287xbf16> -> vector<16x288xbf16>
    %66 = vector.broadcast %4 : vector<1x288xbf16> to vector<16x288xbf16>
    %67 = arith.mulf %66, %65 : vector<16x288xbf16>
    %c32_31 = arith.constant 32 : index
    %c0_32 = arith.constant 0 : index
    %68 = vector.load %arg14[%c32_31, %c0_32] : memref<96x288xbf16, #tpu.memory_space<vmem>>, vector<16x288xbf16>
    tpu.vector_store %arg14[%c32_31, %c0_32], %67 {strides = array<i32>} : memref<96x288xbf16, #tpu.memory_space<vmem>>, vector<16x288xbf16>,
    %69 = vector.extract_strided_slice %61 {offsets = [0, 1], sizes = [16, 287], strides = [1, 1]} : vector<16x288xbf16> to vector<16x287xbf16>
    %70 = vector.extract_strided_slice %61 {offsets = [0, 0], sizes = [16, 1], strides = [1, 1]} : vector<16x288xbf16> to vector<16x1xbf16>
    %71 = tpu.concatenate %69, %70 in 1 : vector<16x287xbf16>, vector<16x1xbf16> -> vector<16x288xbf16>
    %72 = vector.broadcast %5 : vector<1x288xbf16> to vector<16x288xbf16>
    %73 = arith.mulf %72, %71 : vector<16x288xbf16>
    %c32_33 = arith.constant 32 : index
    %c0_34 = arith.constant 0 : index
    %74 = vector.load %arg16[%c32_33, %c0_34] : memref<96x288xbf16, #tpu.memory_space<vmem>>, vector<16x288xbf16>
    tpu.vector_store %arg16[%c32_33, %c0_34], %73 {strides = array<i32>} : memref<96x288xbf16, #tpu.memory_space<vmem>>, vector<16x288xbf16>,
    %c1_35 = arith.constant 1 : index
    %c0_36 = arith.constant 0 : index
    %c0_37 = arith.constant 0 : index
    %75 = vector.load %arg4[%c1_35, %c0_36, %c0_37] : memref<3x4x48xbf16, #tpu.memory_space<vmem>>, vector<1x4x48xbf16>
    %76 = vector.shape_cast %75 : vector<1x4x48xbf16> to vector<4x48xbf16>
    %c0_38 = arith.constant 0 : index
    %c0_39 = arith.constant 0 : index
    %77 = vector.load %arg15[%c0_38, %c0_39] : memref<96x288xbf16, #tpu.memory_space<vmem>>, vector<48x288xbf16>
    %cst_40 = arith.constant dense<0.000000e+00> : vector<4x288xf32>
    %78 = tpu.matmul %76, %77, %cst_40 {dimension_numbers = #tpu.dot_dimension_numbers<[1], [0], [0], [1], [0, 0, 1, 1], [], []>} : vector<4x48xbf16>, vector<48x288xbf16>, vector<4x288xf32> -> vector<4x288xf32>
    %c0_41 = arith.constant 0 : index
    %c0_42 = arith.constant 0 : index
    %c0_43 = arith.constant 0 : index
    %79 = vector.load %arg4[%c0_41, %c0_42, %c0_43] : memref<3x4x48xbf16, #tpu.memory_space<vmem>>, vector<1x4x48xbf16>
    %80 = vector.shape_cast %79 : vector<1x4x48xbf16> to vector<4x48xbf16>
    %c0_44 = arith.constant 0 : index
    %c0_45 = arith.constant 0 : index
    %81 = vector.load %arg14[%c0_44, %c0_45] : memref<96x288xbf16, #tpu.memory_space<vmem>>, vector<48x288xbf16>
    %cst_46 = arith.constant dense<0.000000e+00> : vector<4x288xf32>
    %82 = tpu.matmul %80, %81, %cst_46 {dimension_numbers = #tpu.dot_dimension_numbers<[1], [0], [0], [1], [0, 0, 1, 1], [], []>} : vector<4x48xbf16>, vector<48x288xbf16>, vector<4x288xf32> -> vector<4x288xf32>
    %83 = arith.addf %78, %82 : vector<4x288xf32>
    %c2_47 = arith.constant 2 : index
    %c0_48 = arith.constant 0 : index
    %c0_49 = arith.constant 0 : index
    %84 = vector.load %arg4[%c2_47, %c0_48, %c0_49] : memref<3x4x48xbf16, #tpu.memory_space<vmem>>, vector<1x4x48xbf16>
    %85 = vector.shape_cast %84 : vector<1x4x48xbf16> to vector<4x48xbf16>
    %c0_50 = arith.constant 0 : index
    %c0_51 = arith.constant 0 : index
    %86 = vector.load %arg16[%c0_50, %c0_51] : memref<96x288xbf16, #tpu.memory_space<vmem>>, vector<48x288xbf16>
    %cst_52 = arith.constant dense<0.000000e+00> : vector<4x288xf32>
    %87 = tpu.matmul %85, %86, %cst_52 {dimension_numbers = #tpu.dot_dimension_numbers<[1], [0], [0], [1], [0, 0, 1, 1], [], []>} : vector<4x48xbf16>, vector<48x288xbf16>, vector<4x288xf32> -> vector<4x288xf32>
    %88 = arith.addf %83, %87 : vector<4x288xf32>
    %c0_53 = arith.constant 0 : index
    %c0_54 = arith.constant 0 : index
    %89 = vector.load %arg9[%c0_53, %c0_54] : memref<4x1xf32, #tpu.memory_space<vmem>>, vector<4x1xf32>
    %90 = vector.broadcast %89 : vector<4x1xf32> to vector<4x288xf32>
    %91 = arith.addf %88, %90 : vector<4x288xf32>
    %cst_55 = arith.constant 2.000000e-01 : f32
    %92 = vector.broadcast %cst_55 : f32 to vector<4x288xf32>
    %93 = arith.mulf %91, %92 : vector<4x288xf32>
    %94 = arith.maximumf %91, %93 : vector<4x288xf32>
    %95 = arith.extf %3 : vector<1x288xbf16> to vector<1x288xf32>
    %96 = vector.broadcast %95 : vector<1x288xf32> to vector<4x288xf32>
    %97 = arith.mulf %94, %96 : vector<4x288xf32>
    %98 = arith.truncf %97 : vector<4x288xf32> to vector<4x288xbf16>
    %99 = vector.extract_strided_slice %98 {offsets = [0, 272], sizes = [4, 16], strides = [1, 1]} : vector<4x288xbf16> to vector<4x16xbf16>
    %100 = vector.extract_strided_slice %98 {offsets = [0, 0], sizes = [4, 272], strides = [1, 1]} : vector<4x288xbf16> to vector<4x272xbf16>
    %101 = tpu.concatenate %99, %100 in 1 : vector<4x16xbf16>, vector<4x272xbf16> -> vector<4x288xbf16>
    %102 = vector.extract_strided_slice %98 {offsets = [0, 16], sizes = [4, 272], strides = [1, 1]} : vector<4x288xbf16> to vector<4x272xbf16>
    %103 = vector.extract_strided_slice %98 {offsets = [0, 0], sizes = [4, 16], strides = [1, 1]} : vector<4x288xbf16> to vector<4x16xbf16>
    %104 = tpu.concatenate %102, %103 in 1 : vector<4x272xbf16>, vector<4x16xbf16> -> vector<4x288xbf16>
    %105 = tpu.concatenate %101, %98, %104 in 0 : vector<4x288xbf16>, vector<4x288xbf16>, vector<4x288xbf16> -> vector<12x288xbf16>
    %cst_56 = arith.constant 0.000000e+00 : bf16
    %106 = vector.broadcast %cst_56 : bf16 to vector<4x288xbf16>
    %107 = tpu.concatenate %105, %106 in 0 : vector<12x288xbf16>, vector<4x288xbf16> -> vector<16x288xbf16>
    %c48 = arith.constant 48 : index
    %c0_57 = arith.constant 0 : index
    %108 = vector.load %arg15[%c48, %c0_57] : memref<96x288xbf16, #tpu.memory_space<vmem>>, vector<16x288xbf16>
    tpu.vector_store %arg15[%c48, %c0_57], %107 {strides = array<i32>} : memref<96x288xbf16, #tpu.memory_space<vmem>>, vector<16x288xbf16>,
    %109 = vector.extract_strided_slice %107 {offsets = [0, 287], sizes = [16, 1], strides = [1, 1]} : vector<16x288xbf16> to vector<16x1xbf16>
    %110 = vector.extract_strided_slice %107 {offsets = [0, 0], sizes = [16, 287], strides = [1, 1]} : vector<16x288xbf16> to vector<16x287xbf16>
    %111 = tpu.concatenate %109, %110 in 1 : vector<16x1xbf16>, vector<16x287xbf16> -> vector<16x288xbf16>
    %112 = vector.broadcast %4 : vector<1x288xbf16> to vector<16x288xbf16>
    %113 = arith.mulf %112, %111 : vector<16x288xbf16>
    %c48_58 = arith.constant 48 : index
    %c0_59 = arith.constant 0 : index
    %114 = vector.load %arg14[%c48_58, %c0_59] : memref<96x288xbf16, #tpu.memory_space<vmem>>, vector<16x288xbf16>
    tpu.vector_store %arg14[%c48_58, %c0_59], %113 {strides = array<i32>} : memref<96x288xbf16, #tpu.memory_space<vmem>>, vector<16x288xbf16>,
    %115 = vector.extract_strided_slice %107 {offsets = [0, 1], sizes = [16, 287], strides = [1, 1]} : vector<16x288xbf16> to vector<16x287xbf16>
    %116 = vector.extract_strided_slice %107 {offsets = [0, 0], sizes = [16, 1], strides = [1, 1]} : vector<16x288xbf16> to vector<16x1xbf16>
    %117 = tpu.concatenate %115, %116 in 1 : vector<16x287xbf16>, vector<16x1xbf16> -> vector<16x288xbf16>
    %118 = vector.broadcast %5 : vector<1x288xbf16> to vector<16x288xbf16>
    %119 = arith.mulf %118, %117 : vector<16x288xbf16>
    %c48_60 = arith.constant 48 : index
    %c0_61 = arith.constant 0 : index
    %120 = vector.load %arg16[%c48_60, %c0_61] : memref<96x288xbf16, #tpu.memory_space<vmem>>, vector<16x288xbf16>
    tpu.vector_store %arg16[%c48_60, %c0_61], %119 {strides = array<i32>} : memref<96x288xbf16, #tpu.memory_space<vmem>>, vector<16x288xbf16>,
    %c1_62 = arith.constant 1 : index
    %c0_63 = arith.constant 0 : index
    %c0_64 = arith.constant 0 : index
    %121 = vector.load %arg5[%c1_62, %c0_63, %c0_64] : memref<3x4x64xbf16, #tpu.memory_space<vmem>>, vector<1x4x64xbf16>
    %122 = vector.shape_cast %121 : vector<1x4x64xbf16> to vector<4x64xbf16>
    %c0_65 = arith.constant 0 : index
    %c0_66 = arith.constant 0 : index
    %123 = vector.load %arg15[%c0_65, %c0_66] : memref<96x288xbf16, #tpu.memory_space<vmem>>, vector<64x288xbf16>
    %cst_67 = arith.constant dense<0.000000e+00> : vector<4x288xf32>
    %124 = tpu.matmul %122, %123, %cst_67 {dimension_numbers = #tpu.dot_dimension_numbers<[1], [0], [0], [1], [0, 0, 1, 1], [], []>} : vector<4x64xbf16>, vector<64x288xbf16>, vector<4x288xf32> -> vector<4x288xf32>
    %c0_68 = arith.constant 0 : index
    %c0_69 = arith.constant 0 : index
    %c0_70 = arith.constant 0 : index
    %125 = vector.load %arg5[%c0_68, %c0_69, %c0_70] : memref<3x4x64xbf16, #tpu.memory_space<vmem>>, vector<1x4x64xbf16>
    %126 = vector.shape_cast %125 : vector<1x4x64xbf16> to vector<4x64xbf16>
    %c0_71 = arith.constant 0 : index
    %c0_72 = arith.constant 0 : index
    %127 = vector.load %arg14[%c0_71, %c0_72] : memref<96x288xbf16, #tpu.memory_space<vmem>>, vector<64x288xbf16>
    %cst_73 = arith.constant dense<0.000000e+00> : vector<4x288xf32>
    %128 = tpu.matmul %126, %127, %cst_73 {dimension_numbers = #tpu.dot_dimension_numbers<[1], [0], [0], [1], [0, 0, 1, 1], [], []>} : vector<4x64xbf16>, vector<64x288xbf16>, vector<4x288xf32> -> vector<4x288xf32>
    %129 = arith.addf %124, %128 : vector<4x288xf32>
    %c2_74 = arith.constant 2 : index
    %c0_75 = arith.constant 0 : index
    %c0_76 = arith.constant 0 : index
    %130 = vector.load %arg5[%c2_74, %c0_75, %c0_76] : memref<3x4x64xbf16, #tpu.memory_space<vmem>>, vector<1x4x64xbf16>
    %131 = vector.shape_cast %130 : vector<1x4x64xbf16> to vector<4x64xbf16>
    %c0_77 = arith.constant 0 : index
    %c0_78 = arith.constant 0 : index
    %132 = vector.load %arg16[%c0_77, %c0_78] : memref<96x288xbf16, #tpu.memory_space<vmem>>, vector<64x288xbf16>
    %cst_79 = arith.constant dense<0.000000e+00> : vector<4x288xf32>
    %133 = tpu.matmul %131, %132, %cst_79 {dimension_numbers = #tpu.dot_dimension_numbers<[1], [0], [0], [1], [0, 0, 1, 1], [], []>} : vector<4x64xbf16>, vector<64x288xbf16>, vector<4x288xf32> -> vector<4x288xf32>
    %134 = arith.addf %129, %133 : vector<4x288xf32>
    %c0_80 = arith.constant 0 : index
    %c0_81 = arith.constant 0 : index
    %135 = vector.load %arg10[%c0_80, %c0_81] : memref<4x1xf32, #tpu.memory_space<vmem>>, vector<4x1xf32>
    %136 = vector.broadcast %135 : vector<4x1xf32> to vector<4x288xf32>
    %137 = arith.addf %134, %136 : vector<4x288xf32>
    %cst_82 = arith.constant 2.000000e-01 : f32
    %138 = vector.broadcast %cst_82 : f32 to vector<4x288xf32>
    %139 = arith.mulf %137, %138 : vector<4x288xf32>
    %140 = arith.maximumf %137, %139 : vector<4x288xf32>
    %141 = arith.extf %3 : vector<1x288xbf16> to vector<1x288xf32>
    %142 = vector.broadcast %141 : vector<1x288xf32> to vector<4x288xf32>
    %143 = arith.mulf %140, %142 : vector<4x288xf32>
    %144 = arith.truncf %143 : vector<4x288xf32> to vector<4x288xbf16>
    %145 = vector.extract_strided_slice %144 {offsets = [0, 272], sizes = [4, 16], strides = [1, 1]} : vector<4x288xbf16> to vector<4x16xbf16>
    %146 = vector.extract_strided_slice %144 {offsets = [0, 0], sizes = [4, 272], strides = [1, 1]} : vector<4x288xbf16> to vector<4x272xbf16>
    %147 = tpu.concatenate %145, %146 in 1 : vector<4x16xbf16>, vector<4x272xbf16> -> vector<4x288xbf16>
    %148 = vector.extract_strided_slice %144 {offsets = [0, 16], sizes = [4, 272], strides = [1, 1]} : vector<4x288xbf16> to vector<4x272xbf16>
    %149 = vector.extract_strided_slice %144 {offsets = [0, 0], sizes = [4, 16], strides = [1, 1]} : vector<4x288xbf16> to vector<4x16xbf16>
    %150 = tpu.concatenate %148, %149 in 1 : vector<4x272xbf16>, vector<4x16xbf16> -> vector<4x288xbf16>
    %151 = tpu.concatenate %147, %144, %150 in 0 : vector<4x288xbf16>, vector<4x288xbf16>, vector<4x288xbf16> -> vector<12x288xbf16>
    %cst_83 = arith.constant 0.000000e+00 : bf16
    %152 = vector.broadcast %cst_83 : bf16 to vector<4x288xbf16>
    %153 = tpu.concatenate %151, %152 in 0 : vector<12x288xbf16>, vector<4x288xbf16> -> vector<16x288xbf16>
    %c64 = arith.constant 64 : index
    %c0_84 = arith.constant 0 : index
    %154 = vector.load %arg15[%c64, %c0_84] : memref<96x288xbf16, #tpu.memory_space<vmem>>, vector<16x288xbf16>
    tpu.vector_store %arg15[%c64, %c0_84], %153 {strides = array<i32>} : memref<96x288xbf16, #tpu.memory_space<vmem>>, vector<16x288xbf16>,
    %155 = vector.extract_strided_slice %153 {offsets = [0, 287], sizes = [16, 1], strides = [1, 1]} : vector<16x288xbf16> to vector<16x1xbf16>
    %156 = vector.extract_strided_slice %153 {offsets = [0, 0], sizes = [16, 287], strides = [1, 1]} : vector<16x288xbf16> to vector<16x287xbf16>
    %157 = tpu.concatenate %155, %156 in 1 : vector<16x1xbf16>, vector<16x287xbf16> -> vector<16x288xbf16>
    %158 = vector.broadcast %4 : vector<1x288xbf16> to vector<16x288xbf16>
    %159 = arith.mulf %158, %157 : vector<16x288xbf16>
    %c64_85 = arith.constant 64 : index
    %c0_86 = arith.constant 0 : index
    %160 = vector.load %arg14[%c64_85, %c0_86] : memref<96x288xbf16, #tpu.memory_space<vmem>>, vector<16x288xbf16>
    tpu.vector_store %arg14[%c64_85, %c0_86], %159 {strides = array<i32>} : memref<96x288xbf16, #tpu.memory_space<vmem>>, vector<16x288xbf16>,
    %161 = vector.extract_strided_slice %153 {offsets = [0, 1], sizes = [16, 287], strides = [1, 1]} : vector<16x288xbf16> to vector<16x287xbf16>
    %162 = vector.extract_strided_slice %153 {offsets = [0, 0], sizes = [16, 1], strides = [1, 1]} : vector<16x288xbf16> to vector<16x1xbf16>
    %163 = tpu.concatenate %161, %162 in 1 : vector<16x287xbf16>, vector<16x1xbf16> -> vector<16x288xbf16>
    %164 = vector.broadcast %5 : vector<1x288xbf16> to vector<16x288xbf16>
    %165 = arith.mulf %164, %163 : vector<16x288xbf16>
    %c64_87 = arith.constant 64 : index
    %c0_88 = arith.constant 0 : index
    %166 = vector.load %arg16[%c64_87, %c0_88] : memref<96x288xbf16, #tpu.memory_space<vmem>>, vector<16x288xbf16>
    tpu.vector_store %arg16[%c64_87, %c0_88], %165 {strides = array<i32>} : memref<96x288xbf16, #tpu.memory_space<vmem>>, vector<16x288xbf16>,
    %c1_89 = arith.constant 1 : index
    %c0_90 = arith.constant 0 : index
    %c0_91 = arith.constant 0 : index
    %167 = vector.load %arg6[%c1_89, %c0_90, %c0_91] : memref<3x4x80xbf16, #tpu.memory_space<vmem>>, vector<1x4x80xbf16>
    %168 = vector.shape_cast %167 : vector<1x4x80xbf16> to vector<4x80xbf16>
    %c0_92 = arith.constant 0 : index
    %c0_93 = arith.constant 0 : index
    %169 = vector.load %arg15[%c0_92, %c0_93] : memref<96x288xbf16, #tpu.memory_space<vmem>>, vector<80x288xbf16>
    %cst_94 = arith.constant dense<0.000000e+00> : vector<4x288xf32>
    %170 = tpu.matmul %168, %169, %cst_94 {dimension_numbers = #tpu.dot_dimension_numbers<[1], [0], [0], [1], [0, 0, 1, 1], [], []>} : vector<4x80xbf16>, vector<80x288xbf16>, vector<4x288xf32> -> vector<4x288xf32>
    %c0_95 = arith.constant 0 : index
    %c0_96 = arith.constant 0 : index
    %c0_97 = arith.constant 0 : index
    %171 = vector.load %arg6[%c0_95, %c0_96, %c0_97] : memref<3x4x80xbf16, #tpu.memory_space<vmem>>, vector<1x4x80xbf16>
    %172 = vector.shape_cast %171 : vector<1x4x80xbf16> to vector<4x80xbf16>
    %c0_98 = arith.constant 0 : index
    %c0_99 = arith.constant 0 : index
    %173 = vector.load %arg14[%c0_98, %c0_99] : memref<96x288xbf16, #tpu.memory_space<vmem>>, vector<80x288xbf16>
    %cst_100 = arith.constant dense<0.000000e+00> : vector<4x288xf32>
    %174 = tpu.matmul %172, %173, %cst_100 {dimension_numbers = #tpu.dot_dimension_numbers<[1], [0], [0], [1], [0, 0, 1, 1], [], []>} : vector<4x80xbf16>, vector<80x288xbf16>, vector<4x288xf32> -> vector<4x288xf32>
    %175 = arith.addf %170, %174 : vector<4x288xf32>
    %c2_101 = arith.constant 2 : index
    %c0_102 = arith.constant 0 : index
    %c0_103 = arith.constant 0 : index
    %176 = vector.load %arg6[%c2_101, %c0_102, %c0_103] : memref<3x4x80xbf16, #tpu.memory_space<vmem>>, vector<1x4x80xbf16>
    %177 = vector.shape_cast %176 : vector<1x4x80xbf16> to vector<4x80xbf16>
    %c0_104 = arith.constant 0 : index
    %c0_105 = arith.constant 0 : index
    %178 = vector.load %arg16[%c0_104, %c0_105] : memref<96x288xbf16, #tpu.memory_space<vmem>>, vector<80x288xbf16>
    %cst_106 = arith.constant dense<0.000000e+00> : vector<4x288xf32>
    %179 = tpu.matmul %177, %178, %cst_106 {dimension_numbers = #tpu.dot_dimension_numbers<[1], [0], [0], [1], [0, 0, 1, 1], [], []>} : vector<4x80xbf16>, vector<80x288xbf16>, vector<4x288xf32> -> vector<4x288xf32>
    %180 = arith.addf %175, %179 : vector<4x288xf32>
    %c0_107 = arith.constant 0 : index
    %c0_108 = arith.constant 0 : index
    %181 = vector.load %arg11[%c0_107, %c0_108] : memref<4x1xf32, #tpu.memory_space<vmem>>, vector<4x1xf32>
    %182 = vector.broadcast %181 : vector<4x1xf32> to vector<4x288xf32>
    %183 = arith.addf %180, %182 : vector<4x288xf32>
    %cst_109 = arith.constant 2.000000e-01 : f32
    %184 = vector.broadcast %cst_109 : f32 to vector<4x288xf32>
    %185 = arith.mulf %183, %184 : vector<4x288xf32>
    %186 = arith.maximumf %183, %185 : vector<4x288xf32>
    %187 = arith.extf %3 : vector<1x288xbf16> to vector<1x288xf32>
    %188 = vector.broadcast %187 : vector<1x288xf32> to vector<4x288xf32>
    %189 = arith.mulf %186, %188 : vector<4x288xf32>
    %190 = arith.truncf %189 : vector<4x288xf32> to vector<4x288xbf16>
    %191 = vector.extract_strided_slice %190 {offsets = [0, 272], sizes = [4, 16], strides = [1, 1]} : vector<4x288xbf16> to vector<4x16xbf16>
    %192 = vector.extract_strided_slice %190 {offsets = [0, 0], sizes = [4, 272], strides = [1, 1]} : vector<4x288xbf16> to vector<4x272xbf16>
    %193 = tpu.concatenate %191, %192 in 1 : vector<4x16xbf16>, vector<4x272xbf16> -> vector<4x288xbf16>
    %194 = vector.extract_strided_slice %190 {offsets = [0, 16], sizes = [4, 272], strides = [1, 1]} : vector<4x288xbf16> to vector<4x272xbf16>
    %195 = vector.extract_strided_slice %190 {offsets = [0, 0], sizes = [4, 16], strides = [1, 1]} : vector<4x288xbf16> to vector<4x16xbf16>
    %196 = tpu.concatenate %194, %195 in 1 : vector<4x272xbf16>, vector<4x16xbf16> -> vector<4x288xbf16>
    %197 = tpu.concatenate %193, %190, %196 in 0 : vector<4x288xbf16>, vector<4x288xbf16>, vector<4x288xbf16> -> vector<12x288xbf16>
    %cst_110 = arith.constant 0.000000e+00 : bf16
    %198 = vector.broadcast %cst_110 : bf16 to vector<4x288xbf16>
    %199 = tpu.concatenate %197, %198 in 0 : vector<12x288xbf16>, vector<4x288xbf16> -> vector<16x288xbf16>
    %c80 = arith.constant 80 : index
    %c0_111 = arith.constant 0 : index
    %200 = vector.load %arg15[%c80, %c0_111] : memref<96x288xbf16, #tpu.memory_space<vmem>>, vector<16x288xbf16>
    tpu.vector_store %arg15[%c80, %c0_111], %199 {strides = array<i32>} : memref<96x288xbf16, #tpu.memory_space<vmem>>, vector<16x288xbf16>,
    %201 = vector.extract_strided_slice %199 {offsets = [0, 287], sizes = [16, 1], strides = [1, 1]} : vector<16x288xbf16> to vector<16x1xbf16>
    %202 = vector.extract_strided_slice %199 {offsets = [0, 0], sizes = [16, 287], strides = [1, 1]} : vector<16x288xbf16> to vector<16x287xbf16>
    %203 = tpu.concatenate %201, %202 in 1 : vector<16x1xbf16>, vector<16x287xbf16> -> vector<16x288xbf16>
    %204 = vector.broadcast %4 : vector<1x288xbf16> to vector<16x288xbf16>
    %205 = arith.mulf %204, %203 : vector<16x288xbf16>
    %c80_112 = arith.constant 80 : index
    %c0_113 = arith.constant 0 : index
    %206 = vector.load %arg14[%c80_112, %c0_113] : memref<96x288xbf16, #tpu.memory_space<vmem>>, vector<16x288xbf16>
    tpu.vector_store %arg14[%c80_112, %c0_113], %205 {strides = array<i32>} : memref<96x288xbf16, #tpu.memory_space<vmem>>, vector<16x288xbf16>,
    %207 = vector.extract_strided_slice %199 {offsets = [0, 1], sizes = [16, 287], strides = [1, 1]} : vector<16x288xbf16> to vector<16x287xbf16>
    %208 = vector.extract_strided_slice %199 {offsets = [0, 0], sizes = [16, 1], strides = [1, 1]} : vector<16x288xbf16> to vector<16x1xbf16>
    %209 = tpu.concatenate %207, %208 in 1 : vector<16x287xbf16>, vector<16x1xbf16> -> vector<16x288xbf16>
    %210 = vector.broadcast %5 : vector<1x288xbf16> to vector<16x288xbf16>
    %211 = arith.mulf %210, %209 : vector<16x288xbf16>
    %c80_114 = arith.constant 80 : index
    %c0_115 = arith.constant 0 : index
    %212 = vector.load %arg16[%c80_114, %c0_115] : memref<96x288xbf16, #tpu.memory_space<vmem>>, vector<16x288xbf16>
    tpu.vector_store %arg16[%c80_114, %c0_115], %211 {strides = array<i32>} : memref<96x288xbf16, #tpu.memory_space<vmem>>, vector<16x288xbf16>,
    %c1_116 = arith.constant 1 : index
    %c0_117 = arith.constant 0 : index
    %c0_118 = arith.constant 0 : index
    %213 = vector.load %arg7[%c1_116, %c0_117, %c0_118] : memref<3x8x96xbf16, #tpu.memory_space<vmem>>, vector<1x8x96xbf16>
    %214 = vector.shape_cast %213 : vector<1x8x96xbf16> to vector<8x96xbf16>
    %c0_119 = arith.constant 0 : index
    %c0_120 = arith.constant 0 : index
    %215 = vector.load %arg15[%c0_119, %c0_120] : memref<96x288xbf16, #tpu.memory_space<vmem>>, vector<96x288xbf16>
    %cst_121 = arith.constant dense<0.000000e+00> : vector<8x288xf32>
    %216 = tpu.matmul %214, %215, %cst_121 {dimension_numbers = #tpu.dot_dimension_numbers<[1], [0], [0], [1], [0, 0, 1, 1], [], []>} : vector<8x96xbf16>, vector<96x288xbf16>, vector<8x288xf32> -> vector<8x288xf32>
    %c0_122 = arith.constant 0 : index
    %c0_123 = arith.constant 0 : index
    %c0_124 = arith.constant 0 : index
    %217 = vector.load %arg7[%c0_122, %c0_123, %c0_124] : memref<3x8x96xbf16, #tpu.memory_space<vmem>>, vector<1x8x96xbf16>
    %218 = vector.shape_cast %217 : vector<1x8x96xbf16> to vector<8x96xbf16>
    %c0_125 = arith.constant 0 : index
    %c0_126 = arith.constant 0 : index
    %219 = vector.load %arg14[%c0_125, %c0_126] : memref<96x288xbf16, #tpu.memory_space<vmem>>, vector<96x288xbf16>
    %cst_127 = arith.constant dense<0.000000e+00> : vector<8x288xf32>
    %220 = tpu.matmul %218, %219, %cst_127 {dimension_numbers = #tpu.dot_dimension_numbers<[1], [0], [0], [1], [0, 0, 1, 1], [], []>} : vector<8x96xbf16>, vector<96x288xbf16>, vector<8x288xf32> -> vector<8x288xf32>
    %221 = arith.addf %216, %220 : vector<8x288xf32>
    %c2_128 = arith.constant 2 : index
    %c0_129 = arith.constant 0 : index
    %c0_130 = arith.constant 0 : index
    %222 = vector.load %arg7[%c2_128, %c0_129, %c0_130] : memref<3x8x96xbf16, #tpu.memory_space<vmem>>, vector<1x8x96xbf16>
    %223 = vector.shape_cast %222 : vector<1x8x96xbf16> to vector<8x96xbf16>
    %c0_131 = arith.constant 0 : index
    %c0_132 = arith.constant 0 : index
    %224 = vector.load %arg16[%c0_131, %c0_132] : memref<96x288xbf16, #tpu.memory_space<vmem>>, vector<96x288xbf16>
    %cst_133 = arith.constant dense<0.000000e+00> : vector<8x288xf32>
    %225 = tpu.matmul %223, %224, %cst_133 {dimension_numbers = #tpu.dot_dimension_numbers<[1], [0], [0], [1], [0, 0, 1, 1], [], []>} : vector<8x96xbf16>, vector<96x288xbf16>, vector<8x288xf32> -> vector<8x288xf32>
    %226 = arith.addf %221, %225 : vector<8x288xf32>
    %c0_134 = arith.constant 0 : index
    %c0_135 = arith.constant 0 : index
    %227 = vector.load %arg12[%c0_134, %c0_135] : memref<8x1xf32, #tpu.memory_space<vmem>>, vector<8x1xf32>
    %228 = vector.broadcast %227 : vector<8x1xf32> to vector<8x288xf32>
    %229 = arith.addf %226, %228 : vector<8x288xf32>
    %cst_136 = arith.constant 2.000000e-01 : f32
    %230 = vector.broadcast %cst_136 : f32 to vector<8x288xf32>
    %231 = arith.mulf %229, %230 : vector<8x288xf32>
    %232 = arith.addf %231, %1 : vector<8x288xf32>
    %233 = vector.extract_strided_slice %232 {offsets = [0, 16], sizes = [8, 256], strides = [1, 1]} : vector<8x288xf32> to vector<8x256xf32>
    %c0_137 = arith.constant 0 : index
    %c0_138 = arith.constant 0 : index
    %c0_139 = arith.constant 0 : index
    %234 = vector.load %arg13[%c0_137, %c0_138, %c0_139] : memref<1x8x256xf32, #tpu.memory_space<vmem>>, vector<1x8x256xf32>
    %235 = vector.shape_cast %234 : vector<1x8x256xf32> to vector<8x256xf32>
    %236 = vector.shape_cast %233 : vector<8x256xf32> to vector<1x8x256xf32>
    tpu.vector_store %arg13[%c0_137, %c0_138, %c0_139], %236 {strides = array<i32>} : memref<1x8x256xf32, #tpu.memory_space<vmem>>, vector<1x8x256xf32>,
    return
  }
  func.func @transform_0(%arg0: i32) -> (i32, i32, i32) {
    %c0_i32 = arith.constant 0 : i32
    %c0_i32_0 = arith.constant 0 : i32
    %c0_i32_1 = arith.constant 0 : i32
    return %arg0, %c0_i32, %c0_i32_0 : i32, i32, i32
  }
  func.func @transform_1(%arg0: i32) -> (i32, i32) {
    %c0_i32 = arith.constant 0 : i32
    %c0_i32_0 = arith.constant 0 : i32
    %c0_i32_1 = arith.constant 0 : i32
    return %c0_i32, %c0_i32_0 : i32, i32
  }
  func.func @transform_2(%arg0: i32) -> (i32, i32, i32) {
    %c0_i32 = arith.constant 0 : i32
    %c0_i32_0 = arith.constant 0 : i32
    %c0_i32_1 = arith.constant 0 : i32
    %c0_i32_2 = arith.constant 0 : i32
    return %c0_i32, %c0_i32_0, %c0_i32_1 : i32, i32, i32
  }
  func.func @transform_3(%arg0: i32) -> (i32, i32, i32) {
    %c0_i32 = arith.constant 0 : i32
    %c0_i32_0 = arith.constant 0 : i32
    %c0_i32_1 = arith.constant 0 : i32
    %c0_i32_2 = arith.constant 0 : i32
    return %c0_i32, %c0_i32_0, %c0_i32_1 : i32, i32, i32
  }
  func.func @transform_4(%arg0: i32) -> (i32, i32, i32) {
    %c0_i32 = arith.constant 0 : i32
    %c0_i32_0 = arith.constant 0 : i32
    %c0_i32_1 = arith.constant 0 : i32
    %c0_i32_2 = arith.constant 0 : i32
    return %c0_i32, %c0_i32_0, %c0_i32_1 : i32, i32, i32
  }
  func.func @transform_5(%arg0: i32) -> (i32, i32, i32) {
    %c0_i32 = arith.constant 0 : i32
    %c0_i32_0 = arith.constant 0 : i32
    %c0_i32_1 = arith.constant 0 : i32
    %c0_i32_2 = arith.constant 0 : i32
    return %c0_i32, %c0_i32_0, %c0_i32_1 : i32, i32, i32
  }
  func.func @transform_6(%arg0: i32) -> (i32, i32, i32) {
    %c0_i32 = arith.constant 0 : i32
    %c0_i32_0 = arith.constant 0 : i32
    %c0_i32_1 = arith.constant 0 : i32
    %c0_i32_2 = arith.constant 0 : i32
    return %c0_i32, %c0_i32_0, %c0_i32_1 : i32, i32, i32
  }
  func.func @transform_7(%arg0: i32) -> (i32, i32) {
    %c0_i32 = arith.constant 0 : i32
    %c0_i32_0 = arith.constant 0 : i32
    %c0_i32_1 = arith.constant 0 : i32
    return %c0_i32, %c0_i32_0 : i32, i32
  }
  func.func @transform_8(%arg0: i32) -> (i32, i32) {
    %c0_i32 = arith.constant 0 : i32
    %c0_i32_0 = arith.constant 0 : i32
    %c0_i32_1 = arith.constant 0 : i32
    return %c0_i32, %c0_i32_0 : i32, i32
  }
  func.func @transform_9(%arg0: i32) -> (i32, i32) {
    %c0_i32 = arith.constant 0 : i32
    %c0_i32_0 = arith.constant 0 : i32
    %c0_i32_1 = arith.constant 0 : i32
    return %c0_i32, %c0_i32_0 : i32, i32
  }
  func.func @transform_10(%arg0: i32) -> (i32, i32) {
    %c0_i32 = arith.constant 0 : i32
    %c0_i32_0 = arith.constant 0 : i32
    %c0_i32_1 = arith.constant 0 : i32
    return %c0_i32, %c0_i32_0 : i32, i32
  }
  func.func @transform_11(%arg0: i32) -> (i32, i32) {
    %c0_i32 = arith.constant 0 : i32
    %c0_i32_0 = arith.constant 0 : i32
    %c0_i32_1 = arith.constant 0 : i32
    return %c0_i32, %c0_i32_0 : i32, i32
  }
  func.func @transform_12(%arg0: i32) -> (i32, i32, i32) {
    %c0_i32 = arith.constant 0 : i32
    %c0_i32_0 = arith.constant 0 : i32
    %c0_i32_1 = arith.constant 0 : i32
    return %arg0, %c0_i32, %c0_i32_0 : i32, i32, i32
  }
}

</mosaic_0001>

<llo_original>
// kernel: rdb5c_forward.1
$region0: #{rdb5c_forward.1}
  #allocation0 [shape = 'u32[]', space=smem, size = 0x4, offset = 0x4, fixed_abs, tag = 'smem constant byte address 0x4 - core index']
  #allocation1 [shape = 'u32[144,128]{1,0:T(1,128)}', space=vmem, size = 0x12000, scoped, tag = 'internal scratch']
  #allocation2 [shape = 'bf16[96,288]{1,0:T(8,128)(2,1)}', space=vmem, size = 0x12000, scoped, tag = 'scratch operand']
  #allocation3 [shape = 'bf16[96,288]{1,0:T(8,128)(2,1)}', space=vmem, size = 0x12000, scoped, tag = 'scratch operand']
  #allocation4 [shape = 'bf16[96,288]{1,0:T(8,128)(2,1)}', space=vmem, size = 0x12000, scoped, tag = 'scratch operand']
  %s0 = inlined_call_operand.vmem [shape: f32[2,8,288], index: 0, kind: input, shape index: {}]
  %s1 = inlined_call_operand.vmem [shape: bf16[3,288], index: 1, kind: input, shape index: {}]
  %s2 = inlined_call_operand.vmem [shape: bf16[3,4,32], index: 2, kind: input, shape index: {}]
  %s3 = inlined_call_operand.vmem [shape: bf16[3,4,48], index: 3, kind: input, shape index: {}]
  %s4 = inlined_call_operand.vmem [shape: bf16[3,4,64], index: 4, kind: input, shape index: {}]
  %s5 = inlined_call_operand.vmem [shape: bf16[3,4,80], index: 5, kind: input, shape index: {}]
  %s6 = inlined_call_operand.vmem [shape: bf16[3,8,96], index: 6, kind: input, shape index: {}]
  %s7 = inlined_call_operand.vmem [shape: f32[4,1], index: 7, kind: input, shape index: {}]
  %s8 = inlined_call_operand.vmem [shape: f32[4,1], index: 8, kind: input, shape index: {}]
  %s9 = inlined_call_operand.vmem [shape: f32[4,1], index: 9, kind: input, shape index: {}]
  %s10 = inlined_call_operand.vmem [shape: f32[4,1], index: 10, kind: input, shape index: {}]
  %s11 = inlined_call_operand.vmem [shape: f32[8,1], index: 11, kind: input, shape index: {}]
  %s12 = inlined_call_operand.vmem [shape: f32[2,8,256], index: 12, kind: output, shape index: {}]
  %s13 = sld [smem:[#allocation0]]
  $region81: #{rdb5c_forward.1} parent=0
    _
  %s15 = ssub.s32 1, %s13
  %s16 = scalar_select 0, %s15, %s13
  loop: start=0, step=1, limit=4
  $region2: #{rdb5c_forward.1} parent=0 // loop_pre_header
    _
  $region3: #{rdb5c_forward.1} parent=0 // loop_header
    %s18 = sphi 0, %s22
    %p19 = scmp.ge.s32.totalorder %s18, 4
    %s28 = sphi 0, %s30
    %s31 = sphi 0, %s28
    %s32 = sphi 0, %s31
    %s48 = sphi 0, %s32
    %s52 = sphi 0, %s52
    %s54 = sphi 0, %s52
    %s55 = sphi 0, %s54
    %s69 = sphi 0, %s55
    %s73 = sphi 0, %s73
    %s75 = sphi 0, %s73
    %s76 = sphi 0, %s75
    %s90 = sphi 0, %s76
    %s94 = sphi 0, %s94
    %s96 = sphi 0, %s94
    %s97 = sphi 0, %s96
    %s111 = sphi 0, %s97
    %s115 = sphi 0, %s115
    %s117 = sphi 0, %s115
    %s118 = sphi 0, %s117
    %s132 = sphi 0, %s118
    %s136 = sphi 0, %s136
    %s138 = sphi 0, %s136
    %s139 = sphi 0, %s138
    %s153 = sphi 0, %s139
    %s157 = sphi 0, %s157
    %s159 = sphi 0, %s157
    %s160 = sphi 0, %s159
    %s174 = sphi 0, %s160
    %s178 = sphi 0, %s178
    %s180 = sphi 0, %s178
    %s181 = sphi 0, %s180
    %s195 = sphi 0, %s181
    %s199 = sphi 0, %s199
    %s201 = sphi 0, %s199
    %s202 = sphi 0, %s201
    %s216 = sphi 0, %s202
    %s220 = sphi 0, %s220
    %s222 = sphi 0, %s220
    %s223 = sphi 0, %s222
    %s237 = sphi 0, %s223
    %s241 = sphi 0, %s241
    %s243 = sphi 0, %s241
    %s244 = sphi 0, %s243
    %s258 = sphi 0, %s244
    %s262 = sphi 0, %s262
    %s264 = sphi 0, %s262
    %s265 = sphi 0, %s264
    %s279 = sphi 0, %s265
    %s285 = sphi 0, %s287
    %s288 = sphi 0, %s285
    %s289 = sphi 0, %s288
    %s305 = sphi 0, %s289
  $region4: #{rdb5c_forward.1} parent=0 // loop_header_branch
    %21 = sbr.rel (%p19) target = $region8
  $region5: #{rdb5c_forward.1} parent=0 // loop_body
    %s23 = ssub.s32 %s18, 1
    %s24 = ssub.s32 %s18, 2
    %s25 = sadd.s32 %s18, 1
    %s26 = ssub.s32 %s18, %s25
    %p27 = scmp.eq.s32.totalorder %s26, 0
    %s29 = sadd.s32 %s28, 1
    %s30 = scalar_select %p27, %s28, %s29
    %p33 = pneg %p27
    %p34 = scmp.eq.s32.totalorder %s18, 1
    %p35 = por %p33, %p34
    %p36 = scmp.ne.s32.totalorder %s28, %s31
    %p37 = scmp.eq.s32.totalorder %s18, 0
    %p38 = por %p36, %p37
    %p39 = scmp.ne.s32.totalorder %s28, %s31
    %p40 = scmp.eq.s32.totalorder %s23, 1
    %p41 = por %p39, %p40
    %p42 = scmp.ne.s32.totalorder %s31, %s32
    %p43 = scmp.eq.s32.totalorder %s23, 0
    %p44 = por %p42, %p43
    %p45 = scmp.ne.s32.totalorder %s31, %s32
    %p46 = scmp.eq.s32.totalorder %s24, 1
    %p47 = por %p45, %p46
    %p49 = scmp.ne.s32.totalorder %s32, %s48
    %p50 = scmp.eq.s32.totalorder %s24, 0
    %p51 = por %p49, %p50
    %s53 = sadd.s32 %s52, 1
    %p56 = scmp.eq.s32.totalorder %s18, 1
    %p57 = scmp.ne.s32.totalorder %s52, %s54
    %p58 = scmp.eq.s32.totalorder %s18, 0
    %p59 = por %p57, %p58
    %p60 = scmp.ne.s32.totalorder %s52, %s54
    %p61 = scmp.eq.s32.totalorder %s23, 1
    %p62 = por %p60, %p61
    %p63 = scmp.ne.s32.totalorder %s54, %s55
    %p64 = scmp.eq.s32.totalorder %s23, 0
    %p65 = por %p63, %p64
    %p66 = scmp.ne.s32.totalorder %s54, %s55
    %p67 = scmp.eq.s32.totalorder %s24, 1
    %p68 = por %p66, %p67
    %p70 = scmp.ne.s32.totalorder %s55, %s69
    %p71 = scmp.eq.s32.totalorder %s24, 0
    %p72 = por %p70, %p71
    %s74 = sadd.s32 %s73, 1
    %p77 = scmp.eq.s32.totalorder %s18, 1
    %p78 = scmp.ne.s32.totalorder %s73, %s75
    %p79 = scmp.eq.s32.totalorder %s18, 0
    %p80 = por %p78, %p79
    %p81 = scmp.ne.s32.totalorder %s73, %s75
    %p82 = scmp.eq.s32.totalorder %s23, 1
    %p83 = por %p81, %p82
    %p84 = scmp.ne.s32.totalorder %s75, %s76
    %p85 = scmp.eq.s32.totalorder %s23, 0
    %p86 = por %p84, %p85
    %p87 = scmp.ne.s32.totalorder %s75, %s76
    %p88 = scmp.eq.s32.totalorder %s24, 1
    %p89 = por %p87, %p88
    %p91 = scmp.ne.s32.totalorder %s76, %s90
    %p92 = scmp.eq.s32.totalorder %s24, 0
    %p93 = por %p91, %p92
    %s95 = sadd.s32 %s94, 1
    %p98 = scmp.eq.s32.totalorder %s18, 1
    %p99 = scmp.ne.s32.totalorder %s94, %s96
    %p100 = scmp.eq.s32.totalorder %s18, 0
    %p101 = por %p99, %p100
    %p102 = scmp.ne.s32.totalorder %s94, %s96
    %p103 = scmp.eq.s32.totalorder %s23, 1
    %p104 = por %p102, %p103
    %p105 = scmp.ne.s32.totalorder %s96, %s97
    %p106 = scmp.eq.s32.totalorder %s23, 0
    %p107 = por %p105, %p106
    %p108 = scmp.ne.s32.totalorder %s96, %s97
    %p109 = scmp.eq.s32.totalorder %s24, 1
    %p110 = por %p108, %p109
    %p112 = scmp.ne.s32.totalorder %s97, %s111
    %p113 = scmp.eq.s32.totalorder %s24, 0
    %p114 = por %p112, %p113
    %s116 = sadd.s32 %s115, 1
    %p119 = scmp.eq.s32.totalorder %s18, 1
    %p120 = scmp.ne.s32.totalorder %s115, %s117
    %p121 = scmp.eq.s32.totalorder %s18, 0
    %p122 = por %p120, %p121
    %p123 = scmp.ne.s32.totalorder %s115, %s117
    %p124 = scmp.eq.s32.totalorder %s23, 1
    %p125 = por %p123, %p124
    %p126 = scmp.ne.s32.totalorder %s117, %s118
    %p127 = scmp.eq.s32.totalorder %s23, 0
    %p128 = por %p126, %p127
    %p129 = scmp.ne.s32.totalorder %s117, %s118
    %p130 = scmp.eq.s32.totalorder %s24, 1
    %p131 = por %p129, %p130
    %p133 = scmp.ne.s32.totalorder %s118, %s132
    %p134 = scmp.eq.s32.totalorder %s24, 0
    %p135 = por %p133, %p134
    %s137 = sadd.s32 %s136, 1
    %p140 = scmp.eq.s32.totalorder %s18, 1
    %p141 = scmp.ne.s32.totalorder %s136, %s138
    %p142 = scmp.eq.s32.totalorder %s18, 0
    %p143 = por %p141, %p142
    %p144 = scmp.ne.s32.totalorder %s136, %s138
    %p145 = scmp.eq.s32.totalorder %s23, 1
    %p146 = por %p144, %p145
    %p147 = scmp.ne.s32.totalorder %s138, %s139
    %p148 = scmp.eq.s32.totalorder %s23, 0
    %p149 = por %p147, %p148
    %p150 = scmp.ne.s32.totalorder %s138, %s139
    %p151 = scmp.eq.s32.totalorder %s24, 1
    %p152 = por %p150, %p151
    %p154 = scmp.ne.s32.totalorder %s139, %s153
    %p155 = scmp.eq.s32.totalorder %s24, 0
    %p156 = por %p154, %p155
    %s158 = sadd.s32 %s157, 1
    %p161 = scmp.eq.s32.totalorder %s18, 1
    %p162 = scmp.ne.s32.totalorder %s157, %s159
    %p163 = scmp.eq.s32.totalorder %s18, 0
    %p164 = por %p162, %p163
    %p165 = scmp.ne.s32.totalorder %s157, %s159
    %p166 = scmp.eq.s32.totalorder %s23, 1
    %p167 = por %p165, %p166
    %p168 = scmp.ne.s32.totalorder %s159, %s160
    %p169 = scmp.eq.s32.totalorder %s23, 0
    %p170 = por %p168, %p169
    %p171 = scmp.ne.s32.totalorder %s159, %s160
    %p172 = scmp.eq.s32.totalorder %s24, 1
    %p173 = por %p171, %p172
    %p175 = scmp.ne.s32.totalorder %s160, %s174
    %p176 = scmp.eq.s32.totalorder %s24, 0
    %p177 = por %p175, %p176
    %s179 = sadd.s32 %s178, 1
    %p182 = scmp.eq.s32.totalorder %s18, 1
    %p183 = scmp.ne.s32.totalorder %s178, %s180
    %p184 = scmp.eq.s32.totalorder %s18, 0
    %p185 = por %p183, %p184
    %p186 = scmp.ne.s32.totalorder %s178, %s180
    %p187 = scmp.eq.s32.totalorder %s23, 1
    %p188 = por %p186, %p187
    %p189 = scmp.ne.s32.totalorder %s180, %s181
    %p190 = scmp.eq.s32.totalorder %s23, 0
    %p191 = por %p189, %p190
    %p192 = scmp.ne.s32.totalorder %s180, %s181
    %p193 = scmp.eq.s32.totalorder %s24, 1
    %p194 = por %p192, %p193
    %p196 = scmp.ne.s32.totalorder %s181, %s195
    %p197 = scmp.eq.s32.totalorder %s24, 0
    %p198 = por %p196, %p197
    %s200 = sadd.s32 %s199, 1
    %p203 = scmp.eq.s32.totalorder %s18, 1
    %p204 = scmp.ne.s32.totalorder %s199, %s201
    %p205 = scmp.eq.s32.totalorder %s18, 0
    %p206 = por %p204, %p205
    %p207 = scmp.ne.s32.totalorder %s199, %s201
    %p208 = scmp.eq.s32.totalorder %s23, 1
    %p209 = por %p207, %p208
    %p210 = scmp.ne.s32.totalorder %s201, %s202
    %p211 = scmp.eq.s32.totalorder %s23, 0
    %p212 = por %p210, %p211
    %p213 = scmp.ne.s32.totalorder %s201, %s202
    %p214 = scmp.eq.s32.totalorder %s24, 1
    %p215 = por %p213, %p214
    %p217 = scmp.ne.s32.totalorder %s202, %s216
    %p218 = scmp.eq.s32.totalorder %s24, 0
    %p219 = por %p217, %p218
    %s221 = sadd.s32 %s220, 1
    %p224 = scmp.eq.s32.totalorder %s18, 1
    %p225 = scmp.ne.s32.totalorder %s220, %s222
    %p226 = scmp.eq.s32.totalorder %s18, 0
    %p227 = por %p225, %p226
    %p228 = scmp.ne.s32.totalorder %s220, %s222
    %p229 = scmp.eq.s32.totalorder %s23, 1
    %p230 = por %p228, %p229
    %p231 = scmp.ne.s32.totalorder %s222, %s223
    %p232 = scmp.eq.s32.totalorder %s23, 0
    %p233 = por %p231, %p232
    %p234 = scmp.ne.s32.totalorder %s222, %s223
    %p235 = scmp.eq.s32.totalorder %s24, 1
    %p236 = por %p234, %p235
    %p238 = scmp.ne.s32.totalorder %s223, %s237
    %p239 = scmp.eq.s32.totalorder %s24, 0
    %p240 = por %p238, %p239
    %s242 = sadd.s32 %s241, 1
    %p245 = scmp.eq.s32.totalorder %s18, 1
    %p246 = scmp.ne.s32.totalorder %s241, %s243
    %p247 = scmp.eq.s32.totalorder %s18, 0
    %p248 = por %p246, %p247
    %p249 = scmp.ne.s32.totalorder %s241, %s243
    %p250 = scmp.eq.s32.totalorder %s23, 1
    %p251 = por %p249, %p250
    %p252 = scmp.ne.s32.totalorder %s243, %s244
    %p253 = scmp.eq.s32.totalorder %s23, 0
    %p254 = por %p252, %p253
    %p255 = scmp.ne.s32.totalorder %s243, %s244
    %p256 = scmp.eq.s32.totalorder %s24, 1
    %p257 = por %p255, %p256
    %p259 = scmp.ne.s32.totalorder %s244, %s258
    %p260 = scmp.eq.s32.totalorder %s24, 0
    %p261 = por %p259, %p260
    %s263 = sadd.s32 %s262, 1
    %p266 = scmp.eq.s32.totalorder %s18, 1
    %p267 = scmp.ne.s32.totalorder %s262, %s264
    %p268 = scmp.eq.s32.totalorder %s18, 0
    %p269 = por %p267, %p268
    %p270 = scmp.ne.s32.totalorder %s262, %s264
    %p271 = scmp.eq.s32.totalorder %s23, 1
    %p272 = por %p270, %p271
    %p273 = scmp.ne.s32.totalorder %s264, %s265
    %p274 = scmp.eq.s32.totalorder %s23, 0
    %p275 = por %p273, %p274
    %p276 = scmp.ne.s32.totalorder %s264, %s265
    %p277 = scmp.eq.s32.totalorder %s24, 1
    %p278 = por %p276, %p277
    %p280 = scmp.ne.s32.totalorder %s265, %s279
    %p281 = scmp.eq.s32.totalorder %s24, 0
    %p282 = por %p280, %p281
    %s283 = ssub.s32 %s18, %s25
    %p284 = scmp.eq.s32.totalorder %s283, 0
    %s286 = sadd.s32 %s285, 1
    %s287 = scalar_select %p284, %s285, %s286
    %p290 = pneg %p284
    %p291 = scmp.eq.s32.totalorder %s18, 1
    %p292 = por %p290, %p291
    %p293 = scmp.ne.s32.totalorder %s285, %s288
    %p294 = scmp.eq.s32.totalorder %s18, 0
    %p295 = por %p293, %p294
    %p296 = scmp.ne.s32.totalorder %s285, %s288
    %p297 = scmp.eq.s32.totalorder %s23, 1
    %p298 = por %p296, %p297
    %p299 = scmp.ne.s32.totalorder %s288, %s289
    %p300 = scmp.eq.s32.totalorder %s23, 0
    %p301 = por %p299, %p300
    %p302 = scmp.ne.s32.totalorder %s288, %s289
    %p303 = scmp.eq.s32.totalorder %s24, 1
    %p304 = por %p302, %p303
    %p306 = scmp.ne.s32.totalorder %s289, %s305
    %p307 = scmp.eq.s32.totalorder %s24, 0
    %p308 = por %p306, %p307
    %p309 = scmp.le.s32.totalorder 1, %s18
    %p310 = scmp.lt.s32.totalorder %s18, 3
    %p311 = pnand %p309, %p310
    %p312 = pneg %p311
    // Predicated region
    $region9: #{rdb5c_forward.1} parent=5 // pred_check
      _
    $region10: #{rdb5c_forward.1} parent=5 // pred_check_branch
      %314 = sbr.rel (%p311) target = $region12
    $region11: #{rdb5c_forward.1} parent=5 // pred_region
      %s315 = ssub.s32 %s18, 1
      // Predicated region
      $region13: #{rdb5c_forward.1} parent=11 // pred_check
        %p316 = pneg %p65
      $region14: #{rdb5c_forward.1} parent=11 // pred_check_branch
        %318 = sbr.rel (%p316) target = $region16
      $region15: #{rdb5c_forward.1} parent=11 // pred_region
        _
      $region16: #{rdb5c_forward.1} parent=11 // pred_fallthru
        _
      // Predicated region
      $region17: #{rdb5c_forward.1} parent=11 // pred_check
        %p319 = pneg %p86
      $region18: #{rdb5c_forward.1} parent=11 // pred_check_branch
        %321 = sbr.rel (%p319) target = $region20
      $region19: #{rdb5c_forward.1} parent=11 // pred_region
        _
      $region20: #{rdb5c_forward.1} parent=11 // pred_fallthru
        _
      // Predicated region
      $region21: #{rdb5c_forward.1} parent=11 // pred_check
        %p322 = pneg %p107
      $region22: #{rdb5c_forward.1} parent=11 // pred_check_branch
        %324 = sbr.rel (%p322) target = $region24
      $region23: #{rdb5c_forward.1} parent=11 // pred_region
        _
      $region24: #{rdb5c_forward.1} parent=11 // pred_fallthru
        _
      // Predicated region
      $region25: #{rdb5c_forward.1} parent=11 // pred_check
        %p325 = pneg %p128
      $region26: #{rdb5c_forward.1} parent=11 // pred_check_branch
        %327 = sbr.rel (%p325) target = $region28
      $region27: #{rdb5c_forward.1} parent=11 // pred_region
        _
      $region28: #{rdb5c_forward.1} parent=11 // pred_fallthru
        _
      // Predicated region
      $region29: #{rdb5c_forward.1} parent=11 // pred_check
        %p328 = pneg %p149
      $region30: #{rdb5c_forward.1} parent=11 // pred_check_branch
        %330 = sbr.rel (%p328) target = $region32
      $region31: #{rdb5c_forward.1} parent=11 // pred_region
        _
      $region32: #{rdb5c_forward.1} parent=11 // pred_fallthru
        _
      // Predicated region
      $region33: #{rdb5c_forward.1} parent=11 // pred_check
        %p331 = pneg %p170
      $region34: #{rdb5c_forward.1} parent=11 // pred_check_branch
        %333 = sbr.rel (%p331) target = $region36
      $region35: #{rdb5c_forward.1} parent=11 // pred_region
        _
      $region36: #{rdb5c_forward.1} parent=11 // pred_fallthru
        _
      // Predicated region
      $region37: #{rdb5c_forward.1} parent=11 // pred_check
        %p334 = pneg %p191
      $region38: #{rdb5c_forward.1} parent=11 // pred_check_branch
        %336 = sbr.rel (%p334) target = $region40
      $region39: #{rdb5c_forward.1} parent=11 // pred_region
        _
      $region40: #{rdb5c_forward.1} parent=11 // pred_fallthru
        _
      // Predicated region
      $region41: #{rdb5c_forward.1} parent=11 // pred_check
        %p337 = pneg %p212
      $region42: #{rdb5c_forward.1} parent=11 // pred_check_branch
        %339 = sbr.rel (%p337) target = $region44
      $region43: #{rdb5c_forward.1} parent=11 // pred_region
        _
      $region44: #{rdb5c_forward.1} parent=11 // pred_fallthru
        _
      // Predicated region
      $region45: #{rdb5c_forward.1} parent=11 // pred_check
        %p340 = pneg %p233
      $region46: #{rdb5c_forward.1} parent=11 // pred_check_branch
        %342 = sbr.rel (%p340) target = $region48
      $region47: #{rdb5c_forward.1} parent=11 // pred_region
        _
      $region48: #{rdb5c_forward.1} parent=11 // pred_fallthru
        _
      // Predicated region
      $region49: #{rdb5c_forward.1} parent=11 // pred_check
        %p343 = pneg %p254
      $region50: #{rdb5c_forward.1} parent=11 // pred_check_branch
        %345 = sbr.rel (%p343) target = $region52
      $region51: #{rdb5c_forward.1} parent=11 // pred_region
        _
      $region52: #{rdb5c_forward.1} parent=11 // pred_fallthru
        _
      // Predicated region
      $region53: #{rdb5c_forward.1} parent=11 // pred_check
        %p346 = pneg %p275
      $region54: #{rdb5c_forward.1} parent=11 // pred_check_branch
        %348 = sbr.rel (%p346) target = $region56
      $region55: #{rdb5c_forward.1} parent=11 // pred_region
        _
      $region56: #{rdb5c_forward.1} parent=11 // pred_fallthru
        _
    $region12: #{rdb5c_forward.1} parent=5 // pred_fallthru
      _
    %p349 = scmp.lt.s32.totalorder %s18, 2
    // Predicated region
    $region57: #{rdb5c_forward.1} parent=5 // pred_check
      %p350 = pneg %p349
    $region58: #{rdb5c_forward.1} parent=5 // pred_check_branch
      %352 = sbr.rel (%p350) target = $region60
    $region59: #{rdb5c_forward.1} parent=5 // pred_region
      // Predicated region
      $region61: #{rdb5c_forward.1} parent=59 // pred_check
        %p353 = pneg %p38
      $region62: #{rdb5c_forward.1} parent=59 // pred_check_branch
        %355 = sbr.rel (%p353) target = $region64
      $region63: #{rdb5c_forward.1} parent=59 // pred_region
        %p356 = scmp.lt.s32.totalorder %s18, 1
        %s357 = scalar_select %p356, %s18, 1
        %s358 = smul.addr %s357, 3
        %s359 = smul.addr %s358, 8
        %s360 = scalar_lea.vmem %s0, %s359
      $region64: #{rdb5c_forward.1} parent=59 // pred_fallthru
        _
    $region60: #{rdb5c_forward.1} parent=5 // pred_fallthru
      _
    %p361 = scmp.le.s32.totalorder 1, %s18
    %p362 = scmp.lt.s32.totalorder %s18, 3
    %p363 = pnand %p361, %p362
    %p364 = pneg %p363
    // Predicated region
    $region65: #{rdb5c_forward.1} parent=5 // pred_check
      _
    $region66: #{rdb5c_forward.1} parent=5 // pred_check_branch
      %366 = sbr.rel (%p363) target = $region68
    $region67: #{rdb5c_forward.1} parent=5 // pred_region
      %s367 = ssub.s32 %s18, 1
      %p368 = scmp.lt.s32.totalorder %s23, 1
      %s369 = scalar_select %p368, %s23, 1
      %s370 = smul.addr %s369, 3
      %s371 = smul.addr %s370, 8
      %s372 = scalar_lea.vmem %s0, %s371
      %p373 = pneg %p44
      %p374 = pneg %p41
      %p375 = pneg %p65
      %p376 = pneg %p62
      %p377 = pneg %p86
      %p378 = pneg %p83
      %p379 = pneg %p107
      %p380 = pneg %p104
      %p381 = pneg %p128
      %p382 = pneg %p125
      %p383 = pneg %p149
      %p384 = pneg %p146
      %p385 = pneg %p170
      %p386 = pneg %p167
      %p387 = pneg %p191
      %p388 = pneg %p188
      %p389 = pneg %p212
      %p390 = pneg %p209
      %p391 = pneg %p233
      %p392 = pneg %p230
      %p393 = pneg %p254
      %p394 = pneg %p251
      %p395 = pneg %p275
      %p396 = pneg %p272
      %p397 = pneg %p301
      %p398 = pneg %p298
      %p399 = scmp.lt.s32.totalorder %s23, 1
      %s400 = scalar_select %p399, %s23, 1
      %s401 = smul.addr %s400, 2
      %s402 = smul.addr %s401, 8
      %s403 = scalar_lea.vmem %s12, %s402
      %p404 = scmp.lt.s32.totalorder %s23, 1
      %s405 = scalar_select %p404, %s23, 1
      %s406 = smul.addr %s405, 3
      %s407 = smul.addr %s406, 8
      %s408 = scalar_lea.vmem %s0, %s407
      %p409 = scmp.lt.s32.totalorder %s23, 1
      %s410 = scalar_select %p409, %s23, 1
      %s411 = smul.addr %s410, 2
      %s412 = smul.addr %s411, 8
      %s413 = scalar_lea.vmem %s12, %s412
      %v415 = vld [vmem:[%s408] sm:$0xff]
      %v416 = vld [vmem:[%s408 + $0x8] sm:$0xff]
      %v417 = vld [vmem:[%s408 + $0x10] sm:$0xff]
      %v418 = vld [vmem:[%s1] sm:$0x3f]
      %v419 = vpack.c.bf16 %v415, %v415
      %v420 = vpack.c.bf16 %v416, %v416
      %v421 = vpack.c.bf16 %v417, %v417
      %423 = vrot.lane.b32.xlu0 %v421, 112
      %v424 = vpop.permute.xlu0 %423
      %427 = vrot.lane.b32.xlu0 %v419, 16
      %v428 = vpop.permute.xlu0 %427
      %429 = vrot.lane.b32.xlu0 %v420, 16
      %v430 = vpop.permute.xlu0 %429
      %431 = vrot.lane.b32.xlu0 %v421, 16
      %v432 = vpop.permute.xlu0 %431
      %vm433 = vcmask 130048
      %v434 = vsel %vm433, %v428, %v430
      %v435 = vsel %vm433, %v430, %v432
      %vm436 = vcmask 130048
      %v439 = vsel %vm436, %v424, %v428
      %440 = vrot.lane.b32.xlu0 %v419, 112
      %v441 = vpop.permute.xlu0 %440
      %442 = vrot.lane.b32.xlu0 %v420, 112
      %v443 = vpop.permute.xlu0 %442
      %vm444 = vcmask 916480
      %v445 = vsel %vm444, %v441, %v443
      %v446 = vsel %vm444, %v443, %v424
      %v447 = vrot.slane %v419, 4
      %v448 = vrot.slane %v420, 4
      %v449 = vrot.slane %v421, 4
      %vm450 = vcmask 1043456
      %v452 = vsel %vm450, %v439, %v447
      %v455 = vsel %vm450, %v434, %v448
      %v458 = vsel %vm450, %v435, %v449
      %v461 = vsel %vm450, %v445, 0
      %v463 = vsel %vm450, %v446, 0
      %v464 = vsel %vm450, %v439, 0
      %v471 = vunpack.c.l.b16 %v452
      %v472 = vunpack.c.l.b16 %v455
      %v473 = vunpack.c.l.b16 %v458
      %v474 = vunpack.c.h.b16 %v452
      %v475 = vunpack.c.h.b16 %v455
      %v476 = vunpack.c.h.b16 %v458
      %v477 = vunpack.c.l.b16 %v461
      %v478 = vunpack.c.l.b16 %v463
      %v479 = vunpack.c.l.b16 %v464
      %v480 = vunpack.c.h.b16 %v461
      %v481 = vunpack.c.h.b16 %v463
      %v482 = vunpack.c.h.b16 %v464
      %v483 = vpack.c.b16 %v472, %v471
      %v484 = vpack.c.b16 %v473, %v473
      %v485 = vpack.c.b16 %v475, %v474
      %v486 = vpack.c.b16 %v476, %v476
      %v487 = vpack.c.b16 %v478, %v477
      %v488 = vpack.c.b16 %v479, %v479
      %v489 = vpack.c.b16 %v481, %v480
      %v490 = vpack.c.b16 %v482, %v482
      %499 = vst [vmem:[#allocation3] sm:$0xff] %v483
      %vm500 = vcmask 257024
      %501 = vst.msk [vmem:[#allocation3 + $0x8] sm:$0xf] %vm500, %v484
      %502 = vst [vmem:[#allocation3 + $0xc] sm:$0xff] %v485
      %503 = vst.msk [vmem:[#allocation3 + $0x14] sm:$0xf] %vm500, %v486
      %504 = vst [vmem:[#allocation3 + $0x18] sm:$0xff] %v487
      %505 = vst.msk [vmem:[#allocation3 + $0x20] sm:$0xf] %vm500, %v488
      %506 = vst [vmem:[#allocation3 + $0x24] sm:$0xff] %v489
      %507 = vst.msk [vmem:[#allocation3 + $0x2c] sm:$0xf] %vm500, %v490
      %508 = vrot.lane.b32.xlu0 %v458, 97
      %v509 = vpop.permute.xlu0 %508
      %510 = vrot.lane.b32.xlu0 %v464, 97
      %v511 = vpop.permute.xlu0 %510
      %512 = vrot.lane.b32.xlu0 %v452, 1
      %v513 = vpop.permute.xlu0 %512
      %514 = vrot.lane.b32.xlu0 %v455, 1
      %v515 = vpop.permute.xlu0 %514
      %516 = vrot.lane.b32.xlu0 %v458, 1
      %v517 = vpop.permute.xlu0 %516
      %518 = vrot.lane.b32.xlu0 %v461, 1
      %v519 = vpop.permute.xlu0 %518
      %520 = vrot.lane.b32.xlu0 %v463, 1
      %v521 = vpop.permute.xlu0 %520
      %522 = vrot.lane.b32.xlu0 %v464, 1
      %v523 = vpop.permute.xlu0 %522
      %vm524 = vcmask 7168
      %v525 = vsel %vm524, %v513, %v515
      %v526 = vsel %vm524, %v515, %v517
      %v527 = vsel %vm524, %v519, %v521
      %v528 = vsel %vm524, %v521, %v523
      %vm533 = vcmask 7168
      %v536 = vsel %vm533, %v509, %v513
      %v540 = vsel %vm533, %v511, %v519
      %v543 = vcombine.high %v418, %v418
      %v545 = vunpack.c.l.s4 1983009808
      %v546 = vunpack.c.0.s8 %v545
      %v547 = vlaneseq
      %v548 = vshrl.u32 %v547, 7
      %v549 = vsub.s32 %v546, %v548
      %v550 = vrot.slane %v418, %v549
      %v552 = vunpack.c.l.s4 1983009808
      %v553 = vunpack.c.0.s8 %v552
      %v554 = vlaneseq
      %v555 = vshrl.u32 %v554, 7
      %v556 = vsub.s32 %v553, %v555
      %v557 = vrot.slane %v543, %v556
      %v558 = vcombine.high %v550, %v550
      %v560 = vshrl.u32 %v550, 16
      %v561 = vpack.i.b16 %v560, %v560
      %v563 = vlaneseq
      %v564 = vshrl.u32 %v563, 7
      %v565 = vsub.s32 0, %v564
      %v566 = vrot.slane %v561, %v565
      %v568 = vshrl.u32 %v558, 16
      %v569 = vpack.i.b16 %v568, %v568
      %v571 = vlaneseq
      %v572 = vshrl.u32 %v571, 7
      %v573 = vsub.s32 0, %v572
      %v574 = vrot.slane %v569, %v573
      %v576 = vshrl.u32 %v557, 16
      %v577 = vpack.i.b16 %v576, %v576
      %v579 = vlaneseq
      %v580 = vshrl.u32 %v579, 7
      %v581 = vsub.s32 0, %v580
      %v582 = vrot.slane %v577, %v581
      %v583 = vmul.bf16 %v566, %v536
      %v584 = vmul.bf16 %v574, %v525
      %v585 = vmul.bf16 %v582, %v526
      %v586 = vmul.bf16 %v566, %v540
      %v587 = vmul.bf16 %v574, %v527
      %v588 = vmul.bf16 %v582, %v528
      %v595 = vunpack.c.l.b16 %v583
      %v596 = vunpack.c.l.b16 %v584
      %v597 = vunpack.c.l.b16 %v585
      %v598 = vunpack.c.h.b16 %v583
      %v599 = vunpack.c.h.b16 %v584
      %v600 = vunpack.c.h.b16 %v585
      %v601 = vunpack.c.l.b16 %v586
      %v602 = vunpack.c.l.b16 %v587
      %v603 = vunpack.c.l.b16 %v588
      %v604 = vunpack.c.h.b16 %v586
      %v605 = vunpack.c.h.b16 %v587
      %v606 = vunpack.c.h.b16 %v588
      %v607 = vpack.c.b16 %v596, %v595
      %v608 = vpack.c.b16 %v597, %v597
      %v609 = vpack.c.b16 %v599, %v598
      %v610 = vpack.c.b16 %v600, %v600
      %v611 = vpack.c.b16 %v602, %v601
      %v612 = vpack.c.b16 %v603, %v603
      %v613 = vpack.c.b16 %v605, %v604
      %v614 = vpack.c.b16 %v606, %v606
      %623 = vst [vmem:[#allocation2] sm:$0xff] %v607
      %624 = vst.msk [vmem:[#allocation2 + $0x8] sm:$0xf] %vm500, %v608
      %625 = vst [vmem:[#allocation2 + $0xc] sm:$0xff] %v609
      %626 = vst.msk [vmem:[#allocation2 + $0x14] sm:$0xf] %vm500, %v610
      %627 = vst [vmem:[#allocation2 + $0x18] sm:$0xff] %v611
      %628 = vst.msk [vmem:[#allocation2 + $0x20] sm:$0xf] %vm500, %v612
      %629 = vst [vmem:[#allocation2 + $0x24] sm:$0xff] %v613
      %630 = vst.msk [vmem:[#allocation2 + $0x2c] sm:$0xf] %vm500, %v614
      %631 = vrot.lane.b32.xlu0 %v452, 127
      %v632 = vpop.permute.xlu0 %631
      %633 = vrot.lane.b32.xlu0 %v455, 127
      %v634 = vpop.permute.xlu0 %633
      %635 = vrot.lane.b32.xlu0 %v458, 127
      %v636 = vpop.permute.xlu0 %635
      %637 = vrot.lane.b32.xlu0 %v461, 127
      %v638 = vpop.permute.xlu0 %637
      %639 = vrot.lane.b32.xlu0 %v463, 127
      %v640 = vpop.permute.xlu0 %639
      %641 = vrot.lane.b32.xlu0 %v464, 127
      %v642 = vpop.permute.xlu0 %641
      %vm643 = vcmask 1039360
      %v644 = vsel %vm643, %v632, %v634
      %v645 = vsel %vm643, %v634, %v636
      %v646 = vsel %vm643, %v638, %v640
      %v647 = vsel %vm643, %v640, %v642
      %652 = vrot.lane.b32.xlu0 %v452, 31
      %v653 = vpop.permute.xlu0 %652
      %654 = vrot.lane.b32.xlu0 %v461, 31
      %v655 = vpop.permute.xlu0 %654
      %vm656 = vcmask 252928
      %v659 = vsel %vm656, %v636, %v653
      %v663 = vsel %vm656, %v642, %v655
      %v665 = vpack.i.b16 %v550, %v550
      %v667 = vlaneseq
      %v668 = vshrl.u32 %v667, 7
      %v669 = vsub.s32 1, %v668
      %v670 = vrot.slane %v665, %v669
      %v671 = vpack.i.b16 %v558, %v558
      %v673 = vlaneseq
      %v674 = vshrl.u32 %v673, 7
      %v675 = vsub.s32 1, %v674
      %v676 = vrot.slane %v671, %v675
      %v677 = vpack.i.b16 %v557, %v557
      %v679 = vlaneseq
      %v680 = vshrl.u32 %v679, 7
      %v681 = vsub.s32 1, %v680
      %v682 = vrot.slane %v677, %v681
      %v683 = vmul.bf16 %v670, %v644
      %v684 = vmul.bf16 %v676, %v645
      %v685 = vmul.bf16 %v682, %v659
      %v686 = vmul.bf16 %v670, %v646
      %v687 = vmul.bf16 %v676, %v647
      %v688 = vmul.bf16 %v682, %v663
      %v695 = vunpack.c.l.b16 %v683
      %v696 = vunpack.c.l.b16 %v684
      %v697 = vunpack.c.l.b16 %v685
      %v698 = vunpack.c.h.b16 %v683
      %v699 = vunpack.c.h.b16 %v684
      %v700 = vunpack.c.h.b16 %v685
      %v701 = vunpack.c.l.b16 %v686
      %v702 = vunpack.c.l.b16 %v687
      %v703 = vunpack.c.l.b16 %v688
      %v704 = vunpack.c.h.b16 %v686
      %v705 = vunpack.c.h.b16 %v687
      %v706 = vunpack.c.h.b16 %v688
      %v707 = vpack.c.b16 %v696, %v695
      %v708 = vpack.c.b16 %v697, %v697
      %v709 = vpack.c.b16 %v699, %v698
      %v710 = vpack.c.b16 %v700, %v700
      %v711 = vpack.c.b16 %v702, %v701
      %v712 = vpack.c.b16 %v703, %v703
      %v713 = vpack.c.b16 %v705, %v704
      %v714 = vpack.c.b16 %v706, %v706
      %723 = vst [vmem:[#allocation4] sm:$0xff] %v707
      %724 = vst.msk [vmem:[#allocation4 + $0x8] sm:$0xf] %vm500, %v708
      %725 = vst [vmem:[#allocation4 + $0xc] sm:$0xff] %v709
      %726 = vst.msk [vmem:[#allocation4 + $0x14] sm:$0xf] %vm500, %v710
      %727 = vst [vmem:[#allocation4 + $0x18] sm:$0xff] %v711
      %728 = vst.msk [vmem:[#allocation4 + $0x20] sm:$0xf] %vm500, %v712
      %729 = vst [vmem:[#allocation4 + $0x24] sm:$0xff] %v713
      %730 = vst.msk [vmem:[#allocation4 + $0x2c] sm:$0xf] %vm500, %v714
      %s731 = scalar_lea.vmem %s2, 2
      %v732 = vld [vmem:[%s731] sm:$0x3]
      %v733 = vld [vmem:[#allocation3] sm:$0xff]
      %v734 = vld [vmem:[#allocation3 + $0x8] sm:$0xf]
      %v735 = vld [vmem:[#allocation3 + $0xc] sm:$0xff]
      %v736 = vld [vmem:[#allocation3 + $0x14] sm:$0xf]
      %v737 = vld [vmem:[#allocation3 + $0x18] sm:$0xff]
      %v738 = vld [vmem:[#allocation3 + $0x20] sm:$0xf]
      %v739 = vld [vmem:[#allocation3 + $0x24] sm:$0xff]
      %v740 = vld [vmem:[#allocation3 + $0x2c] sm:$0xf]
      %v741 = vld [vmem:[%s2] sm:$0x3]
      %v742 = vld [vmem:[#allocation2] sm:$0xff]
      %v743 = vld [vmem:[#allocation2 + $0x8] sm:$0xf]
      %v744 = vld [vmem:[#allocation2 + $0xc] sm:$0xff]
      %v745 = vld [vmem:[#allocation2 + $0x14] sm:$0xf]
      %v746 = vld [vmem:[#allocation2 + $0x18] sm:$0xff]
      %v747 = vld [vmem:[#allocation2 + $0x20] sm:$0xf]
      %v748 = vld [vmem:[#allocation2 + $0x24] sm:$0xff]
      %v749 = vld [vmem:[#allocation2 + $0x2c] sm:$0xf]
      %v758 = vunpack.c.l.b16 %v742
      %v759 = vunpack.c.h.b16 %v742
      %v760 = vunpack.c.l.b16 %v743
      %v761 = vunpack.c.l.b16 %v744
      %v762 = vunpack.c.h.b16 %v744
      %v763 = vunpack.c.l.b16 %v745
      %v764 = vunpack.c.l.b16 %v746
      %v765 = vunpack.c.h.b16 %v746
      %v766 = vunpack.c.l.b16 %v747
      %v767 = vunpack.c.l.b16 %v748
      %v768 = vunpack.c.h.b16 %v748
      %v769 = vunpack.c.l.b16 %v749
      %v770 = vpack.c.b16 %v761, %v758
      %v771 = vpack.c.b16 %v762, %v759
      %v772 = vpack.c.b16 %v763, %v760
      %v773 = vpack.c.b16 %v767, %v764
      %v774 = vpack.c.b16 %v768, %v765
      %v775 = vpack.c.b16 %v769, %v766
      %vm782 = vcmask 261120
      %v784 = vsel %vm782, %v741, 0
      %786 = vmatprep.subr.bf16.mxu0 0
      %787 = vmatpush1.bf16.msra.mxu0 0
      %788 = vmatprep.subr.bf16.mxu0 0
      %789 = vmatpush1.bf16.msra.mxu0 0
      %790 = vmatprep.subr.bf16.mxu0 0
      %791 = vmatpush1.bf16.msra.mxu0 0
      %792 = vmatprep.subr.bf16.mxu0 0
      %793 = vmatpush1.bf16.msra.mxu0 0
      %794 = vmatprep.subr.bf16.mxu0 0
      %795 = vmatpush1.bf16.msra.mxu0 0
      %796 = vmatprep.subr.bf16.mxu0 0
      %797 = vmatpush1.bf16.msra.mxu0 0
      %798 = vmatprep.subr.bf16.mxu0 %v774
      %799 = vmatpush1.bf16.msra.mxu0 %v773
      %800 = vmatprep.subr.bf16.mxu0 %v771
      %801 = vmatpush1.bf16.msra.mxu0 %v770
      %802 = vmatprep.subr.bf16.mxu0 0
      %803 = vmatpush2.bf16.msra.mxu0 0
      %804 = vmatprep.subr.bf16.mxu0 0
      %805 = vmatpush2.bf16.msra.mxu0 0
      %806 = vmatprep.subr.bf16.mxu0 0
      %807 = vmatpush2.bf16.msra.mxu0 0
      %808 = vmatprep.subr.bf16.mxu0 0
      %809 = vmatpush2.bf16.msra.mxu0 0
      %810 = vmatprep.subr.bf16.mxu0 0
      %811 = vmatpush2.bf16.msra.mxu0 0
      %812 = vmatprep.subr.bf16.mxu0 0
      %813 = vmatpush2.bf16.msra.mxu0 0
      %814 = vmatprep.subr.bf16.mxu0 0
      %815 = vmatpush2.bf16.msra.mxu0 0
      %816 = vmatprep.subr.bf16.mxu0 0
      %817 = vmatpush2.bf16.msra.mxu0 0
      %818 = vmatprep.mubr.bf16.mxu0 0
      %819 = vmatmul.mubr.bf16.gmra.mxu0 %v784
      %v820 = vpop.f32.mrf.mxu0
      %v821 = vadd.f32 0.0, %v820
      %v822 = vpop.f32.mrf.mxu0
      %v823 = vadd.f32 0.0, %v822
      %v824 = vpop.f32.mrf.mxu0
      %v825 = vpop.f32.mrf.mxu0
      %826 = vdwg.mxu0
      %827 = vmatprep.subr.bf16.mxu0 0
      %828 = vmatpush1.bf16.msra.mxu0 0
      %829 = vmatprep.subr.bf16.mxu0 0
      %830 = vmatpush1.bf16.msra.mxu0 0
      %831 = vmatprep.subr.bf16.mxu0 0
      %832 = vmatpush1.bf16.msra.mxu0 0
      %833 = vmatprep.subr.bf16.mxu0 0
      %834 = vmatpush1.bf16.msra.mxu0 0
      %835 = vmatprep.subr.bf16.mxu0 0
      %836 = vmatpush1.bf16.msra.mxu0 0
      %837 = vmatprep.subr.bf16.mxu0 0
      %838 = vmatpush1.bf16.msra.mxu0 0
      %839 = vmatprep.subr.bf16.mxu0 0
      %840 = vmatpush1.bf16.msra.mxu0 %v775
      %841 = vmatprep.subr.bf16.mxu0 0
      %842 = vmatpush1.bf16.msra.mxu0 %v772
      %843 = vmatprep.subr.bf16.mxu0 0
      %844 = vmatpush2.bf16.msra.mxu0 0
      %845 = vmatprep.subr.bf16.mxu0 0
      %846 = vmatpush2.bf16.msra.mxu0 0
      %847 = vmatprep.subr.bf16.mxu0 0
      %848 = vmatpush2.bf16.msra.mxu0 0
      %849 = vmatprep.subr.bf16.mxu0 0
      %850 = vmatpush2.bf16.msra.mxu0 0
      %851 = vmatprep.subr.bf16.mxu0 0
      %852 = vmatpush2.bf16.msra.mxu0 0
      %853 = vmatprep.subr.bf16.mxu0 0
      %854 = vmatpush2.bf16.msra.mxu0 0
      %855 = vmatprep.subr.bf16.mxu0 0
      %856 = vmatpush2.bf16.msra.mxu0 0
      %857 = vmatprep.subr.bf16.mxu0 0
      %858 = vmatpush2.bf16.msra.mxu0 0
      %859 = vmatprep.mubr.bf16.mxu0 0
      %860 = vmatmul.mubr.bf16.gmra.mxu0 %v784
      %v861 = vpop.f32.mrf.mxu0
      %v862 = vadd.f32 0.0, %v861
      %v863 = vpop.f32.mrf.mxu0
      %v864 = vpop.f32.mrf.mxu0
      %v865 = vpop.f32.mrf.mxu0
      %866 = vdwg.mxu0
      %v875 = vunpack.c.l.b16 %v733
      %v876 = vunpack.c.h.b16 %v733
      %v877 = vunpack.c.l.b16 %v734
      %v878 = vunpack.c.l.b16 %v735
      %v879 = vunpack.c.h.b16 %v735
      %v880 = vunpack.c.l.b16 %v736
      %v881 = vunpack.c.l.b16 %v737
      %v882 = vunpack.c.h.b16 %v737
      %v883 = vunpack.c.l.b16 %v738
      %v884 = vunpack.c.l.b16 %v739
      %v885 = vunpack.c.h.b16 %v739
      %v886 = vunpack.c.l.b16 %v740
      %v887 = vpack.c.b16 %v878, %v875
      %v888 = vpack.c.b16 %v879, %v876
      %v889 = vpack.c.b16 %v880, %v877
      %v890 = vpack.c.b16 %v884, %v881
      %v891 = vpack.c.b16 %v885, %v882
      %v892 = vpack.c.b16 %v886, %v883
      %v900 = vsel %vm782, %v732, 0
      %902 = vmatprep.subr.bf16.mxu0 0
      %903 = vmatpush1.bf16.msra.mxu0 0
      %904 = vmatprep.subr.bf16.mxu0 0
      %905 = vmatpush1.bf16.msra.mxu0 0
      %906 = vmatprep.subr.bf16.mxu0 0
      %907 = vmatpush1.bf16.msra.mxu0 0
      %908 = vmatprep.subr.bf16.mxu0 0
      %909 = vmatpush1.bf16.msra.mxu0 0
      %910 = vmatprep.subr.bf16.mxu0 0
      %911 = vmatpush1.bf16.msra.mxu0 0
      %912 = vmatprep.subr.bf16.mxu0 0
      %913 = vmatpush1.bf16.msra.mxu0 0
      %914 = vmatprep.subr.bf16.mxu0 %v891
      %915 = vmatpush1.bf16.msra.mxu0 %v890
      %916 = vmatprep.subr.bf16.mxu0 %v888
      %917 = vmatpush1.bf16.msra.mxu0 %v887
      %918 = vmatprep.subr.bf16.mxu0 0
      %919 = vmatpush2.bf16.msra.mxu0 0
      %920 = vmatprep.subr.bf16.mxu0 0
      %921 = vmatpush2.bf16.msra.mxu0 0
      %922 = vmatprep.subr.bf16.mxu0 0
      %923 = vmatpush2.bf16.msra.mxu0 0
      %924 = vmatprep.subr.bf16.mxu0 0
      %925 = vmatpush2.bf16.msra.mxu0 0
      %926 = vmatprep.subr.bf16.mxu0 0
      %927 = vmatpush2.bf16.msra.mxu0 0
      %928 = vmatprep.subr.bf16.mxu0 0
      %929 = vmatpush2.bf16.msra.mxu0 0
      %930 = vmatprep.subr.bf16.mxu0 0
      %931 = vmatpush2.bf16.msra.mxu0 0
      %932 = vmatprep.subr.bf16.mxu0 0
      %933 = vmatpush2.bf16.msra.mxu0 0
      %934 = vmatprep.mubr.bf16.mxu0 0
      %935 = vmatmul.mubr.bf16.gmra.mxu0 %v900
      %v936 = vpop.f32.mrf.mxu0
      %v937 = vadd.f32 %v821, %v936
      %v938 = vpop.f32.mrf.mxu0
      %v939 = vadd.f32 %v823, %v938
      %v940 = vpop.f32.mrf.mxu0
      %v941 = vpop.f32.mrf.mxu0
      %942 = vdwg.mxu0
      %943 = vmatprep.subr.bf16.mxu0 0
      %944 = vmatpush1.bf16.msra.mxu0 0
      %945 = vmatprep.subr.bf16.mxu0 0
      %946 = vmatpush1.bf16.msra.mxu0 0
      %947 = vmatprep.subr.bf16.mxu0 0
      %948 = vmatpush1.bf16.msra.mxu0 0
      %949 = vmatprep.subr.bf16.mxu0 0
      %950 = vmatpush1.bf16.msra.mxu0 0
      %951 = vmatprep.subr.bf16.mxu0 0
      %952 = vmatpush1.bf16.msra.mxu0 0
      %953 = vmatprep.subr.bf16.mxu0 0
      %954 = vmatpush1.bf16.msra.mxu0 0
      %955 = vmatprep.subr.bf16.mxu0 0
      %956 = vmatpush1.bf16.msra.mxu0 %v892
      %957 = vmatprep.subr.bf16.mxu0 0
      %958 = vmatpush1.bf16.msra.mxu0 %v889
      %959 = vmatprep.subr.bf16.mxu0 0
      %960 = vmatpush2.bf16.msra.mxu0 0
      %961 = vmatprep.subr.bf16.mxu0 0
      %962 = vmatpush2.bf16.msra.mxu0 0
      %963 = vmatprep.subr.bf16.mxu0 0
      %964 = vmatpush2.bf16.msra.mxu0 0
      %965 = vmatprep.subr.bf16.mxu0 0
      %966 = vmatpush2.bf16.msra.mxu0 0
      %967 = vmatprep.subr.bf16.mxu0 0
      %968 = vmatpush2.bf16.msra.mxu0 0
      %969 = vmatprep.subr.bf16.mxu0 0
      %970 = vmatpush2.bf16.msra.mxu0 0
      %971 = vmatprep.subr.bf16.mxu0 0
      %972 = vmatpush2.bf16.msra.mxu0 0
      %973 = vmatprep.subr.bf16.mxu0 0
      %974 = vmatpush2.bf16.msra.mxu0 0
      %975 = vmatprep.mubr.bf16.mxu0 0
      %976 = vmatmul.mubr.bf16.gmra.mxu0 %v900
      %v977 = vpop.f32.mrf.mxu0
      %v978 = vadd.f32 %v862, %v977
      %v979 = vpop.f32.mrf.mxu0
      %v980 = vpop.f32.mrf.mxu0
      %v981 = vpop.f32.mrf.mxu0
      %982 = vdwg.mxu0
      %s983 = scalar_lea.vmem %s2, 4
      %v984 = vld [vmem:[%s983] sm:$0x3]
      %v985 = vld [vmem:[#allocation4] sm:$0xff]
      %v986 = vld [vmem:[#allocation4 + $0x8] sm:$0xf]
      %v987 = vld [vmem:[#allocation4 + $0xc] sm:$0xff]
      %v988 = vld [vmem:[#allocation4 + $0x14] sm:$0xf]
      %v989 = vld [vmem:[#allocation4 + $0x18] sm:$0xff]
      %v990 = vld [vmem:[#allocation4 + $0x20] sm:$0xf]
      %v991 = vld [vmem:[#allocation4 + $0x24] sm:$0xff]
      %v992 = vld [vmem:[#allocation4 + $0x2c] sm:$0xf]
      %v1001 = vunpack.c.l.b16 %v985
      %v1002 = vunpack.c.h.b16 %v985
      %v1003 = vunpack.c.l.b16 %v986
      %v1004 = vunpack.c.l.b16 %v987
      %v1005 = vunpack.c.h.b16 %v987
      %v1006 = vunpack.c.l.b16 %v988
      %v1007 = vunpack.c.l.b16 %v989
      %v1008 = vunpack.c.h.b16 %v989
      %v1009 = vunpack.c.l.b16 %v990
      %v1010 = vunpack.c.l.b16 %v991
      %v1011 = vunpack.c.h.b16 %v991
      %v1012 = vunpack.c.l.b16 %v992
      %v1013 = vpack.c.b16 %v1004, %v1001
      %v1014 = vpack.c.b16 %v1005, %v1002
      %v1015 = vpack.c.b16 %v1006, %v1003
      %v1016 = vpack.c.b16 %v1010, %v1007
      %v1017 = vpack.c.b16 %v1011, %v1008
      %v1018 = vpack.c.b16 %v1012, %v1009
      %v1026 = vsel %vm782, %v984, 0
      %1028 = vmatprep.subr.bf16.mxu0 0
      %1029 = vmatpush1.bf16.msra.mxu0 0
      %1030 = vmatprep.subr.bf16.mxu0 0
      %1031 = vmatpush1.bf16.msra.mxu0 0
      %1032 = vmatprep.subr.bf16.mxu0 0
      %1033 = vmatpush1.bf16.msra.mxu0 0
      %1034 = vmatprep.subr.bf16.mxu0 0
      %1035 = vmatpush1.bf16.msra.mxu0 0
      %1036 = vmatprep.subr.bf16.mxu0 0
      %1037 = vmatpush1.bf16.msra.mxu0 0
      %1038 = vmatprep.subr.bf16.mxu0 0
      %1039 = vmatpush1.bf16.msra.mxu0 0
      %1040 = vmatprep.subr.bf16.mxu0 %v1017
      %1041 = vmatpush1.bf16.msra.mxu0 %v1016
      %1042 = vmatprep.subr.bf16.mxu0 %v1014
      %1043 = vmatpush1.bf16.msra.mxu0 %v1013
      %1044 = vmatprep.subr.bf16.mxu0 0
      %1045 = vmatpush2.bf16.msra.mxu0 0
      %1046 = vmatprep.subr.bf16.mxu0 0
      %1047 = vmatpush2.bf16.msra.mxu0 0
      %1048 = vmatprep.subr.bf16.mxu0 0
      %1049 = vmatpush2.bf16.msra.mxu0 0
      %1050 = vmatprep.subr.bf16.mxu0 0
      %1051 = vmatpush2.bf16.msra.mxu0 0
      %1052 = vmatprep.subr.bf16.mxu0 0
      %1053 = vmatpush2.bf16.msra.mxu0 0
      %1054 = vmatprep.subr.bf16.mxu0 0
      %1055 = vmatpush2.bf16.msra.mxu0 0
      %1056 = vmatprep.subr.bf16.mxu0 0
      %1057 = vmatpush2.bf16.msra.mxu0 0
      %1058 = vmatprep.subr.bf16.mxu0 0
      %1059 = vmatpush2.bf16.msra.mxu0 0
      %1060 = vmatprep.mubr.bf16.mxu0 0
      %1061 = vmatmul.mubr.bf16.gmra.mxu0 %v1026
      %v1062 = vpop.f32.mrf.mxu0
      %v1063 = vadd.f32 0.0, %v1062
      %v1064 = vpop.f32.mrf.mxu0
      %v1065 = vadd.f32 0.0, %v1064
      %v1066 = vpop.f32.mrf.mxu0
      %v1067 = vpop.f32.mrf.mxu0
      %1068 = vdwg.mxu0
      %1069 = vmatprep.subr.bf16.mxu0 0
      %1070 = vmatpush1.bf16.msra.mxu0 0
      %1071 = vmatprep.subr.bf16.mxu0 0
      %1072 = vmatpush1.bf16.msra.mxu0 0
      %1073 = vmatprep.subr.bf16.mxu0 0
      %1074 = vmatpush1.bf16.msra.mxu0 0
      %1075 = vmatprep.subr.bf16.mxu0 0
      %1076 = vmatpush1.bf16.msra.mxu0 0
      %1077 = vmatprep.subr.bf16.mxu0 0
      %1078 = vmatpush1.bf16.msra.mxu0 0
      %1079 = vmatprep.subr.bf16.mxu0 0
      %1080 = vmatpush1.bf16.msra.mxu0 0
      %1081 = vmatprep.subr.bf16.mxu0 0
      %1082 = vmatpush1.bf16.msra.mxu0 %v1018
      %1083 = vmatprep.subr.bf16.mxu0 0
      %1084 = vmatpush1.bf16.msra.mxu0 %v1015
      %1085 = vmatprep.subr.bf16.mxu0 0
      %1086 = vmatpush2.bf16.msra.mxu0 0
      %1087 = vmatprep.subr.bf16.mxu0 0
      %1088 = vmatpush2.bf16.msra.mxu0 0
      %1089 = vmatprep.subr.bf16.mxu0 0
      %1090 = vmatpush2.bf16.msra.mxu0 0
      %1091 = vmatprep.subr.bf16.mxu0 0
      %1092 = vmatpush2.bf16.msra.mxu0 0
      %1093 = vmatprep.subr.bf16.mxu0 0
      %1094 = vmatpush2.bf16.msra.mxu0 0
      %1095 = vmatprep.subr.bf16.mxu0 0
      %1096 = vmatpush2.bf16.msra.mxu0 0
      %1097 = vmatprep.subr.bf16.mxu0 0
      %1098 = vmatpush2.bf16.msra.mxu0 0
      %1099 = vmatprep.subr.bf16.mxu0 0
      %1100 = vmatpush2.bf16.msra.mxu0 0
      %1101 = vmatprep.mubr.bf16.mxu0 0
      %1102 = vmatmul.mubr.bf16.gmra.mxu0 %v1026
      %v1103 = vpop.f32.mrf.mxu0
      %v1104 = vadd.f32 0.0, %v1103
      %v1105 = vpop.f32.mrf.mxu0
      %v1106 = vpop.f32.mrf.mxu0
      %v1107 = vpop.f32.mrf.mxu0
      %1108 = vdwg.mxu0
      %v1109 = vadd.f32 %v937, %v1063
      %v1110 = vadd.f32 %v939, %v1065
      %v1111 = vadd.f32 %v978, %v1104
      %v1112 = vld [vmem:[%s7] sm:$0xf]
      %1114 = vset.pattern.permute.xlu0 0
      %1115 = vperm.xlu0 %1114, %v1112
      %v1116 = vpop.permute.xlu0 %1115
      %v1118 = vadd.f32 %v1109, %v1116
      %v1119 = vadd.f32 %v1110, %v1116
      %v1120 = vadd.f32 %v1111, %v1116
      %v1121 = vmul.f32 %v1118, 0.2
      %v1122 = vmul.f32 %v1119, 0.2
      %v1123 = vmul.f32 %v1120, 0.2
      %v1124 = vmax.f32 %v1118, %v1121
      %v1125 = vmax.f32 %v1119, %v1122
      %v1126 = vmax.f32 %v1120, %v1123
      %v1127 = vunpack.c.l.bf16 %v418
      %v1128 = vunpack.c.h.bf16 %v418
      %v1131 = vlaneseq
      %v1132 = vshrl.u32 %v1131, 7
      %v1133 = vsub.s32 0, %v1132
      %v1134 = vrot.slane %v1127, %v1133
      %v1135 = vlaneseq
      %v1136 = vshrl.u32 %v1135, 7
      %v1137 = vsub.s32 4, %v1136
      %v1138 = vrot.slane %v1127, %v1137
      %v1139 = vlaneseq
      %v1140 = vshrl.u32 %v1139, 7
      %v1141 = vsub.s32 0, %v1140
      %v1142 = vrot.slane %v1128, %v1141
      %v1146 = vlaneseq
      %v1147 = vshrl.u32 %v1146, 7
      %v1148 = vsub.s32 0, %v1147
      %v1149 = vrot.slane %v1134, %v1148
      %v1150 = vlaneseq
      %v1151 = vshrl.u32 %v1150, 7
      %v1152 = vsub.s32 0, %v1151
      %v1153 = vrot.slane %v1138, %v1152
      %v1154 = vlaneseq
      %v1155 = vshrl.u32 %v1154, 7
      %v1156 = vsub.s32 0, %v1155
      %v1157 = vrot.slane %v1142, %v1156
      %v1158 = vmul.f32 %v1124, %v1149
      %v1159 = vmul.f32 %v1125, %v1153
      %v1160 = vmul.f32 %v1126, %v1157
      %v1161 = vpack.c.bf16 %v1158, %v1158
      %v1162 = vpack.c.bf16 %v1159, %v1159
      %v1163 = vpack.c.bf16 %v1160, %v1160
      %1165 = vrot.lane.b32.xlu0 %v1163, 112
      %v1166 = vpop.permute.xlu0 %1165
      %1169 = vrot.lane.b32.xlu0 %v1161, 16
      %v1170 = vpop.permute.xlu0 %1169
      %1171 = vrot.lane.b32.xlu0 %v1162, 16
      %v1172 = vpop.permute.xlu0 %1171
      %1173 = vrot.lane.b32.xlu0 %v1163, 16
      %v1174 = vpop.permute.xlu0 %1173
      %v1175 = vsel %vm433, %v1170, %v1172
      %v1176 = vsel %vm433, %v1172, %v1174
      %v1179 = vsel %vm436, %v1166, %v1170
      %1180 = vrot.lane.b32.xlu0 %v1161, 112
      %v1181 = vpop.permute.xlu0 %1180
      %1182 = vrot.lane.b32.xlu0 %v1162, 112
      %v1183 = vpop.permute.xlu0 %1182
      %v1184 = vsel %vm444, %v1181, %v1183
      %v1185 = vsel %vm444, %v1183, %v1166
      %v1186 = vrot.slane %v1161, 6
      %v1187 = vrot.slane %v1162, 6
      %v1188 = vrot.slane %v1163, 6
      %v1190 = vrot.slane %v1184, 4
      %v1191 = vrot.slane %v1185, 4
      %v1192 = vrot.slane %v1179, 4
      %vm1193 = vcmask 1041408
      %v1195 = vsel %vm1193, %v1179, %v1186
      %v1198 = vsel %vm1193, %v1175, %v1187
      %v1201 = vsel %vm1193, %v1176, %v1188
      %v1203 = vsel %vm450, %v1195, %v1190
      %v1205 = vsel %vm450, %v1198, %v1191
      %v1207 = vsel %vm450, %v1201, %v1192
      %vm1208 = vcmask 1045504
      %v1209 = vsel %vm1208, %v1203, 0
      %v1210 = vsel %vm1208, %v1205, 0
      %v1211 = vsel %vm1208, %v1207, 0
      %v1215 = vunpack.c.l.b16 %v1209
      %v1216 = vunpack.c.l.b16 %v1210
      %v1217 = vunpack.c.l.b16 %v1211
      %v1218 = vunpack.c.h.b16 %v1209
      %v1219 = vunpack.c.h.b16 %v1210
      %v1220 = vunpack.c.h.b16 %v1211
      %v1221 = vpack.c.b16 %v1216, %v1215
      %v1222 = vpack.c.b16 %v1217, %v1217
      %v1223 = vpack.c.b16 %v1219, %v1218
      %v1224 = vpack.c.b16 %v1220, %v1220
      %1229 = vst [vmem:[#allocation3 + $0x30] sm:$0xff] %v1221
      %1230 = vst.msk [vmem:[#allocation3 + $0x38] sm:$0xf] %vm500, %v1222
      %1231 = vst [vmem:[#allocation3 + $0x3c] sm:$0xff] %v1223
      %1232 = vst.msk [vmem:[#allocation3 + $0x44] sm:$0xf] %vm500, %v1224
      %1233 = vrot.lane.b32.xlu0 %v1211, 97
      %v1234 = vpop.permute.xlu0 %1233
      %1235 = vrot.lane.b32.xlu0 %v1209, 1
      %v1236 = vpop.permute.xlu0 %1235
      %1237 = vrot.lane.b32.xlu0 %v1210, 1
      %v1238 = vpop.permute.xlu0 %1237
      %1239 = vrot.lane.b32.xlu0 %v1211, 1
      %v1240 = vpop.permute.xlu0 %1239
      %v1241 = vsel %vm524, %v1236, %v1238
      %v1242 = vsel %vm524, %v1238, %v1240
      %v1247 = vsel %vm533, %v1234, %v1236
      %v1249 = vmul.bf16 %v566, %v1247
      %v1250 = vmul.bf16 %v574, %v1241
      %v1251 = vmul.bf16 %v582, %v1242
      %v1255 = vunpack.c.l.b16 %v1249
      %v1256 = vunpack.c.l.b16 %v1250
      %v1257 = vunpack.c.l.b16 %v1251
      %v1258 = vunpack.c.h.b16 %v1249
      %v1259 = vunpack.c.h.b16 %v1250
      %v1260 = vunpack.c.h.b16 %v1251
      %v1261 = vpack.c.b16 %v1256, %v1255
      %v1262 = vpack.c.b16 %v1257, %v1257
      %v1263 = vpack.c.b16 %v1259, %v1258
      %v1264 = vpack.c.b16 %v1260, %v1260
      %1269 = vst [vmem:[#allocation2 + $0x30] sm:$0xff] %v1261
      %1270 = vst.msk [vmem:[#allocation2 + $0x38] sm:$0xf] %vm500, %v1262
      %1271 = vst [vmem:[#allocation2 + $0x3c] sm:$0xff] %v1263
      %1272 = vst.msk [vmem:[#allocation2 + $0x44] sm:$0xf] %vm500, %v1264
      %1273 = vrot.lane.b32.xlu0 %v1209, 127
      %v1274 = vpop.permute.xlu0 %1273
      %1275 = vrot.lane.b32.xlu0 %v1210, 127
      %v1276 = vpop.permute.xlu0 %1275
      %1277 = vrot.lane.b32.xlu0 %v1211, 127
      %v1278 = vpop.permute.xlu0 %1277
      %v1279 = vsel %vm643, %v1274, %v1276
      %v1280 = vsel %vm643, %v1276, %v1278
      %1283 = vrot.lane.b32.xlu0 %v1209, 31
      %v1284 = vpop.permute.xlu0 %1283
      %v1287 = vsel %vm656, %v1278, %v1284
      %v1289 = vmul.bf16 %v670, %v1279
      %v1290 = vmul.bf16 %v676, %v1280
      %v1291 = vmul.bf16 %v682, %v1287
      %v1295 = vunpack.c.l.b16 %v1289
      %v1296 = vunpack.c.l.b16 %v1290
      %v1297 = vunpack.c.l.b16 %v1291
      %v1298 = vunpack.c.h.b16 %v1289
      %v1299 = vunpack.c.h.b16 %v1290
      %v1300 = vunpack.c.h.b16 %v1291
      %v1301 = vpack.c.b16 %v1296, %v1295
      %v1302 = vpack.c.b16 %v1297, %v1297
      %v1303 = vpack.c.b16 %v1299, %v1298
      %v1304 = vpack.c.b16 %v1300, %v1300
      %1309 = vst [vmem:[#allocation4 + $0x30] sm:$0xff] %v1301
      %1310 = vst.msk [vmem:[#allocation4 + $0x38] sm:$0xf] %vm500, %v1302
      %1311 = vst [vmem:[#allocation4 + $0x3c] sm:$0xff] %v1303
      %1312 = vst.msk [vmem:[#allocation4 + $0x44] sm:$0xf] %vm500, %v1304
      %s1313 = scalar_lea.vmem %s3, 2
      %v1314 = vld [vmem:[%s1313] sm:$0x3]
      %v1315 = vld [vmem:[#allocation3] sm:$0xff]
      %v1316 = vld [vmem:[#allocation3 + $0x8] sm:$0xf]
      %v1317 = vld [vmem:[#allocation3 + $0xc] sm:$0xff]
      %v1318 = vld [vmem:[#allocation3 + $0x14] sm:$0xf]
      %v1319 = vld [vmem:[#allocation3 + $0x18] sm:$0xff]
      %v1320 = vld [vmem:[#allocation3 + $0x20] sm:$0xf]
      %v1321 = vld [vmem:[#allocation3 + $0x24] sm:$0xff]
      %v1322 = vld [vmem:[#allocation3 + $0x2c] sm:$0xf]
      %v1323 = vld [vmem:[#allocation3 + $0x30] sm:$0xff]
      %v1324 = vld [vmem:[#allocation3 + $0x38] sm:$0xf]
      %v1325 = vld [vmem:[#allocation3 + $0x3c] sm:$0xff]
      %v1326 = vld [vmem:[#allocation3 + $0x44] sm:$0xf]
      %v1327 = vld [vmem:[%s3] sm:$0x3]
      %v1328 = vld [vmem:[#allocation2] sm:$0xff]
      %v1329 = vld [vmem:[#allocation2 + $0x8] sm:$0xf]
      %v1330 = vld [vmem:[#allocation2 + $0xc] sm:$0xff]
      %v1331 = vld [vmem:[#allocation2 + $0x14] sm:$0xf]
      %v1332 = vld [vmem:[#allocation2 + $0x18] sm:$0xff]
      %v1333 = vld [vmem:[#allocation2 + $0x20] sm:$0xf]
      %v1334 = vld [vmem:[#allocation2 + $0x24] sm:$0xff]
      %v1335 = vld [vmem:[#allocation2 + $0x2c] sm:$0xf]
      %v1336 = vld [vmem:[#allocation2 + $0x30] sm:$0xff]
      %v1337 = vld [vmem:[#allocation2 + $0x38] sm:$0xf]
      %v1338 = vld [vmem:[#allocation2 + $0x3c] sm:$0xff]
      %v1339 = vld [vmem:[#allocation2 + $0x44] sm:$0xf]
      %v1352 = vunpack.c.l.b16 %v1328
      %v1353 = vunpack.c.h.b16 %v1328
      %v1354 = vunpack.c.l.b16 %v1329
      %v1355 = vunpack.c.l.b16 %v1330
      %v1356 = vunpack.c.h.b16 %v1330
      %v1357 = vunpack.c.l.b16 %v1331
      %v1358 = vunpack.c.l.b16 %v1332
      %v1359 = vunpack.c.h.b16 %v1332
      %v1360 = vunpack.c.l.b16 %v1333
      %v1361 = vunpack.c.l.b16 %v1334
      %v1362 = vunpack.c.h.b16 %v1334
      %v1363 = vunpack.c.l.b16 %v1335
      %v1364 = vunpack.c.l.b16 %v1336
      %v1365 = vunpack.c.h.b16 %v1336
      %v1366 = vunpack.c.l.b16 %v1337
      %v1367 = vunpack.c.l.b16 %v1338
      %v1368 = vunpack.c.h.b16 %v1338
      %v1369 = vunpack.c.l.b16 %v1339
      %v1370 = vpack.c.b16 %v1355, %v1352
      %v1371 = vpack.c.b16 %v1356, %v1353
      %v1372 = vpack.c.b16 %v1357, %v1354
      %v1373 = vpack.c.b16 %v1361, %v1358
      %v1374 = vpack.c.b16 %v1362, %v1359
      %v1375 = vpack.c.b16 %v1363, %v1360
      %v1376 = vpack.c.b16 %v1367, %v1364
      %v1377 = vpack.c.b16 %v1368, %v1365
      %v1378 = vpack.c.b16 %v1369, %v1366
      %vm1388 = vcmask 392192
      %v1390 = vsel %vm1388, %v1327, 0
      %1392 = vmatprep.subr.bf16.mxu0 0
      %1393 = vmatpush1.bf16.msra.mxu0 0
      %1394 = vmatprep.subr.bf16.mxu0 0
      %1395 = vmatpush1.bf16.msra.mxu0 0
      %1396 = vmatprep.subr.bf16.mxu0 0
      %1397 = vmatpush1.bf16.msra.mxu0 0
      %1398 = vmatprep.subr.bf16.mxu0 0
      %1399 = vmatpush1.bf16.msra.mxu0 0
      %1400 = vmatprep.subr.bf16.mxu0 0
      %1401 = vmatpush1.bf16.msra.mxu0 0
      %1402 = vmatprep.subr.bf16.mxu0 %v1377
      %1403 = vmatpush1.bf16.msra.mxu0 %v1376
      %1404 = vmatprep.subr.bf16.mxu0 %v1374
      %1405 = vmatpush1.bf16.msra.mxu0 %v1373
      %1406 = vmatprep.subr.bf16.mxu0 %v1371
      %1407 = vmatpush1.bf16.msra.mxu0 %v1370
      %1408 = vmatprep.subr.bf16.mxu0 0
      %1409 = vmatpush2.bf16.msra.mxu0 0
      %1410 = vmatprep.subr.bf16.mxu0 0
      %1411 = vmatpush2.bf16.msra.mxu0 0
      %1412 = vmatprep.subr.bf16.mxu0 0
      %1413 = vmatpush2.bf16.msra.mxu0 0
      %1414 = vmatprep.subr.bf16.mxu0 0
      %1415 = vmatpush2.bf16.msra.mxu0 0
      %1416 = vmatprep.subr.bf16.mxu0 0
      %1417 = vmatpush2.bf16.msra.mxu0 0
      %1418 = vmatprep.subr.bf16.mxu0 0
      %1419 = vmatpush2.bf16.msra.mxu0 0
      %1420 = vmatprep.subr.bf16.mxu0 0
      %1421 = vmatpush2.bf16.msra.mxu0 0
      %1422 = vmatprep.subr.bf16.mxu0 0
      %1423 = vmatpush2.bf16.msra.mxu0 0
      %1424 = vmatprep.mubr.bf16.mxu0 0
      %1425 = vmatmul.mubr.bf16.gmra.mxu0 %v1390
      %v1426 = vpop.f32.mrf.mxu0
      %v1427 = vadd.f32 0.0, %v1426
      %v1428 = vpop.f32.mrf.mxu0
      %v1429 = vadd.f32 0.0, %v1428
      %v1430 = vpop.f32.mrf.mxu0
      %v1431 = vpop.f32.mrf.mxu0
      %1432 = vdwg.mxu0
      %1433 = vmatprep.subr.bf16.mxu0 0
      %1434 = vmatpush1.bf16.msra.mxu0 0
      %1435 = vmatprep.subr.bf16.mxu0 0
      %1436 = vmatpush1.bf16.msra.mxu0 0
      %1437 = vmatprep.subr.bf16.mxu0 0
      %1438 = vmatpush1.bf16.msra.mxu0 0
      %1439 = vmatprep.subr.bf16.mxu0 0
      %1440 = vmatpush1.bf16.msra.mxu0 0
      %1441 = vmatprep.subr.bf16.mxu0 0
      %1442 = vmatpush1.bf16.msra.mxu0 0
      %1443 = vmatprep.subr.bf16.mxu0 0
      %1444 = vmatpush1.bf16.msra.mxu0 %v1378
      %1445 = vmatprep.subr.bf16.mxu0 0
      %1446 = vmatpush1.bf16.msra.mxu0 %v1375
      %1447 = vmatprep.subr.bf16.mxu0 0
      %1448 = vmatpush1.bf16.msra.mxu0 %v1372
      %1449 = vmatprep.subr.bf16.mxu0 0
      %1450 = vmatpush2.bf16.msra.mxu0 0
      %1451 = vmatprep.subr.bf16.mxu0 0
      %1452 = vmatpush2.bf16.msra.mxu0 0
      %1453 = vmatprep.subr.bf16.mxu0 0
      %1454 = vmatpush2.bf16.msra.mxu0 0
      %1455 = vmatprep.subr.bf16.mxu0 0
      %1456 = vmatpush2.bf16.msra.mxu0 0
      %1457 = vmatprep.subr.bf16.mxu0 0
      %1458 = vmatpush2.bf16.msra.mxu0 0
      %1459 = vmatprep.subr.bf16.mxu0 0
      %1460 = vmatpush2.bf16.msra.mxu0 0
      %1461 = vmatprep.subr.bf16.mxu0 0
      %1462 = vmatpush2.bf16.msra.mxu0 0
      %1463 = vmatprep.subr.bf16.mxu0 0
      %1464 = vmatpush2.bf16.msra.mxu0 0
      %1465 = vmatprep.mubr.bf16.mxu0 0
      %1466 = vmatmul.mubr.bf16.gmra.mxu0 %v1390
      %v1467 = vpop.f32.mrf.mxu0
      %v1468 = vadd.f32 0.0, %v1467
      %v1469 = vpop.f32.mrf.mxu0
      %v1470 = vpop.f32.mrf.mxu0
      %v1471 = vpop.f32.mrf.mxu0
      %1472 = vdwg.mxu0
      %v1485 = vunpack.c.l.b16 %v1315
      %v1486 = vunpack.c.h.b16 %v1315
      %v1487 = vunpack.c.l.b16 %v1316
      %v1488 = vunpack.c.l.b16 %v1317
      %v1489 = vunpack.c.h.b16 %v1317
      %v1490 = vunpack.c.l.b16 %v1318
      %v1491 = vunpack.c.l.b16 %v1319
      %v1492 = vunpack.c.h.b16 %v1319
      %v1493 = vunpack.c.l.b16 %v1320
      %v1494 = vunpack.c.l.b16 %v1321
      %v1495 = vunpack.c.h.b16 %v1321
      %v1496 = vunpack.c.l.b16 %v1322
      %v1497 = vunpack.c.l.b16 %v1323
      %v1498 = vunpack.c.h.b16 %v1323
      %v1499 = vunpack.c.l.b16 %v1324
      %v1500 = vunpack.c.l.b16 %v1325
      %v1501 = vunpack.c.h.b16 %v1325
      %v1502 = vunpack.c.l.b16 %v1326
      %v1503 = vpack.c.b16 %v1488, %v1485
      %v1504 = vpack.c.b16 %v1489, %v1486
      %v1505 = vpack.c.b16 %v1490, %v1487
      %v1506 = vpack.c.b16 %v1494, %v1491
      %v1507 = vpack.c.b16 %v1495, %v1492
      %v1508 = vpack.c.b16 %v1496, %v1493
      %v1509 = vpack.c.b16 %v1500, %v1497
      %v1510 = vpack.c.b16 %v1501, %v1498
      %v1511 = vpack.c.b16 %v1502, %v1499
      %v1522 = vsel %vm1388, %v1314, 0
      %1524 = vmatprep.subr.bf16.mxu0 0
      %1525 = vmatpush1.bf16.msra.mxu0 0
      %1526 = vmatprep.subr.bf16.mxu0 0
      %1527 = vmatpush1.bf16.msra.mxu0 0
      %1528 = vmatprep.subr.bf16.mxu0 0
      %1529 = vmatpush1.bf16.msra.mxu0 0
      %1530 = vmatprep.subr.bf16.mxu0 0
      %1531 = vmatpush1.bf16.msra.mxu0 0
      %1532 = vmatprep.subr.bf16.mxu0 0
      %1533 = vmatpush1.bf16.msra.mxu0 0
      %1534 = vmatprep.subr.bf16.mxu0 %v1510
      %1535 = vmatpush1.bf16.msra.mxu0 %v1509
      %1536 = vmatprep.subr.bf16.mxu0 %v1507
      %1537 = vmatpush1.bf16.msra.mxu0 %v1506
      %1538 = vmatprep.subr.bf16.mxu0 %v1504
      %1539 = vmatpush1.bf16.msra.mxu0 %v1503
      %1540 = vmatprep.subr.bf16.mxu0 0
      %1541 = vmatpush2.bf16.msra.mxu0 0
      %1542 = vmatprep.subr.bf16.mxu0 0
      %1543 = vmatpush2.bf16.msra.mxu0 0
      %1544 = vmatprep.subr.bf16.mxu0 0
      %1545 = vmatpush2.bf16.msra.mxu0 0
      %1546 = vmatprep.subr.bf16.mxu0 0
      %1547 = vmatpush2.bf16.msra.mxu0 0
      %1548 = vmatprep.subr.bf16.mxu0 0
      %1549 = vmatpush2.bf16.msra.mxu0 0
      %1550 = vmatprep.subr.bf16.mxu0 0
      %1551 = vmatpush2.bf16.msra.mxu0 0
      %1552 = vmatprep.subr.bf16.mxu0 0
      %1553 = vmatpush2.bf16.msra.mxu0 0
      %1554 = vmatprep.subr.bf16.mxu0 0
      %1555 = vmatpush2.bf16.msra.mxu0 0
      %1556 = vmatprep.mubr.bf16.mxu0 0
      %1557 = vmatmul.mubr.bf16.gmra.mxu0 %v1522
      %v1558 = vpop.f32.mrf.mxu0
      %v1559 = vadd.f32 %v1427, %v1558
      %v1560 = vpop.f32.mrf.mxu0
      %v1561 = vadd.f32 %v1429, %v1560
      %v1562 = vpop.f32.mrf.mxu0
      %v1563 = vpop.f32.mrf.mxu0
      %1564 = vdwg.mxu0
      %1565 = vmatprep.subr.bf16.mxu0 0
      %1566 = vmatpush1.bf16.msra.mxu0 0
      %1567 = vmatprep.subr.bf16.mxu0 0
      %1568 = vmatpush1.bf16.msra.mxu0 0
      %1569 = vmatprep.subr.bf16.mxu0 0
      %1570 = vmatpush1.bf16.msra.mxu0 0
      %1571 = vmatprep.subr.bf16.mxu0 0
      %1572 = vmatpush1.bf16.msra.mxu0 0
      %1573 = vmatprep.subr.bf16.mxu0 0
      %1574 = vmatpush1.bf16.msra.mxu0 0
      %1575 = vmatprep.subr.bf16.mxu0 0
      %1576 = vmatpush1.bf16.msra.mxu0 %v1511
      %1577 = vmatprep.subr.bf16.mxu0 0
      %1578 = vmatpush1.bf16.msra.mxu0 %v1508
      %1579 = vmatprep.subr.bf16.mxu0 0
      %1580 = vmatpush1.bf16.msra.mxu0 %v1505
      %1581 = vmatprep.subr.bf16.mxu0 0
      %1582 = vmatpush2.bf16.msra.mxu0 0
      %1583 = vmatprep.subr.bf16.mxu0 0
      %1584 = vmatpush2.bf16.msra.mxu0 0
      %1585 = vmatprep.subr.bf16.mxu0 0
      %1586 = vmatpush2.bf16.msra.mxu0 0
      %1587 = vmatprep.subr.bf16.mxu0 0
      %1588 = vmatpush2.bf16.msra.mxu0 0
      %1589 = vmatprep.subr.bf16.mxu0 0
      %1590 = vmatpush2.bf16.msra.mxu0 0
      %1591 = vmatprep.subr.bf16.mxu0 0
      %1592 = vmatpush2.bf16.msra.mxu0 0
      %1593 = vmatprep.subr.bf16.mxu0 0
      %1594 = vmatpush2.bf16.msra.mxu0 0
      %1595 = vmatprep.subr.bf16.mxu0 0
      %1596 = vmatpush2.bf16.msra.mxu0 0
      %1597 = vmatprep.mubr.bf16.mxu0 0
      %1598 = vmatmul.mubr.bf16.gmra.mxu0 %v1522
      %v1599 = vpop.f32.mrf.mxu0
      %v1600 = vadd.f32 %v1468, %v1599
      %v1601 = vpop.f32.mrf.mxu0
      %v1602 = vpop.f32.mrf.mxu0
      %v1603 = vpop.f32.mrf.mxu0
      %1604 = vdwg.mxu0
      %s1605 = scalar_lea.vmem %s3, 4
      %v1606 = vld [vmem:[%s1605] sm:$0x3]
      %v1607 = vld [vmem:[#allocation4] sm:$0xff]
      %v1608 = vld [vmem:[#allocation4 + $0x8] sm:$0xf]
      %v1609 = vld [vmem:[#allocation4 + $0xc] sm:$0xff]
      %v1610 = vld [vmem:[#allocation4 + $0x14] sm:$0xf]
      %v1611 = vld [vmem:[#allocation4 + $0x18] sm:$0xff]
      %v1612 = vld [vmem:[#allocation4 + $0x20] sm:$0xf]
      %v1613 = vld [vmem:[#allocation4 + $0x24] sm:$0xff]
      %v1614 = vld [vmem:[#allocation4 + $0x2c] sm:$0xf]
      %v1615 = vld [vmem:[#allocation4 + $0x30] sm:$0xff]
      %v1616 = vld [vmem:[#allocation4 + $0x38] sm:$0xf]
      %v1617 = vld [vmem:[#allocation4 + $0x3c] sm:$0xff]
      %v1618 = vld [vmem:[#allocation4 + $0x44] sm:$0xf]
      %v1631 = vunpack.c.l.b16 %v1607
      %v1632 = vunpack.c.h.b16 %v1607
      %v1633 = vunpack.c.l.b16 %v1608
      %v1634 = vunpack.c.l.b16 %v1609
      %v1635 = vunpack.c.h.b16 %v1609
      %v1636 = vunpack.c.l.b16 %v1610
      %v1637 = vunpack.c.l.b16 %v1611
      %v1638 = vunpack.c.h.b16 %v1611
      %v1639 = vunpack.c.l.b16 %v1612
      %v1640 = vunpack.c.l.b16 %v1613
      %v1641 = vunpack.c.h.b16 %v1613
      %v1642 = vunpack.c.l.b16 %v1614
      %v1643 = vunpack.c.l.b16 %v1615
      %v1644 = vunpack.c.h.b16 %v1615
      %v1645 = vunpack.c.l.b16 %v1616
      %v1646 = vunpack.c.l.b16 %v1617
      %v1647 = vunpack.c.h.b16 %v1617
      %v1648 = vunpack.c.l.b16 %v1618
      %v1649 = vpack.c.b16 %v1634, %v1631
      %v1650 = vpack.c.b16 %v1635, %v1632
      %v1651 = vpack.c.b16 %v1636, %v1633
      %v1652 = vpack.c.b16 %v1640, %v1637
      %v1653 = vpack.c.b16 %v1641, %v1638
      %v1654 = vpack.c.b16 %v1642, %v1639
      %v1655 = vpack.c.b16 %v1646, %v1643
      %v1656 = vpack.c.b16 %v1647, %v1644
      %v1657 = vpack.c.b16 %v1648, %v1645
      %v1668 = vsel %vm1388, %v1606, 0
      %1670 = vmatprep.subr.bf16.mxu0 0
      %1671 = vmatpush1.bf16.msra.mxu0 0
      %1672 = vmatprep.subr.bf16.mxu0 0
      %1673 = vmatpush1.bf16.msra.mxu0 0
      %1674 = vmatprep.subr.bf16.mxu0 0
      %1675 = vmatpush1.bf16.msra.mxu0 0
      %1676 = vmatprep.subr.bf16.mxu0 0
      %1677 = vmatpush1.bf16.msra.mxu0 0
      %1678 = vmatprep.subr.bf16.mxu0 0
      %1679 = vmatpush1.bf16.msra.mxu0 0
      %1680 = vmatprep.subr.bf16.mxu0 %v1656
      %1681 = vmatpush1.bf16.msra.mxu0 %v1655
      %1682 = vmatprep.subr.bf16.mxu0 %v1653
      %1683 = vmatpush1.bf16.msra.mxu0 %v1652
      %1684 = vmatprep.subr.bf16.mxu0 %v1650
      %1685 = vmatpush1.bf16.msra.mxu0 %v1649
      %1686 = vmatprep.subr.bf16.mxu0 0
      %1687 = vmatpush2.bf16.msra.mxu0 0
      %1688 = vmatprep.subr.bf16.mxu0 0
      %1689 = vmatpush2.bf16.msra.mxu0 0
      %1690 = vmatprep.subr.bf16.mxu0 0
      %1691 = vmatpush2.bf16.msra.mxu0 0
      %1692 = vmatprep.subr.bf16.mxu0 0
      %1693 = vmatpush2.bf16.msra.mxu0 0
      %1694 = vmatprep.subr.bf16.mxu0 0
      %1695 = vmatpush2.bf16.msra.mxu0 0
      %1696 = vmatprep.subr.bf16.mxu0 0
      %1697 = vmatpush2.bf16.msra.mxu0 0
      %1698 = vmatprep.subr.bf16.mxu0 0
      %1699 = vmatpush2.bf16.msra.mxu0 0
      %1700 = vmatprep.subr.bf16.mxu0 0
      %1701 = vmatpush2.bf16.msra.mxu0 0
      %1702 = vmatprep.mubr.bf16.mxu0 0
      %1703 = vmatmul.mubr.bf16.gmra.mxu0 %v1668
      %v1704 = vpop.f32.mrf.mxu0
      %v1705 = vadd.f32 0.0, %v1704
      %v1706 = vpop.f32.mrf.mxu0
      %v1707 = vadd.f32 0.0, %v1706
      %v1708 = vpop.f32.mrf.mxu0
      %v1709 = vpop.f32.mrf.mxu0
      %1710 = vdwg.mxu0
      %1711 = vmatprep.subr.bf16.mxu0 0
      %1712 = vmatpush1.bf16.msra.mxu0 0
      %1713 = vmatprep.subr.bf16.mxu0 0
      %1714 = vmatpush1.bf16.msra.mxu0 0
      %1715 = vmatprep.subr.bf16.mxu0 0
      %1716 = vmatpush1.bf16.msra.mxu0 0
      %1717 = vmatprep.subr.bf16.mxu0 0
      %1718 = vmatpush1.bf16.msra.mxu0 0
      %1719 = vmatprep.subr.bf16.mxu0 0
      %1720 = vmatpush1.bf16.msra.mxu0 0
      %1721 = vmatprep.subr.bf16.mxu0 0
      %1722 = vmatpush1.bf16.msra.mxu0 %v1657
      %1723 = vmatprep.subr.bf16.mxu0 0
      %1724 = vmatpush1.bf16.msra.mxu0 %v1654
      %1725 = vmatprep.subr.bf16.mxu0 0
      %1726 = vmatpush1.bf16.msra.mxu0 %v1651
      %1727 = vmatprep.subr.bf16.mxu0 0
      %1728 = vmatpush2.bf16.msra.mxu0 0
      %1729 = vmatprep.subr.bf16.mxu0 0
      %1730 = vmatpush2.bf16.msra.mxu0 0
      %1731 = vmatprep.subr.bf16.mxu0 0
      %1732 = vmatpush2.bf16.msra.mxu0 0
      %1733 = vmatprep.subr.bf16.mxu0 0
      %1734 = vmatpush2.bf16.msra.mxu0 0
      %1735 = vmatprep.subr.bf16.mxu0 0
      %1736 = vmatpush2.bf16.msra.mxu0 0
      %1737 = vmatprep.subr.bf16.mxu0 0
      %1738 = vmatpush2.bf16.msra.mxu0 0
      %1739 = vmatprep.subr.bf16.mxu0 0
      %1740 = vmatpush2.bf16.msra.mxu0 0
      %1741 = vmatprep.subr.bf16.mxu0 0
      %1742 = vmatpush2.bf16.msra.mxu0 0
      %1743 = vmatprep.mubr.bf16.mxu0 0
      %1744 = vmatmul.mubr.bf16.gmra.mxu0 %v1668
      %v1745 = vpop.f32.mrf.mxu0
      %v1746 = vadd.f32 0.0, %v1745
      %v1747 = vpop.f32.mrf.mxu0
      %v1748 = vpop.f32.mrf.mxu0
      %v1749 = vpop.f32.mrf.mxu0
      %1750 = vdwg.mxu0
      %v1751 = vadd.f32 %v1559, %v1705
      %v1752 = vadd.f32 %v1561, %v1707
      %v1753 = vadd.f32 %v1600, %v1746
      %v1754 = vld [vmem:[%s8] sm:$0xf]
      %1756 = vset.pattern.permute.xlu0 0
      %1757 = vperm.xlu0 %1756, %v1754
      %v1758 = vpop.permute.xlu0 %1757
      %v1760 = vadd.f32 %v1751, %v1758
      %v1761 = vadd.f32 %v1752, %v1758
      %v1762 = vadd.f32 %v1753, %v1758
      %v1763 = vmul.f32 %v1760, 0.2
      %v1764 = vmul.f32 %v1761, 0.2
      %v1765 = vmul.f32 %v1762, 0.2
      %v1766 = vmax.f32 %v1760, %v1763
      %v1767 = vmax.f32 %v1761, %v1764
      %v1768 = vmax.f32 %v1762, %v1765
      %v1769 = vmul.f32 %v1766, %v1149
      %v1770 = vmul.f32 %v1767, %v1153
      %v1771 = vmul.f32 %v1768, %v1157
      %v1772 = vpack.c.bf16 %v1769, %v1769
      %v1773 = vpack.c.bf16 %v1770, %v1770
      %v1774 = vpack.c.bf16 %v1771, %v1771
      %1776 = vrot.lane.b32.xlu0 %v1774, 112
      %v1777 = vpop.permute.xlu0 %1776
      %1780 = vrot.lane.b32.xlu0 %v1772, 16
      %v1781 = vpop.permute.xlu0 %1780
      %1782 = vrot.lane.b32.xlu0 %v1773, 16
      %v1783 = vpop.permute.xlu0 %1782
      %1784 = vrot.lane.b32.xlu0 %v1774, 16
      %v1785 = vpop.permute.xlu0 %1784
      %v1786 = vsel %vm433, %v1781, %v1783
      %v1787 = vsel %vm433, %v1783, %v1785
      %v1790 = vsel %vm436, %v1777, %v1781
      %1791 = vrot.lane.b32.xlu0 %v1772, 112
      %v1792 = vpop.permute.xlu0 %1791
      %1793 = vrot.lane.b32.xlu0 %v1773, 112
      %v1794 = vpop.permute.xlu0 %1793
      %v1795 = vsel %vm444, %v1792, %v1794
      %v1796 = vsel %vm444, %v1794, %v1777
      %v1797 = vrot.slane %v1772, 6
      %v1798 = vrot.slane %v1773, 6
      %v1799 = vrot.slane %v1774, 6
      %v1801 = vrot.slane %v1795, 4
      %v1802 = vrot.slane %v1796, 4
      %v1803 = vrot.slane %v1790, 4
      %v1805 = vsel %vm1193, %v1790, %v1797
      %v1808 = vsel %vm1193, %v1786, %v1798
      %v1811 = vsel %vm1193, %v1787, %v1799
      %v1813 = vsel %vm450, %v1805, %v1801
      %v1815 = vsel %vm450, %v1808, %v1802
      %v1817 = vsel %vm450, %v1811, %v1803
      %v1818 = vsel %vm1208, %v1813, 0
      %v1819 = vsel %vm1208, %v1815, 0
      %v1820 = vsel %vm1208, %v1817, 0
      %v1824 = vunpack.c.l.b16 %v1818
      %v1825 = vunpack.c.l.b16 %v1819
      %v1826 = vunpack.c.l.b16 %v1820
      %v1827 = vunpack.c.h.b16 %v1818
      %v1828 = vunpack.c.h.b16 %v1819
      %v1829 = vunpack.c.h.b16 %v1820
      %v1830 = vpack.c.b16 %v1825, %v1824
      %v1831 = vpack.c.b16 %v1826, %v1826
      %v1832 = vpack.c.b16 %v1828, %v1827
      %v1833 = vpack.c.b16 %v1829, %v1829
      %1838 = vst [vmem:[#allocation3 + $0x48] sm:$0xff] %v1830
      %1839 = vst.msk [vmem:[#allocation3 + $0x50] sm:$0xf] %vm500, %v1831
      %1840 = vst [vmem:[#allocation3 + $0x54] sm:$0xff] %v1832
      %1841 = vst.msk [vmem:[#allocation3 + $0x5c] sm:$0xf] %vm500, %v1833
      %1842 = vrot.lane.b32.xlu0 %v1820, 97
      %v1843 = vpop.permute.xlu0 %1842
      %1844 = vrot.lane.b32.xlu0 %v1818, 1
      %v1845 = vpop.permute.xlu0 %1844
      %1846 = vrot.lane.b32.xlu0 %v1819, 1
      %v1847 = vpop.permute.xlu0 %1846
      %1848 = vrot.lane.b32.xlu0 %v1820, 1
      %v1849 = vpop.permute.xlu0 %1848
      %v1850 = vsel %vm524, %v1845, %v1847
      %v1851 = vsel %vm524, %v1847, %v1849
      %v1856 = vsel %vm533, %v1843, %v1845
      %v1858 = vmul.bf16 %v566, %v1856
      %v1859 = vmul.bf16 %v574, %v1850
      %v1860 = vmul.bf16 %v582, %v1851
      %v1864 = vunpack.c.l.b16 %v1858
      %v1865 = vunpack.c.l.b16 %v1859
      %v1866 = vunpack.c.l.b16 %v1860
      %v1867 = vunpack.c.h.b16 %v1858
      %v1868 = vunpack.c.h.b16 %v1859
      %v1869 = vunpack.c.h.b16 %v1860
      %v1870 = vpack.c.b16 %v1865, %v1864
      %v1871 = vpack.c.b16 %v1866, %v1866
      %v1872 = vpack.c.b16 %v1868, %v1867
      %v1873 = vpack.c.b16 %v1869, %v1869
      %1878 = vst [vmem:[#allocation2 + $0x48] sm:$0xff] %v1870
      %1879 = vst.msk [vmem:[#allocation2 + $0x50] sm:$0xf] %vm500, %v1871
      %1880 = vst [vmem:[#allocation2 + $0x54] sm:$0xff] %v1872
      %1881 = vst.msk [vmem:[#allocation2 + $0x5c] sm:$0xf] %vm500, %v1873
      %1882 = vrot.lane.b32.xlu0 %v1818, 127
      %v1883 = vpop.permute.xlu0 %1882
      %1884 = vrot.lane.b32.xlu0 %v1819, 127
      %v1885 = vpop.permute.xlu0 %1884
      %1886 = vrot.lane.b32.xlu0 %v1820, 127
      %v1887 = vpop.permute.xlu0 %1886
      %v1888 = vsel %vm643, %v1883, %v1885
      %v1889 = vsel %vm643, %v1885, %v1887
      %1892 = vrot.lane.b32.xlu0 %v1818, 31
      %v1893 = vpop.permute.xlu0 %1892
      %v1896 = vsel %vm656, %v1887, %v1893
      %v1898 = vmul.bf16 %v670, %v1888
      %v1899 = vmul.bf16 %v676, %v1889
      %v1900 = vmul.bf16 %v682, %v1896
      %v1904 = vunpack.c.l.b16 %v1898
      %v1905 = vunpack.c.l.b16 %v1899
      %v1906 = vunpack.c.l.b16 %v1900
      %v1907 = vunpack.c.h.b16 %v1898
      %v1908 = vunpack.c.h.b16 %v1899
      %v1909 = vunpack.c.h.b16 %v1900
      %v1910 = vpack.c.b16 %v1905, %v1904
      %v1911 = vpack.c.b16 %v1906, %v1906
      %v1912 = vpack.c.b16 %v1908, %v1907
      %v1913 = vpack.c.b16 %v1909, %v1909
      %1918 = vst [vmem:[#allocation4 + $0x48] sm:$0xff] %v1910
      %1919 = vst.msk [vmem:[#allocation4 + $0x50] sm:$0xf] %vm500, %v1911
      %1920 = vst [vmem:[#allocation4 + $0x54] sm:$0xff] %v1912
      %1921 = vst.msk [vmem:[#allocation4 + $0x5c] sm:$0xf] %vm500, %v1913
      %s1922 = scalar_lea.vmem %s4, 2
      %v1923 = vld [vmem:[%s1922] sm:$0x3]
      %v1924 = vld [vmem:[#allocation3] sm:$0xff]
      %v1925 = vld [vmem:[#allocation3 + $0x8] sm:$0xf]
      %v1926 = vld [vmem:[#allocation3 + $0xc] sm:$0xff]
      %v1927 = vld [vmem:[#allocation3 + $0x14] sm:$0xf]
      %v1928 = vld [vmem:[#allocation3 + $0x18] sm:$0xff]
      %v1929 = vld [vmem:[#allocation3 + $0x20] sm:$0xf]
      %v1930 = vld [vmem:[#allocation3 + $0x24] sm:$0xff]
      %v1931 = vld [vmem:[#allocation3 + $0x2c] sm:$0xf]
      %v1932 = vld [vmem:[#allocation3 + $0x30] sm:$0xff]
      %v1933 = vld [vmem:[#allocation3 + $0x38] sm:$0xf]
      %v1934 = vld [vmem:[#allocation3 + $0x3c] sm:$0xff]
      %v1935 = vld [vmem:[#allocation3 + $0x44] sm:$0xf]
      %v1936 = vld [vmem:[#allocation3 + $0x48] sm:$0xff]
      %v1937 = vld [vmem:[#allocation3 + $0x50] sm:$0xf]
      %v1938 = vld [vmem:[#allocation3 + $0x54] sm:$0xff]
      %v1939 = vld [vmem:[#allocation3 + $0x5c] sm:$0xf]
      %v1940 = vld [vmem:[%s4] sm:$0x3]
      %v1941 = vld [vmem:[#allocation2] sm:$0xff]
      %v1942 = vld [vmem:[#allocation2 + $0x8] sm:$0xf]
      %v1943 = vld [vmem:[#allocation2 + $0xc] sm:$0xff]
      %v1944 = vld [vmem:[#allocation2 + $0x14] sm:$0xf]
      %v1945 = vld [vmem:[#allocation2 + $0x18] sm:$0xff]
      %v1946 = vld [vmem:[#allocation2 + $0x20] sm:$0xf]
      %v1947 = vld [vmem:[#allocation2 + $0x24] sm:$0xff]
      %v1948 = vld [vmem:[#allocation2 + $0x2c] sm:$0xf]
      %v1949 = vld [vmem:[#allocation2 + $0x30] sm:$0xff]
      %v1950 = vld [vmem:[#allocation2 + $0x38] sm:$0xf]
      %v1951 = vld [vmem:[#allocation2 + $0x3c] sm:$0xff]
      %v1952 = vld [vmem:[#allocation2 + $0x44] sm:$0xf]
      %v1953 = vld [vmem:[#allocation2 + $0x48] sm:$0xff]
      %v1954 = vld [vmem:[#allocation2 + $0x50] sm:$0xf]
      %v1955 = vld [vmem:[#allocation2 + $0x54] sm:$0xff]
      %v1956 = vld [vmem:[#allocation2 + $0x5c] sm:$0xf]
      %v1973 = vunpack.c.l.b16 %v1941
      %v1974 = vunpack.c.h.b16 %v1941
      %v1975 = vunpack.c.l.b16 %v1942
      %v1976 = vunpack.c.l.b16 %v1943
      %v1977 = vunpack.c.h.b16 %v1943
      %v1978 = vunpack.c.l.b16 %v1944
      %v1979 = vunpack.c.l.b16 %v1945
      %v1980 = vunpack.c.h.b16 %v1945
      %v1981 = vunpack.c.l.b16 %v1946
      %v1982 = vunpack.c.l.b16 %v1947
      %v1983 = vunpack.c.h.b16 %v1947
      %v1984 = vunpack.c.l.b16 %v1948
      %v1985 = vunpack.c.l.b16 %v1949
      %v1986 = vunpack.c.h.b16 %v1949
      %v1987 = vunpack.c.l.b16 %v1950
      %v1988 = vunpack.c.l.b16 %v1951
      %v1989 = vunpack.c.h.b16 %v1951
      %v1990 = vunpack.c.l.b16 %v1952
      %v1991 = vunpack.c.l.b16 %v1953
      %v1992 = vunpack.c.h.b16 %v1953
      %v1993 = vunpack.c.l.b16 %v1954
      %v1994 = vunpack.c.l.b16 %v1955
      %v1995 = vunpack.c.h.b16 %v1955
      %v1996 = vunpack.c.l.b16 %v1956
      %v1997 = vpack.c.b16 %v1976, %v1973
      %v1998 = vpack.c.b16 %v1977, %v1974
      %v1999 = vpack.c.b16 %v1978, %v1975
      %v2000 = vpack.c.b16 %v1982, %v1979
      %v2001 = vpack.c.b16 %v1983, %v1980
      %v2002 = vpack.c.b16 %v1984, %v1981
      %v2003 = vpack.c.b16 %v1988, %v1985
      %v2004 = vpack.c.b16 %v1989, %v1986
      %v2005 = vpack.c.b16 %v1990, %v1987
      %v2006 = vpack.c.b16 %v1994, %v1991
      %v2007 = vpack.c.b16 %v1995, %v1992
      %v2008 = vpack.c.b16 %v1996, %v1993
      %vm2021 = vcmask 523264
      %v2023 = vsel %vm2021, %v1940, 0
      %2025 = vmatprep.subr.bf16.mxu0 0
      %2026 = vmatpush1.bf16.msra.mxu0 0
      %2027 = vmatprep.subr.bf16.mxu0 0
      %2028 = vmatpush1.bf16.msra.mxu0 0
      %2029 = vmatprep.subr.bf16.mxu0 0
      %2030 = vmatpush1.bf16.msra.mxu0 0
      %2031 = vmatprep.subr.bf16.mxu0 0
      %2032 = vmatpush1.bf16.msra.mxu0 0
      %2033 = vmatprep.subr.bf16.mxu0 %v2007
      %2034 = vmatpush1.bf16.msra.mxu0 %v2006
      %2035 = vmatprep.subr.bf16.mxu0 %v2004
      %2036 = vmatpush1.bf16.msra.mxu0 %v2003
      %2037 = vmatprep.subr.bf16.mxu0 %v2001
      %2038 = vmatpush1.bf16.msra.mxu0 %v2000
      %2039 = vmatprep.subr.bf16.mxu0 %v1998
      %2040 = vmatpush1.bf16.msra.mxu0 %v1997
      %2041 = vmatprep.subr.bf16.mxu0 0
      %2042 = vmatpush2.bf16.msra.mxu0 0
      %2043 = vmatprep.subr.bf16.mxu0 0
      %2044 = vmatpush2.bf16.msra.mxu0 0
      %2045 = vmatprep.subr.bf16.mxu0 0
      %2046 = vmatpush2.bf16.msra.mxu0 0
      %2047 = vmatprep.subr.bf16.mxu0 0
      %2048 = vmatpush2.bf16.msra.mxu0 0
      %2049 = vmatprep.subr.bf16.mxu0 0
      %2050 = vmatpush2.bf16.msra.mxu0 0
      %2051 = vmatprep.subr.bf16.mxu0 0
      %2052 = vmatpush2.bf16.msra.mxu0 0
      %2053 = vmatprep.subr.bf16.mxu0 0
      %2054 = vmatpush2.bf16.msra.mxu0 0
      %2055 = vmatprep.subr.bf16.mxu0 0
      %2056 = vmatpush2.bf16.msra.mxu0 0
      %2057 = vmatprep.mubr.bf16.mxu0 0
      %2058 = vmatmul.mubr.bf16.gmra.mxu0 %v2023
      %v2059 = vpop.f32.mrf.mxu0
      %v2060 = vadd.f32 0.0, %v2059
      %v2061 = vpop.f32.mrf.mxu0
      %v2062 = vadd.f32 0.0, %v2061
      %v2063 = vpop.f32.mrf.mxu0
      %v2064 = vpop.f32.mrf.mxu0
      %2065 = vdwg.mxu0
      %2066 = vmatprep.subr.bf16.mxu0 0
      %2067 = vmatpush1.bf16.msra.mxu0 0
      %2068 = vmatprep.subr.bf16.mxu0 0
      %2069 = vmatpush1.bf16.msra.mxu0 0
      %2070 = vmatprep.subr.bf16.mxu0 0
      %2071 = vmatpush1.bf16.msra.mxu0 0
      %2072 = vmatprep.subr.bf16.mxu0 0
      %2073 = vmatpush1.bf16.msra.mxu0 0
      %2074 = vmatprep.subr.bf16.mxu0 0
      %2075 = vmatpush1.bf16.msra.mxu0 %v2008
      %2076 = vmatprep.subr.bf16.mxu0 0
      %2077 = vmatpush1.bf16.msra.mxu0 %v2005
      %2078 = vmatprep.subr.bf16.mxu0 0
      %2079 = vmatpush1.bf16.msra.mxu0 %v2002
      %2080 = vmatprep.subr.bf16.mxu0 0
      %2081 = vmatpush1.bf16.msra.mxu0 %v1999
      %2082 = vmatprep.subr.bf16.mxu0 0
      %2083 = vmatpush2.bf16.msra.mxu0 0
      %2084 = vmatprep.subr.bf16.mxu0 0
      %2085 = vmatpush2.bf16.msra.mxu0 0
      %2086 = vmatprep.subr.bf16.mxu0 0
      %2087 = vmatpush2.bf16.msra.mxu0 0
      %2088 = vmatprep.subr.bf16.mxu0 0
      %2089 = vmatpush2.bf16.msra.mxu0 0
      %2090 = vmatprep.subr.bf16.mxu0 0
      %2091 = vmatpush2.bf16.msra.mxu0 0
      %2092 = vmatprep.subr.bf16.mxu0 0
      %2093 = vmatpush2.bf16.msra.mxu0 0
      %2094 = vmatprep.subr.bf16.mxu0 0
      %2095 = vmatpush2.bf16.msra.mxu0 0
      %2096 = vmatprep.subr.bf16.mxu0 0
      %2097 = vmatpush2.bf16.msra.mxu0 0
      %2098 = vmatprep.mubr.bf16.mxu0 0
      %2099 = vmatmul.mubr.bf16.gmra.mxu0 %v2023
      %v2100 = vpop.f32.mrf.mxu0
      %v2101 = vadd.f32 0.0, %v2100
      %v2102 = vpop.f32.mrf.mxu0
      %v2103 = vpop.f32.mrf.mxu0
      %v2104 = vpop.f32.mrf.mxu0
      %2105 = vdwg.mxu0
      %v2122 = vunpack.c.l.b16 %v1924
      %v2123 = vunpack.c.h.b16 %v1924
      %v2124 = vunpack.c.l.b16 %v1925
      %v2125 = vunpack.c.l.b16 %v1926
      %v2126 = vunpack.c.h.b16 %v1926
      %v2127 = vunpack.c.l.b16 %v1927
      %v2128 = vunpack.c.l.b16 %v1928
      %v2129 = vunpack.c.h.b16 %v1928
      %v2130 = vunpack.c.l.b16 %v1929
      %v2131 = vunpack.c.l.b16 %v1930
      %v2132 = vunpack.c.h.b16 %v1930
      %v2133 = vunpack.c.l.b16 %v1931
      %v2134 = vunpack.c.l.b16 %v1932
      %v2135 = vunpack.c.h.b16 %v1932
      %v2136 = vunpack.c.l.b16 %v1933
      %v2137 = vunpack.c.l.b16 %v1934
      %v2138 = vunpack.c.h.b16 %v1934
      %v2139 = vunpack.c.l.b16 %v1935
      %v2140 = vunpack.c.l.b16 %v1936
      %v2141 = vunpack.c.h.b16 %v1936
      %v2142 = vunpack.c.l.b16 %v1937
      %v2143 = vunpack.c.l.b16 %v1938
      %v2144 = vunpack.c.h.b16 %v1938
      %v2145 = vunpack.c.l.b16 %v1939
      %v2146 = vpack.c.b16 %v2125, %v2122
      %v2147 = vpack.c.b16 %v2126, %v2123
      %v2148 = vpack.c.b16 %v2127, %v2124
      %v2149 = vpack.c.b16 %v2131, %v2128
      %v2150 = vpack.c.b16 %v2132, %v2129
      %v2151 = vpack.c.b16 %v2133, %v2130
      %v2152 = vpack.c.b16 %v2137, %v2134
      %v2153 = vpack.c.b16 %v2138, %v2135
      %v2154 = vpack.c.b16 %v2139, %v2136
      %v2155 = vpack.c.b16 %v2143, %v2140
      %v2156 = vpack.c.b16 %v2144, %v2141
      %v2157 = vpack.c.b16 %v2145, %v2142
      %v2171 = vsel %vm2021, %v1923, 0
      %2173 = vmatprep.subr.bf16.mxu0 0
      %2174 = vmatpush1.bf16.msra.mxu0 0
      %2175 = vmatprep.subr.bf16.mxu0 0
      %2176 = vmatpush1.bf16.msra.mxu0 0
      %2177 = vmatprep.subr.bf16.mxu0 0
      %2178 = vmatpush1.bf16.msra.mxu0 0
      %2179 = vmatprep.subr.bf16.mxu0 0
      %2180 = vmatpush1.bf16.msra.mxu0 0
      %2181 = vmatprep.subr.bf16.mxu0 %v2156
      %2182 = vmatpush1.bf16.msra.mxu0 %v2155
      %2183 = vmatprep.subr.bf16.mxu0 %v2153
      %2184 = vmatpush1.bf16.msra.mxu0 %v2152
      %2185 = vmatprep.subr.bf16.mxu0 %v2150
      %2186 = vmatpush1.bf16.msra.mxu0 %v2149
      %2187 = vmatprep.subr.bf16.mxu0 %v2147
      %2188 = vmatpush1.bf16.msra.mxu0 %v2146
      %2189 = vmatprep.subr.bf16.mxu0 0
      %2190 = vmatpush2.bf16.msra.mxu0 0
      %2191 = vmatprep.subr.bf16.mxu0 0
      %2192 = vmatpush2.bf16.msra.mxu0 0
      %2193 = vmatprep.subr.bf16.mxu0 0
      %2194 = vmatpush2.bf16.msra.mxu0 0
      %2195 = vmatprep.subr.bf16.mxu0 0
      %2196 = vmatpush2.bf16.msra.mxu0 0
      %2197 = vmatprep.subr.bf16.mxu0 0
      %2198 = vmatpush2.bf16.msra.mxu0 0
      %2199 = vmatprep.subr.bf16.mxu0 0
      %2200 = vmatpush2.bf16.msra.mxu0 0
      %2201 = vmatprep.subr.bf16.mxu0 0
      %2202 = vmatpush2.bf16.msra.mxu0 0
      %2203 = vmatprep.subr.bf16.mxu0 0
      %2204 = vmatpush2.bf16.msra.mxu0 0
      %2205 = vmatprep.mubr.bf16.mxu0 0
      %2206 = vmatmul.mubr.bf16.gmra.mxu0 %v2171
      %v2207 = vpop.f32.mrf.mxu0
      %v2208 = vadd.f32 %v2060, %v2207
      %v2209 = vpop.f32.mrf.mxu0
      %v2210 = vadd.f32 %v2062, %v2209
      %v2211 = vpop.f32.mrf.mxu0
      %v2212 = vpop.f32.mrf.mxu0
      %2213 = vdwg.mxu0
      %2214 = vmatprep.subr.bf16.mxu0 0
      %2215 = vmatpush1.bf16.msra.mxu0 0
      %2216 = vmatprep.subr.bf16.mxu0 0
      %2217 = vmatpush1.bf16.msra.mxu0 0
      %2218 = vmatprep.subr.bf16.mxu0 0
      %2219 = vmatpush1.bf16.msra.mxu0 0
      %2220 = vmatprep.subr.bf16.mxu0 0
      %2221 = vmatpush1.bf16.msra.mxu0 0
      %2222 = vmatprep.subr.bf16.mxu0 0
      %2223 = vmatpush1.bf16.msra.mxu0 %v2157
      %2224 = vmatprep.subr.bf16.mxu0 0
      %2225 = vmatpush1.bf16.msra.mxu0 %v2154
      %2226 = vmatprep.subr.bf16.mxu0 0
      %2227 = vmatpush1.bf16.msra.mxu0 %v2151
      %2228 = vmatprep.subr.bf16.mxu0 0
      %2229 = vmatpush1.bf16.msra.mxu0 %v2148
      %2230 = vmatprep.subr.bf16.mxu0 0
      %2231 = vmatpush2.bf16.msra.mxu0 0
      %2232 = vmatprep.subr.bf16.mxu0 0
      %2233 = vmatpush2.bf16.msra.mxu0 0
      %2234 = vmatprep.subr.bf16.mxu0 0
      %2235 = vmatpush2.bf16.msra.mxu0 0
      %2236 = vmatprep.subr.bf16.mxu0 0
      %2237 = vmatpush2.bf16.msra.mxu0 0
      %2238 = vmatprep.subr.bf16.mxu0 0
      %2239 = vmatpush2.bf16.msra.mxu0 0
      %2240 = vmatprep.subr.bf16.mxu0 0
      %2241 = vmatpush2.bf16.msra.mxu0 0
      %2242 = vmatprep.subr.bf16.mxu0 0
      %2243 = vmatpush2.bf16.msra.mxu0 0
      %2244 = vmatprep.subr.bf16.mxu0 0
      %2245 = vmatpush2.bf16.msra.mxu0 0
      %2246 = vmatprep.mubr.bf16.mxu0 0
      %2247 = vmatmul.mubr.bf16.gmra.mxu0 %v2171
      %v2248 = vpop.f32.mrf.mxu0
      %v2249 = vadd.f32 %v2101, %v2248
      %v2250 = vpop.f32.mrf.mxu0
      %v2251 = vpop.f32.mrf.mxu0
      %v2252 = vpop.f32.mrf.mxu0
      %2253 = vdwg.mxu0
      %s2254 = scalar_lea.vmem %s4, 4
      %v2255 = vld [vmem:[%s2254] sm:$0x3]
      %v2256 = vld [vmem:[#allocation4] sm:$0xff]
      %v2257 = vld [vmem:[#allocation4 + $0x8] sm:$0xf]
      %v2258 = vld [vmem:[#allocation4 + $0xc] sm:$0xff]
      %v2259 = vld [vmem:[#allocation4 + $0x14] sm:$0xf]
      %v2260 = vld [vmem:[#allocation4 + $0x18] sm:$0xff]
      %v2261 = vld [vmem:[#allocation4 + $0x20] sm:$0xf]
      %v2262 = vld [vmem:[#allocation4 + $0x24] sm:$0xff]
      %v2263 = vld [vmem:[#allocation4 + $0x2c] sm:$0xf]
      %v2264 = vld [vmem:[#allocation4 + $0x30] sm:$0xff]
      %v2265 = vld [vmem:[#allocation4 + $0x38] sm:$0xf]
      %v2266 = vld [vmem:[#allocation4 + $0x3c] sm:$0xff]
      %v2267 = vld [vmem:[#allocation4 + $0x44] sm:$0xf]
      %v2268 = vld [vmem:[#allocation4 + $0x48] sm:$0xff]
      %v2269 = vld [vmem:[#allocation4 + $0x50] sm:$0xf]
      %v2270 = vld [vmem:[#allocation4 + $0x54] sm:$0xff]
      %v2271 = vld [vmem:[#allocation4 + $0x5c] sm:$0xf]
      %v2288 = vunpack.c.l.b16 %v2256
      %v2289 = vunpack.c.h.b16 %v2256
      %v2290 = vunpack.c.l.b16 %v2257
      %v2291 = vunpack.c.l.b16 %v2258
      %v2292 = vunpack.c.h.b16 %v2258
      %v2293 = vunpack.c.l.b16 %v2259
      %v2294 = vunpack.c.l.b16 %v2260
      %v2295 = vunpack.c.h.b16 %v2260
      %v2296 = vunpack.c.l.b16 %v2261
      %v2297 = vunpack.c.l.b16 %v2262
      %v2298 = vunpack.c.h.b16 %v2262
      %v2299 = vunpack.c.l.b16 %v2263
      %v2300 = vunpack.c.l.b16 %v2264
      %v2301 = vunpack.c.h.b16 %v2264
      %v2302 = vunpack.c.l.b16 %v2265
      %v2303 = vunpack.c.l.b16 %v2266
      %v2304 = vunpack.c.h.b16 %v2266
      %v2305 = vunpack.c.l.b16 %v2267
      %v2306 = vunpack.c.l.b16 %v2268
      %v2307 = vunpack.c.h.b16 %v2268
      %v2308 = vunpack.c.l.b16 %v2269
      %v2309 = vunpack.c.l.b16 %v2270
      %v2310 = vunpack.c.h.b16 %v2270
      %v2311 = vunpack.c.l.b16 %v2271
      %v2312 = vpack.c.b16 %v2291, %v2288
      %v2313 = vpack.c.b16 %v2292, %v2289
      %v2314 = vpack.c.b16 %v2293, %v2290
      %v2315 = vpack.c.b16 %v2297, %v2294
      %v2316 = vpack.c.b16 %v2298, %v2295
      %v2317 = vpack.c.b16 %v2299, %v2296
      %v2318 = vpack.c.b16 %v2303, %v2300
      %v2319 = vpack.c.b16 %v2304, %v2301
      %v2320 = vpack.c.b16 %v2305, %v2302
      %v2321 = vpack.c.b16 %v2309, %v2306
      %v2322 = vpack.c.b16 %v2310, %v2307
      %v2323 = vpack.c.b16 %v2311, %v2308
      %v2337 = vsel %vm2021, %v2255, 0
      %2339 = vmatprep.subr.bf16.mxu0 0
      %2340 = vmatpush1.bf16.msra.mxu0 0
      %2341 = vmatprep.subr.bf16.mxu0 0
      %2342 = vmatpush1.bf16.msra.mxu0 0
      %2343 = vmatprep.subr.bf16.mxu0 0
      %2344 = vmatpush1.bf16.msra.mxu0 0
      %2345 = vmatprep.subr.bf16.mxu0 0
      %2346 = vmatpush1.bf16.msra.mxu0 0
      %2347 = vmatprep.subr.bf16.mxu0 %v2322
      %2348 = vmatpush1.bf16.msra.mxu0 %v2321
      %2349 = vmatprep.subr.bf16.mxu0 %v2319
      %2350 = vmatpush1.bf16.msra.mxu0 %v2318
      %2351 = vmatprep.subr.bf16.mxu0 %v2316
      %2352 = vmatpush1.bf16.msra.mxu0 %v2315
      %2353 = vmatprep.subr.bf16.mxu0 %v2313
      %2354 = vmatpush1.bf16.msra.mxu0 %v2312
      %2355 = vmatprep.subr.bf16.mxu0 0
      %2356 = vmatpush2.bf16.msra.mxu0 0
      %2357 = vmatprep.subr.bf16.mxu0 0
      %2358 = vmatpush2.bf16.msra.mxu0 0
      %2359 = vmatprep.subr.bf16.mxu0 0
      %2360 = vmatpush2.bf16.msra.mxu0 0
      %2361 = vmatprep.subr.bf16.mxu0 0
      %2362 = vmatpush2.bf16.msra.mxu0 0
      %2363 = vmatprep.subr.bf16.mxu0 0
      %2364 = vmatpush2.bf16.msra.mxu0 0
      %2365 = vmatprep.subr.bf16.mxu0 0
      %2366 = vmatpush2.bf16.msra.mxu0 0
      %2367 = vmatprep.subr.bf16.mxu0 0
      %2368 = vmatpush2.bf16.msra.mxu0 0
      %2369 = vmatprep.subr.bf16.mxu0 0
      %2370 = vmatpush2.bf16.msra.mxu0 0
      %2371 = vmatprep.mubr.bf16.mxu0 0
      %2372 = vmatmul.mubr.bf16.gmra.mxu0 %v2337
      %v2373 = vpop.f32.mrf.mxu0
      %v2374 = vadd.f32 0.0, %v2373
      %v2375 = vpop.f32.mrf.mxu0
      %v2376 = vadd.f32 0.0, %v2375
      %v2377 = vpop.f32.mrf.mxu0
      %v2378 = vpop.f32.mrf.mxu0
      %2379 = vdwg.mxu0
      %2380 = vmatprep.subr.bf16.mxu0 0
      %2381 = vmatpush1.bf16.msra.mxu0 0
      %2382 = vmatprep.subr.bf16.mxu0 0
      %2383 = vmatpush1.bf16.msra.mxu0 0
      %2384 = vmatprep.subr.bf16.mxu0 0
      %2385 = vmatpush1.bf16.msra.mxu0 0
      %2386 = vmatprep.subr.bf16.mxu0 0
      %2387 = vmatpush1.bf16.msra.mxu0 0
      %2388 = vmatprep.subr.bf16.mxu0 0
      %2389 = vmatpush1.bf16.msra.mxu0 %v2323
      %2390 = vmatprep.subr.bf16.mxu0 0
      %2391 = vmatpush1.bf16.msra.mxu0 %v2320
      %2392 = vmatprep.subr.bf16.mxu0 0
      %2393 = vmatpush1.bf16.msra.mxu0 %v2317
      %2394 = vmatprep.subr.bf16.mxu0 0
      %2395 = vmatpush1.bf16.msra.mxu0 %v2314
      %2396 = vmatprep.subr.bf16.mxu0 0
      %2397 = vmatpush2.bf16.msra.mxu0 0
      %2398 = vmatprep.subr.bf16.mxu0 0
      %2399 = vmatpush2.bf16.msra.mxu0 0
      %2400 = vmatprep.subr.bf16.mxu0 0
      %2401 = vmatpush2.bf16.msra.mxu0 0
      %2402 = vmatprep.subr.bf16.mxu0 0
      %2403 = vmatpush2.bf16.msra.mxu0 0
      %2404 = vmatprep.subr.bf16.mxu0 0
      %2405 = vmatpush2.bf16.msra.mxu0 0
      %2406 = vmatprep.subr.bf16.mxu0 0
      %2407 = vmatpush2.bf16.msra.mxu0 0
      %2408 = vmatprep.subr.bf16.mxu0 0
      %2409 = vmatpush2.bf16.msra.mxu0 0
      %2410 = vmatprep.subr.bf16.mxu0 0
      %2411 = vmatpush2.bf16.msra.mxu0 0
      %2412 = vmatprep.mubr.bf16.mxu0 0
      %2413 = vmatmul.mubr.bf16.gmra.mxu0 %v2337
      %v2414 = vpop.f32.mrf.mxu0
      %v2415 = vadd.f32 0.0, %v2414
      %v2416 = vpop.f32.mrf.mxu0
      %v2417 = vpop.f32.mrf.mxu0
      %v2418 = vpop.f32.mrf.mxu0
      %2419 = vdwg.mxu0
      %v2420 = vadd.f32 %v2208, %v2374
      %v2421 = vadd.f32 %v2210, %v2376
      %v2422 = vadd.f32 %v2249, %v2415
      %v2423 = vld [vmem:[%s9] sm:$0xf]
      %2425 = vset.pattern.permute.xlu0 0
      %2426 = vperm.xlu0 %2425, %v2423
      %v2427 = vpop.permute.xlu0 %2426
      %v2429 = vadd.f32 %v2420, %v2427
      %v2430 = vadd.f32 %v2421, %v2427
      %v2431 = vadd.f32 %v2422, %v2427
      %v2432 = vmul.f32 %v2429, 0.2
      %v2433 = vmul.f32 %v2430, 0.2
      %v2434 = vmul.f32 %v2431, 0.2
      %v2435 = vmax.f32 %v2429, %v2432
      %v2436 = vmax.f32 %v2430, %v2433
      %v2437 = vmax.f32 %v2431, %v2434
      %v2438 = vmul.f32 %v2435, %v1149
      %v2439 = vmul.f32 %v2436, %v1153
      %v2440 = vmul.f32 %v2437, %v1157
      %v2441 = vpack.c.bf16 %v2438, %v2438
      %v2442 = vpack.c.bf16 %v2439, %v2439
      %v2443 = vpack.c.bf16 %v2440, %v2440
      %2445 = vrot.lane.b32.xlu0 %v2443, 112
      %v2446 = vpop.permute.xlu0 %2445
      %2449 = vrot.lane.b32.xlu0 %v2441, 16
      %v2450 = vpop.permute.xlu0 %2449
      %2451 = vrot.lane.b32.xlu0 %v2442, 16
      %v2452 = vpop.permute.xlu0 %2451
      %2453 = vrot.lane.b32.xlu0 %v2443, 16
      %v2454 = vpop.permute.xlu0 %2453
      %v2455 = vsel %vm433, %v2450, %v2452
      %v2456 = vsel %vm433, %v2452, %v2454
      %v2459 = vsel %vm436, %v2446, %v2450
      %2460 = vrot.lane.b32.xlu0 %v2441, 112
      %v2461 = vpop.permute.xlu0 %2460
      %2462 = vrot.lane.b32.xlu0 %v2442, 112
      %v2463 = vpop.permute.xlu0 %2462
      %v2464 = vsel %vm444, %v2461, %v2463
      %v2465 = vsel %vm444, %v2463, %v2446
      %v2466 = vrot.slane %v2441, 6
      %v2467 = vrot.slane %v2442, 6
      %v2468 = vrot.slane %v2443, 6
      %v2470 = vrot.slane %v2464, 4
      %v2471 = vrot.slane %v2465, 4
      %v2472 = vrot.slane %v2459, 4
      %v2474 = vsel %vm1193, %v2459, %v2466
      %v2477 = vsel %vm1193, %v2455, %v2467
      %v2480 = vsel %vm1193, %v2456, %v2468
      %v2482 = vsel %vm450, %v2474, %v2470
      %v2484 = vsel %vm450, %v2477, %v2471
      %v2486 = vsel %vm450, %v2480, %v2472
      %v2487 = vsel %vm1208, %v2482, 0
      %v2488 = vsel %vm1208, %v2484, 0
      %v2489 = vsel %vm1208, %v2486, 0
      %v2493 = vunpack.c.l.b16 %v2487
      %v2494 = vunpack.c.l.b16 %v2488
      %v2495 = vunpack.c.l.b16 %v2489
      %v2496 = vunpack.c.h.b16 %v2487
      %v2497 = vunpack.c.h.b16 %v2488
      %v2498 = vunpack.c.h.b16 %v2489
      %v2499 = vpack.c.b16 %v2494, %v2493
      %v2500 = vpack.c.b16 %v2495, %v2495
      %v2501 = vpack.c.b16 %v2497, %v2496
      %v2502 = vpack.c.b16 %v2498, %v2498
      %2507 = vst [vmem:[#allocation3 + $0x60] sm:$0xff] %v2499
      %2508 = vst.msk [vmem:[#allocation3 + $0x68] sm:$0xf] %vm500, %v2500
      %2509 = vst [vmem:[#allocation3 + $0x6c] sm:$0xff] %v2501
      %2510 = vst.msk [vmem:[#allocation3 + $0x74] sm:$0xf] %vm500, %v2502
      %2511 = vrot.lane.b32.xlu0 %v2489, 97
      %v2512 = vpop.permute.xlu0 %2511
      %2513 = vrot.lane.b32.xlu0 %v2487, 1
      %v2514 = vpop.permute.xlu0 %2513
      %2515 = vrot.lane.b32.xlu0 %v2488, 1
      %v2516 = vpop.permute.xlu0 %2515
      %2517 = vrot.lane.b32.xlu0 %v2489, 1
      %v2518 = vpop.permute.xlu0 %2517
      %v2519 = vsel %vm524, %v2514, %v2516
      %v2520 = vsel %vm524, %v2516, %v2518
      %v2525 = vsel %vm533, %v2512, %v2514
      %v2527 = vmul.bf16 %v566, %v2525
      %v2528 = vmul.bf16 %v574, %v2519
      %v2529 = vmul.bf16 %v582, %v2520
      %v2533 = vunpack.c.l.b16 %v2527
      %v2534 = vunpack.c.l.b16 %v2528
      %v2535 = vunpack.c.l.b16 %v2529
      %v2536 = vunpack.c.h.b16 %v2527
      %v2537 = vunpack.c.h.b16 %v2528
      %v2538 = vunpack.c.h.b16 %v2529
      %v2539 = vpack.c.b16 %v2534, %v2533
      %v2540 = vpack.c.b16 %v2535, %v2535
      %v2541 = vpack.c.b16 %v2537, %v2536
      %v2542 = vpack.c.b16 %v2538, %v2538
      %2547 = vst [vmem:[#allocation2 + $0x60] sm:$0xff] %v2539
      %2548 = vst.msk [vmem:[#allocation2 + $0x68] sm:$0xf] %vm500, %v2540
      %2549 = vst [vmem:[#allocation2 + $0x6c] sm:$0xff] %v2541
      %2550 = vst.msk [vmem:[#allocation2 + $0x74] sm:$0xf] %vm500, %v2542
      %2551 = vrot.lane.b32.xlu0 %v2487, 127
      %v2552 = vpop.permute.xlu0 %2551
      %2553 = vrot.lane.b32.xlu0 %v2488, 127
      %v2554 = vpop.permute.xlu0 %2553
      %2555 = vrot.lane.b32.xlu0 %v2489, 127
      %v2556 = vpop.permute.xlu0 %2555
      %v2557 = vsel %vm643, %v2552, %v2554
      %v2558 = vsel %vm643, %v2554, %v2556
      %2561 = vrot.lane.b32.xlu0 %v2487, 31
      %v2562 = vpop.permute.xlu0 %2561
      %v2565 = vsel %vm656, %v2556, %v2562
      %v2567 = vmul.bf16 %v670, %v2557
      %v2568 = vmul.bf16 %v676, %v2558
      %v2569 = vmul.bf16 %v682, %v2565
      %v2573 = vunpack.c.l.b16 %v2567
      %v2574 = vunpack.c.l.b16 %v2568
      %v2575 = vunpack.c.l.b16 %v2569
      %v2576 = vunpack.c.h.b16 %v2567
      %v2577 = vunpack.c.h.b16 %v2568
      %v2578 = vunpack.c.h.b16 %v2569
      %v2579 = vpack.c.b16 %v2574, %v2573
      %v2580 = vpack.c.b16 %v2575, %v2575
      %v2581 = vpack.c.b16 %v2577, %v2576
      %v2582 = vpack.c.b16 %v2578, %v2578
      %2587 = vst [vmem:[#allocation4 + $0x60] sm:$0xff] %v2579
      %2588 = vst.msk [vmem:[#allocation4 + $0x68] sm:$0xf] %vm500, %v2580
      %2589 = vst [vmem:[#allocation4 + $0x6c] sm:$0xff] %v2581
      %2590 = vst.msk [vmem:[#allocation4 + $0x74] sm:$0xf] %vm500, %v2582
      %s2591 = scalar_lea.vmem %s5, 2
      %v2592 = vld [vmem:[%s2591] sm:$0x3]
      %v2593 = vld [vmem:[#allocation3] sm:$0xff]
      %v2594 = vld [vmem:[#allocation3 + $0x8] sm:$0xf]
      %v2595 = vld [vmem:[#allocation3 + $0xc] sm:$0xff]
      %v2596 = vld [vmem:[#allocation3 + $0x14] sm:$0xf]
      %v2597 = vld [vmem:[#allocation3 + $0x18] sm:$0xff]
      %v2598 = vld [vmem:[#allocation3 + $0x20] sm:$0xf]
      %v2599 = vld [vmem:[#allocation3 + $0x24] sm:$0xff]
      %v2600 = vld [vmem:[#allocation3 + $0x2c] sm:$0xf]
      %v2601 = vld [vmem:[#allocation3 + $0x30] sm:$0xff]
      %v2602 = vld [vmem:[#allocation3 + $0x38] sm:$0xf]
      %v2603 = vld [vmem:[#allocation3 + $0x3c] sm:$0xff]
      %v2604 = vld [vmem:[#allocation3 + $0x44] sm:$0xf]
      %v2605 = vld [vmem:[#allocation3 + $0x48] sm:$0xff]
      %v2606 = vld [vmem:[#allocation3 + $0x50] sm:$0xf]
      %v2607 = vld [vmem:[#allocation3 + $0x54] sm:$0xff]
      %v2608 = vld [vmem:[#allocation3 + $0x5c] sm:$0xf]
      %v2609 = vld [vmem:[#allocation3 + $0x60] sm:$0xff]
      %v2610 = vld [vmem:[#allocation3 + $0x68] sm:$0xf]
      %v2611 = vld [vmem:[#allocation3 + $0x6c] sm:$0xff]
      %v2612 = vld [vmem:[#allocation3 + $0x74] sm:$0xf]
      %v2613 = vld [vmem:[%s5] sm:$0x3]
      %v2614 = vld [vmem:[#allocation2] sm:$0xff]
      %v2615 = vld [vmem:[#allocation2 + $0x8] sm:$0xf]
      %v2616 = vld [vmem:[#allocation2 + $0xc] sm:$0xff]
      %v2617 = vld [vmem:[#allocation2 + $0x14] sm:$0xf]
      %v2618 = vld [vmem:[#allocation2 + $0x18] sm:$0xff]
      %v2619 = vld [vmem:[#allocation2 + $0x20] sm:$0xf]
      %v2620 = vld [vmem:[#allocation2 + $0x24] sm:$0xff]
      %v2621 = vld [vmem:[#allocation2 + $0x2c] sm:$0xf]
      %v2622 = vld [vmem:[#allocation2 + $0x30] sm:$0xff]
      %v2623 = vld [vmem:[#allocation2 + $0x38] sm:$0xf]
      %v2624 = vld [vmem:[#allocation2 + $0x3c] sm:$0xff]
      %v2625 = vld [vmem:[#allocation2 + $0x44] sm:$0xf]
      %v2626 = vld [vmem:[#allocation2 + $0x48] sm:$0xff]
      %v2627 = vld [vmem:[#allocation2 + $0x50] sm:$0xf]
      %v2628 = vld [vmem:[#allocation2 + $0x54] sm:$0xff]
      %v2629 = vld [vmem:[#allocation2 + $0x5c] sm:$0xf]
      %v2630 = vld [vmem:[#allocation2 + $0x60] sm:$0xff]
      %v2631 = vld [vmem:[#allocation2 + $0x68] sm:$0xf]
      %v2632 = vld [vmem:[#allocation2 + $0x6c] sm:$0xff]
      %v2633 = vld [vmem:[#allocation2 + $0x74] sm:$0xf]
      %v2654 = vunpack.c.l.b16 %v2614
      %v2655 = vunpack.c.h.b16 %v2614
      %v2656 = vunpack.c.l.b16 %v2615
      %v2657 = vunpack.c.l.b16 %v2616
      %v2658 = vunpack.c.h.b16 %v2616
      %v2659 = vunpack.c.l.b16 %v2617
      %v2660 = vunpack.c.l.b16 %v2618
      %v2661 = vunpack.c.h.b16 %v2618
      %v2662 = vunpack.c.l.b16 %v2619
      %v2663 = vunpack.c.l.b16 %v2620
      %v2664 = vunpack.c.h.b16 %v2620
      %v2665 = vunpack.c.l.b16 %v2621
      %v2666 = vunpack.c.l.b16 %v2622
      %v2667 = vunpack.c.h.b16 %v2622
      %v2668 = vunpack.c.l.b16 %v2623
      %v2669 = vunpack.c.l.b16 %v2624
      %v2670 = vunpack.c.h.b16 %v2624
      %v2671 = vunpack.c.l.b16 %v2625
      %v2672 = vunpack.c.l.b16 %v2626
      %v2673 = vunpack.c.h.b16 %v2626
      %v2674 = vunpack.c.l.b16 %v2627
      %v2675 = vunpack.c.l.b16 %v2628
      %v2676 = vunpack.c.h.b16 %v2628
      %v2677 = vunpack.c.l.b16 %v2629
      %v2678 = vunpack.c.l.b16 %v2630
      %v2679 = vunpack.c.h.b16 %v2630
      %v2680 = vunpack.c.l.b16 %v2631
      %v2681 = vunpack.c.l.b16 %v2632
      %v2682 = vunpack.c.h.b16 %v2632
      %v2683 = vunpack.c.l.b16 %v2633
      %v2684 = vpack.c.b16 %v2657, %v2654
      %v2685 = vpack.c.b16 %v2658, %v2655
      %v2686 = vpack.c.b16 %v2659, %v2656
      %v2687 = vpack.c.b16 %v2663, %v2660
      %v2688 = vpack.c.b16 %v2664, %v2661
      %v2689 = vpack.c.b16 %v2665, %v2662
      %v2690 = vpack.c.b16 %v2669, %v2666
      %v2691 = vpack.c.b16 %v2670, %v2667
      %v2692 = vpack.c.b16 %v2671, %v2668
      %v2693 = vpack.c.b16 %v2675, %v2672
      %v2694 = vpack.c.b16 %v2676, %v2673
      %v2695 = vpack.c.b16 %v2677, %v2674
      %v2696 = vpack.c.b16 %v2681, %v2678
      %v2697 = vpack.c.b16 %v2682, %v2679
      %v2698 = vpack.c.b16 %v2683, %v2680
      %vm2714 = vcmask 654336
      %v2716 = vsel %vm2714, %v2613, 0
      %2718 = vmatprep.subr.bf16.mxu0 0
      %2719 = vmatpush1.bf16.msra.mxu0 0
      %2720 = vmatprep.subr.bf16.mxu0 0
      %2721 = vmatpush1.bf16.msra.mxu0 0
      %2722 = vmatprep.subr.bf16.mxu0 0
      %2723 = vmatpush1.bf16.msra.mxu0 0
      %2724 = vmatprep.subr.bf16.mxu0 %v2697
      %2725 = vmatpush1.bf16.msra.mxu0 %v2696
      %2726 = vmatprep.subr.bf16.mxu0 %v2694
      %2727 = vmatpush1.bf16.msra.mxu0 %v2693
      %2728 = vmatprep.subr.bf16.mxu0 %v2691
      %2729 = vmatpush1.bf16.msra.mxu0 %v2690
      %2730 = vmatprep.subr.bf16.mxu0 %v2688
      %2731 = vmatpush1.bf16.msra.mxu0 %v2687
      %2732 = vmatprep.subr.bf16.mxu0 %v2685
      %2733 = vmatpush1.bf16.msra.mxu0 %v2684
      %2734 = vmatprep.subr.bf16.mxu0 0
      %2735 = vmatpush2.bf16.msra.mxu0 0
      %2736 = vmatprep.subr.bf16.mxu0 0
      %2737 = vmatpush2.bf16.msra.mxu0 0
      %2738 = vmatprep.subr.bf16.mxu0 0
      %2739 = vmatpush2.bf16.msra.mxu0 0
      %2740 = vmatprep.subr.bf16.mxu0 0
      %2741 = vmatpush2.bf16.msra.mxu0 0
      %2742 = vmatprep.subr.bf16.mxu0 0
      %2743 = vmatpush2.bf16.msra.mxu0 0
      %2744 = vmatprep.subr.bf16.mxu0 0
      %2745 = vmatpush2.bf16.msra.mxu0 0
      %2746 = vmatprep.subr.bf16.mxu0 0
      %2747 = vmatpush2.bf16.msra.mxu0 0
      %2748 = vmatprep.subr.bf16.mxu0 0
      %2749 = vmatpush2.bf16.msra.mxu0 0
      %2750 = vmatprep.mubr.bf16.mxu0 0
      %2751 = vmatmul.mubr.bf16.gmra.mxu0 %v2716
      %v2752 = vpop.f32.mrf.mxu0
      %v2753 = vadd.f32 0.0, %v2752
      %v2754 = vpop.f32.mrf.mxu0
      %v2755 = vadd.f32 0.0, %v2754
      %v2756 = vpop.f32.mrf.mxu0
      %v2757 = vpop.f32.mrf.mxu0
      %2758 = vdwg.mxu0
      %2759 = vmatprep.subr.bf16.mxu0 0
      %2760 = vmatpush1.bf16.msra.mxu0 0
      %2761 = vmatprep.subr.bf16.mxu0 0
      %2762 = vmatpush1.bf16.msra.mxu0 0
      %2763 = vmatprep.subr.bf16.mxu0 0
      %2764 = vmatpush1.bf16.msra.mxu0 0
      %2765 = vmatprep.subr.bf16.mxu0 0
      %2766 = vmatpush1.bf16.msra.mxu0 %v2698
      %2767 = vmatprep.subr.bf16.mxu0 0
      %2768 = vmatpush1.bf16.msra.mxu0 %v2695
      %2769 = vmatprep.subr.bf16.mxu0 0
      %2770 = vmatpush1.bf16.msra.mxu0 %v2692
      %2771 = vmatprep.subr.bf16.mxu0 0
      %2772 = vmatpush1.bf16.msra.mxu0 %v2689
      %2773 = vmatprep.subr.bf16.mxu0 0
      %2774 = vmatpush1.bf16.msra.mxu0 %v2686
      %2775 = vmatprep.subr.bf16.mxu0 0
      %2776 = vmatpush2.bf16.msra.mxu0 0
      %2777 = vmatprep.subr.bf16.mxu0 0
      %2778 = vmatpush2.bf16.msra.mxu0 0
      %2779 = vmatprep.subr.bf16.mxu0 0
      %2780 = vmatpush2.bf16.msra.mxu0 0
      %2781 = vmatprep.subr.bf16.mxu0 0
      %2782 = vmatpush2.bf16.msra.mxu0 0
      %2783 = vmatprep.subr.bf16.mxu0 0
      %2784 = vmatpush2.bf16.msra.mxu0 0
      %2785 = vmatprep.subr.bf16.mxu0 0
      %2786 = vmatpush2.bf16.msra.mxu0 0
      %2787 = vmatprep.subr.bf16.mxu0 0
      %2788 = vmatpush2.bf16.msra.mxu0 0
      %2789 = vmatprep.subr.bf16.mxu0 0
      %2790 = vmatpush2.bf16.msra.mxu0 0
      %2791 = vmatprep.mubr.bf16.mxu0 0
      %2792 = vmatmul.mubr.bf16.gmra.mxu0 %v2716
      %v2793 = vpop.f32.mrf.mxu0
      %v2794 = vadd.f32 0.0, %v2793
      %v2795 = vpop.f32.mrf.mxu0
      %v2796 = vpop.f32.mrf.mxu0
      %v2797 = vpop.f32.mrf.mxu0
      %2798 = vdwg.mxu0
      %v2819 = vunpack.c.l.b16 %v2593
      %v2820 = vunpack.c.h.b16 %v2593
      %v2821 = vunpack.c.l.b16 %v2594
      %v2822 = vunpack.c.l.b16 %v2595
      %v2823 = vunpack.c.h.b16 %v2595
      %v2824 = vunpack.c.l.b16 %v2596
      %v2825 = vunpack.c.l.b16 %v2597
      %v2826 = vunpack.c.h.b16 %v2597
      %v2827 = vunpack.c.l.b16 %v2598
      %v2828 = vunpack.c.l.b16 %v2599
      %v2829 = vunpack.c.h.b16 %v2599
      %v2830 = vunpack.c.l.b16 %v2600
      %v2831 = vunpack.c.l.b16 %v2601
      %v2832 = vunpack.c.h.b16 %v2601
      %v2833 = vunpack.c.l.b16 %v2602
      %v2834 = vunpack.c.l.b16 %v2603
      %v2835 = vunpack.c.h.b16 %v2603
      %v2836 = vunpack.c.l.b16 %v2604
      %v2837 = vunpack.c.l.b16 %v2605
      %v2838 = vunpack.c.h.b16 %v2605
      %v2839 = vunpack.c.l.b16 %v2606
      %v2840 = vunpack.c.l.b16 %v2607
      %v2841 = vunpack.c.h.b16 %v2607
      %v2842 = vunpack.c.l.b16 %v2608
      %v2843 = vunpack.c.l.b16 %v2609
      %v2844 = vunpack.c.h.b16 %v2609
      %v2845 = vunpack.c.l.b16 %v2610
      %v2846 = vunpack.c.l.b16 %v2611
      %v2847 = vunpack.c.h.b16 %v2611
      %v2848 = vunpack.c.l.b16 %v2612
      %v2849 = vpack.c.b16 %v2822, %v2819
      %v2850 = vpack.c.b16 %v2823, %v2820
      %v2851 = vpack.c.b16 %v2824, %v2821
      %v2852 = vpack.c.b16 %v2828, %v2825
      %v2853 = vpack.c.b16 %v2829, %v2826
      %v2854 = vpack.c.b16 %v2830, %v2827
      %v2855 = vpack.c.b16 %v2834, %v2831
      %v2856 = vpack.c.b16 %v2835, %v2832
      %v2857 = vpack.c.b16 %v2836, %v2833
      %v2858 = vpack.c.b16 %v2840, %v2837
      %v2859 = vpack.c.b16 %v2841, %v2838
      %v2860 = vpack.c.b16 %v2842, %v2839
      %v2861 = vpack.c.b16 %v2846, %v2843
      %v2862 = vpack.c.b16 %v2847, %v2844
      %v2863 = vpack.c.b16 %v2848, %v2845
      %v2880 = vsel %vm2714, %v2592, 0
      %2882 = vmatprep.subr.bf16.mxu0 0
      %2883 = vmatpush1.bf16.msra.mxu0 0
      %2884 = vmatprep.subr.bf16.mxu0 0
      %2885 = vmatpush1.bf16.msra.mxu0 0
      %2886 = vmatprep.subr.bf16.mxu0 0
      %2887 = vmatpush1.bf16.msra.mxu0 0
      %2888 = vmatprep.subr.bf16.mxu0 %v2862
      %2889 = vmatpush1.bf16.msra.mxu0 %v2861
      %2890 = vmatprep.subr.bf16.mxu0 %v2859
      %2891 = vmatpush1.bf16.msra.mxu0 %v2858
      %2892 = vmatprep.subr.bf16.mxu0 %v2856
      %2893 = vmatpush1.bf16.msra.mxu0 %v2855
      %2894 = vmatprep.subr.bf16.mxu0 %v2853
      %2895 = vmatpush1.bf16.msra.mxu0 %v2852
      %2896 = vmatprep.subr.bf16.mxu0 %v2850
      %2897 = vmatpush1.bf16.msra.mxu0 %v2849
      %2898 = vmatprep.subr.bf16.mxu0 0
      %2899 = vmatpush2.bf16.msra.mxu0 0
      %2900 = vmatprep.subr.bf16.mxu0 0
      %2901 = vmatpush2.bf16.msra.mxu0 0
      %2902 = vmatprep.subr.bf16.mxu0 0
      %2903 = vmatpush2.bf16.msra.mxu0 0
      %2904 = vmatprep.subr.bf16.mxu0 0
      %2905 = vmatpush2.bf16.msra.mxu0 0
      %2906 = vmatprep.subr.bf16.mxu0 0
      %2907 = vmatpush2.bf16.msra.mxu0 0
      %2908 = vmatprep.subr.bf16.mxu0 0
      %2909 = vmatpush2.bf16.msra.mxu0 0
      %2910 = vmatprep.subr.bf16.mxu0 0
      %2911 = vmatpush2.bf16.msra.mxu0 0
      %2912 = vmatprep.subr.bf16.mxu0 0
      %2913 = vmatpush2.bf16.msra.mxu0 0
      %2914 = vmatprep.mubr.bf16.mxu0 0
      %2915 = vmatmul.mubr.bf16.gmra.mxu0 %v2880
      %v2916 = vpop.f32.mrf.mxu0
      %v2917 = vadd.f32 %v2753, %v2916
      %v2918 = vpop.f32.mrf.mxu0
      %v2919 = vadd.f32 %v2755, %v2918
      %v2920 = vpop.f32.mrf.mxu0
      %v2921 = vpop.f32.mrf.mxu0
      %2922 = vdwg.mxu0
      %2923 = vmatprep.subr.bf16.mxu0 0
      %2924 = vmatpush1.bf16.msra.mxu0 0
      %2925 = vmatprep.subr.bf16.mxu0 0
      %2926 = vmatpush1.bf16.msra.mxu0 0
      %2927 = vmatprep.subr.bf16.mxu0 0
      %2928 = vmatpush1.bf16.msra.mxu0 0
      %2929 = vmatprep.subr.bf16.mxu0 0
      %2930 = vmatpush1.bf16.msra.mxu0 %v2863
      %2931 = vmatprep.subr.bf16.mxu0 0
      %2932 = vmatpush1.bf16.msra.mxu0 %v2860
      %2933 = vmatprep.subr.bf16.mxu0 0
      %2934 = vmatpush1.bf16.msra.mxu0 %v2857
      %2935 = vmatprep.subr.bf16.mxu0 0
      %2936 = vmatpush1.bf16.msra.mxu0 %v2854
      %2937 = vmatprep.subr.bf16.mxu0 0
      %2938 = vmatpush1.bf16.msra.mxu0 %v2851
      %2939 = vmatprep.subr.bf16.mxu0 0
      %2940 = vmatpush2.bf16.msra.mxu0 0
      %2941 = vmatprep.subr.bf16.mxu0 0
      %2942 = vmatpush2.bf16.msra.mxu0 0
      %2943 = vmatprep.subr.bf16.mxu0 0
      %2944 = vmatpush2.bf16.msra.mxu0 0
      %2945 = vmatprep.subr.bf16.mxu0 0
      %2946 = vmatpush2.bf16.msra.mxu0 0
      %2947 = vmatprep.subr.bf16.mxu0 0
      %2948 = vmatpush2.bf16.msra.mxu0 0
      %2949 = vmatprep.subr.bf16.mxu0 0
      %2950 = vmatpush2.bf16.msra.mxu0 0
      %2951 = vmatprep.subr.bf16.mxu0 0
      %2952 = vmatpush2.bf16.msra.mxu0 0
      %2953 = vmatprep.subr.bf16.mxu0 0
      %2954 = vmatpush2.bf16.msra.mxu0 0
      %2955 = vmatprep.mubr.bf16.mxu0 0
      %2956 = vmatmul.mubr.bf16.gmra.mxu0 %v2880
      %v2957 = vpop.f32.mrf.mxu0
      %v2958 = vadd.f32 %v2794, %v2957
      %v2959 = vpop.f32.mrf.mxu0
      %v2960 = vpop.f32.mrf.mxu0
      %v2961 = vpop.f32.mrf.mxu0
      %2962 = vdwg.mxu0
      %s2963 = scalar_lea.vmem %s5, 4
      %v2964 = vld [vmem:[%s2963] sm:$0x3]
      %v2965 = vld [vmem:[#allocation4] sm:$0xff]
      %v2966 = vld [vmem:[#allocation4 + $0x8] sm:$0xf]
      %v2967 = vld [vmem:[#allocation4 + $0xc] sm:$0xff]
      %v2968 = vld [vmem:[#allocation4 + $0x14] sm:$0xf]
      %v2969 = vld [vmem:[#allocation4 + $0x18] sm:$0xff]
      %v2970 = vld [vmem:[#allocation4 + $0x20] sm:$0xf]
      %v2971 = vld [vmem:[#allocation4 + $0x24] sm:$0xff]
      %v2972 = vld [vmem:[#allocation4 + $0x2c] sm:$0xf]
      %v2973 = vld [vmem:[#allocation4 + $0x30] sm:$0xff]
      %v2974 = vld [vmem:[#allocation4 + $0x38] sm:$0xf]
      %v2975 = vld [vmem:[#allocation4 + $0x3c] sm:$0xff]
      %v2976 = vld [vmem:[#allocation4 + $0x44] sm:$0xf]
      %v2977 = vld [vmem:[#allocation4 + $0x48] sm:$0xff]
      %v2978 = vld [vmem:[#allocation4 + $0x50] sm:$0xf]
      %v2979 = vld [vmem:[#allocation4 + $0x54] sm:$0xff]
      %v2980 = vld [vmem:[#allocation4 + $0x5c] sm:$0xf]
      %v2981 = vld [vmem:[#allocation4 + $0x60] sm:$0xff]
      %v2982 = vld [vmem:[#allocation4 + $0x68] sm:$0xf]
      %v2983 = vld [vmem:[#allocation4 + $0x6c] sm:$0xff]
      %v2984 = vld [vmem:[#allocation4 + $0x74] sm:$0xf]
      %v3005 = vunpack.c.l.b16 %v2965
      %v3006 = vunpack.c.h.b16 %v2965
      %v3007 = vunpack.c.l.b16 %v2966
      %v3008 = vunpack.c.l.b16 %v2967
      %v3009 = vunpack.c.h.b16 %v2967
      %v3010 = vunpack.c.l.b16 %v2968
      %v3011 = vunpack.c.l.b16 %v2969
      %v3012 = vunpack.c.h.b16 %v2969
      %v3013 = vunpack.c.l.b16 %v2970
      %v3014 = vunpack.c.l.b16 %v2971
      %v3015 = vunpack.c.h.b16 %v2971
      %v3016 = vunpack.c.l.b16 %v2972
      %v3017 = vunpack.c.l.b16 %v2973
      %v3018 = vunpack.c.h.b16 %v2973
      %v3019 = vunpack.c.l.b16 %v2974
      %v3020 = vunpack.c.l.b16 %v2975
      %v3021 = vunpack.c.h.b16 %v2975
      %v3022 = vunpack.c.l.b16 %v2976
      %v3023 = vunpack.c.l.b16 %v2977
      %v3024 = vunpack.c.h.b16 %v2977
      %v3025 = vunpack.c.l.b16 %v2978
      %v3026 = vunpack.c.l.b16 %v2979
      %v3027 = vunpack.c.h.b16 %v2979
      %v3028 = vunpack.c.l.b16 %v2980
      %v3029 = vunpack.c.l.b16 %v2981
      %v3030 = vunpack.c.h.b16 %v2981
      %v3031 = vunpack.c.l.b16 %v2982
      %v3032 = vunpack.c.l.b16 %v2983
      %v3033 = vunpack.c.h.b16 %v2983
      %v3034 = vunpack.c.l.b16 %v2984
      %v3035 = vpack.c.b16 %v3008, %v3005
      %v3036 = vpack.c.b16 %v3009, %v3006
      %v3037 = vpack.c.b16 %v3010, %v3007
      %v3038 = vpack.c.b16 %v3014, %v3011
      %v3039 = vpack.c.b16 %v3015, %v3012
      %v3040 = vpack.c.b16 %v3016, %v3013
      %v3041 = vpack.c.b16 %v3020, %v3017
      %v3042 = vpack.c.b16 %v3021, %v3018
      %v3043 = vpack.c.b16 %v3022, %v3019
      %v3044 = vpack.c.b16 %v3026, %v3023
      %v3045 = vpack.c.b16 %v3027, %v3024
      %v3046 = vpack.c.b16 %v3028, %v3025
      %v3047 = vpack.c.b16 %v3032, %v3029
      %v3048 = vpack.c.b16 %v3033, %v3030
      %v3049 = vpack.c.b16 %v3034, %v3031
      %v3066 = vsel %vm2714, %v2964, 0
      %3068 = vmatprep.subr.bf16.mxu0 0
      %3069 = vmatpush1.bf16.msra.mxu0 0
      %3070 = vmatprep.subr.bf16.mxu0 0
      %3071 = vmatpush1.bf16.msra.mxu0 0
      %3072 = vmatprep.subr.bf16.mxu0 0
      %3073 = vmatpush1.bf16.msra.mxu0 0
      %3074 = vmatprep.subr.bf16.mxu0 %v3048
      %3075 = vmatpush1.bf16.msra.mxu0 %v3047
      %3076 = vmatprep.subr.bf16.mxu0 %v3045
      %3077 = vmatpush1.bf16.msra.mxu0 %v3044
      %3078 = vmatprep.subr.bf16.mxu0 %v3042
      %3079 = vmatpush1.bf16.msra.mxu0 %v3041
      %3080 = vmatprep.subr.bf16.mxu0 %v3039
      %3081 = vmatpush1.bf16.msra.mxu0 %v3038
      %3082 = vmatprep.subr.bf16.mxu0 %v3036
      %3083 = vmatpush1.bf16.msra.mxu0 %v3035
      %3084 = vmatprep.subr.bf16.mxu0 0
      %3085 = vmatpush2.bf16.msra.mxu0 0
      %3086 = vmatprep.subr.bf16.mxu0 0
      %3087 = vmatpush2.bf16.msra.mxu0 0
      %3088 = vmatprep.subr.bf16.mxu0 0
      %3089 = vmatpush2.bf16.msra.mxu0 0
      %3090 = vmatprep.subr.bf16.mxu0 0
      %3091 = vmatpush2.bf16.msra.mxu0 0
      %3092 = vmatprep.subr.bf16.mxu0 0
      %3093 = vmatpush2.bf16.msra.mxu0 0
      %3094 = vmatprep.subr.bf16.mxu0 0
      %3095 = vmatpush2.bf16.msra.mxu0 0
      %3096 = vmatprep.subr.bf16.mxu0 0
      %3097 = vmatpush2.bf16.msra.mxu0 0
      %3098 = vmatprep.subr.bf16.mxu0 0
      %3099 = vmatpush2.bf16.msra.mxu0 0
      %3100 = vmatprep.mubr.bf16.mxu0 0
      %3101 = vmatmul.mubr.bf16.gmra.mxu0 %v3066
      %v3102 = vpop.f32.mrf.mxu0
      %v3103 = vadd.f32 0.0, %v3102
      %v3104 = vpop.f32.mrf.mxu0
      %v3105 = vadd.f32 0.0, %v3104
      %v3106 = vpop.f32.mrf.mxu0
      %v3107 = vpop.f32.mrf.mxu0
      %3108 = vdwg.mxu0
      %3109 = vmatprep.subr.bf16.mxu0 0
      %3110 = vmatpush1.bf16.msra.mxu0 0
      %3111 = vmatprep.subr.bf16.mxu0 0
      %3112 = vmatpush1.bf16.msra.mxu0 0
      %3113 = vmatprep.subr.bf16.mxu0 0
      %3114 = vmatpush1.bf16.msra.mxu0 0
      %3115 = vmatprep.subr.bf16.mxu0 0
      %3116 = vmatpush1.bf16.msra.mxu0 %v3049
      %3117 = vmatprep.subr.bf16.mxu0 0
      %3118 = vmatpush1.bf16.msra.mxu0 %v3046
      %3119 = vmatprep.subr.bf16.mxu0 0
      %3120 = vmatpush1.bf16.msra.mxu0 %v3043
      %3121 = vmatprep.subr.bf16.mxu0 0
      %3122 = vmatpush1.bf16.msra.mxu0 %v3040
      %3123 = vmatprep.subr.bf16.mxu0 0
      %3124 = vmatpush1.bf16.msra.mxu0 %v3037
      %3125 = vmatprep.subr.bf16.mxu0 0
      %3126 = vmatpush2.bf16.msra.mxu0 0
      %3127 = vmatprep.subr.bf16.mxu0 0
      %3128 = vmatpush2.bf16.msra.mxu0 0
      %3129 = vmatprep.subr.bf16.mxu0 0
      %3130 = vmatpush2.bf16.msra.mxu0 0
      %3131 = vmatprep.subr.bf16.mxu0 0
      %3132 = vmatpush2.bf16.msra.mxu0 0
      %3133 = vmatprep.subr.bf16.mxu0 0
      %3134 = vmatpush2.bf16.msra.mxu0 0
      %3135 = vmatprep.subr.bf16.mxu0 0
      %3136 = vmatpush2.bf16.msra.mxu0 0
      %3137 = vmatprep.subr.bf16.mxu0 0
      %3138 = vmatpush2.bf16.msra.mxu0 0
      %3139 = vmatprep.subr.bf16.mxu0 0
      %3140 = vmatpush2.bf16.msra.mxu0 0
      %3141 = vmatprep.mubr.bf16.mxu0 0
      %3142 = vmatmul.mubr.bf16.gmra.mxu0 %v3066
      %v3143 = vpop.f32.mrf.mxu0
      %v3144 = vadd.f32 0.0, %v3143
      %v3145 = vpop.f32.mrf.mxu0
      %v3146 = vpop.f32.mrf.mxu0
      %v3147 = vpop.f32.mrf.mxu0
      %3148 = vdwg.mxu0
      %v3149 = vadd.f32 %v2917, %v3103
      %v3150 = vadd.f32 %v2919, %v3105
      %v3151 = vadd.f32 %v2958, %v3144
      %v3152 = vld [vmem:[%s10] sm:$0xf]
      %3154 = vset.pattern.permute.xlu0 0
      %3155 = vperm.xlu0 %3154, %v3152
      %v3156 = vpop.permute.xlu0 %3155
      %v3158 = vadd.f32 %v3149, %v3156
      %v3159 = vadd.f32 %v3150, %v3156
      %v3160 = vadd.f32 %v3151, %v3156
      %v3161 = vmul.f32 %v3158, 0.2
      %v3162 = vmul.f32 %v3159, 0.2
      %v3163 = vmul.f32 %v3160, 0.2
      %v3164 = vmax.f32 %v3158, %v3161
      %v3165 = vmax.f32 %v3159, %v3162
      %v3166 = vmax.f32 %v3160, %v3163
      %v3167 = vmul.f32 %v3164, %v1149
      %v3168 = vmul.f32 %v3165, %v1153
      %v3169 = vmul.f32 %v3166, %v1157
      %v3170 = vpack.c.bf16 %v3167, %v3167
      %v3171 = vpack.c.bf16 %v3168, %v3168
      %v3172 = vpack.c.bf16 %v3169, %v3169
      %3174 = vrot.lane.b32.xlu0 %v3172, 112
      %v3175 = vpop.permute.xlu0 %3174
      %3178 = vrot.lane.b32.xlu0 %v3170, 16
      %v3179 = vpop.permute.xlu0 %3178
      %3180 = vrot.lane.b32.xlu0 %v3171, 16
      %v3181 = vpop.permute.xlu0 %3180
      %3182 = vrot.lane.b32.xlu0 %v3172, 16
      %v3183 = vpop.permute.xlu0 %3182
      %v3184 = vsel %vm433, %v3179, %v3181
      %v3185 = vsel %vm433, %v3181, %v3183
      %v3188 = vsel %vm436, %v3175, %v3179
      %3189 = vrot.lane.b32.xlu0 %v3170, 112
      %v3190 = vpop.permute.xlu0 %3189
      %3191 = vrot.lane.b32.xlu0 %v3171, 112
      %v3192 = vpop.permute.xlu0 %3191
      %v3193 = vsel %vm444, %v3190, %v3192
      %v3194 = vsel %vm444, %v3192, %v3175
      %v3195 = vrot.slane %v3170, 6
      %v3196 = vrot.slane %v3171, 6
      %v3197 = vrot.slane %v3172, 6
      %v3199 = vrot.slane %v3193, 4
      %v3200 = vrot.slane %v3194, 4
      %v3201 = vrot.slane %v3188, 4
      %v3203 = vsel %vm1193, %v3188, %v3195
      %v3206 = vsel %vm1193, %v3184, %v3196
      %v3209 = vsel %vm1193, %v3185, %v3197
      %v3211 = vsel %vm450, %v3203, %v3199
      %v3213 = vsel %vm450, %v3206, %v3200
      %v3215 = vsel %vm450, %v3209, %v3201
      %v3216 = vsel %vm1208, %v3211, 0
      %v3217 = vsel %vm1208, %v3213, 0
      %v3218 = vsel %vm1208, %v3215, 0
      %v3222 = vunpack.c.l.b16 %v3216
      %v3223 = vunpack.c.l.b16 %v3217
      %v3224 = vunpack.c.l.b16 %v3218
      %v3225 = vunpack.c.h.b16 %v3216
      %v3226 = vunpack.c.h.b16 %v3217
      %v3227 = vunpack.c.h.b16 %v3218
      %v3228 = vpack.c.b16 %v3223, %v3222
      %v3229 = vpack.c.b16 %v3224, %v3224
      %v3230 = vpack.c.b16 %v3226, %v3225
      %v3231 = vpack.c.b16 %v3227, %v3227
      %3236 = vst [vmem:[#allocation3 + $0x78] sm:$0xff] %v3228
      %3237 = vst.msk [vmem:[#allocation3 + $0x80] sm:$0xf] %vm500, %v3229
      %3238 = vst [vmem:[#allocation3 + $0x84] sm:$0xff] %v3230
      %3239 = vst.msk [vmem:[#allocation3 + $0x8c] sm:$0xf] %vm500, %v3231
      %3240 = vrot.lane.b32.xlu0 %v3218, 97
      %v3241 = vpop.permute.xlu0 %3240
      %3242 = vrot.lane.b32.xlu0 %v3216, 1
      %v3243 = vpop.permute.xlu0 %3242
      %3244 = vrot.lane.b32.xlu0 %v3217, 1
      %v3245 = vpop.permute.xlu0 %3244
      %3246 = vrot.lane.b32.xlu0 %v3218, 1
      %v3247 = vpop.permute.xlu0 %3246
      %v3248 = vsel %vm524, %v3243, %v3245
      %v3249 = vsel %vm524, %v3245, %v3247
      %v3254 = vsel %vm533, %v3241, %v3243
      %v3256 = vmul.bf16 %v566, %v3254
      %v3257 = vmul.bf16 %v574, %v3248
      %v3258 = vmul.bf16 %v582, %v3249
      %v3262 = vunpack.c.l.b16 %v3256
      %v3263 = vunpack.c.l.b16 %v3257
      %v3264 = vunpack.c.l.b16 %v3258
      %v3265 = vunpack.c.h.b16 %v3256
      %v3266 = vunpack.c.h.b16 %v3257
      %v3267 = vunpack.c.h.b16 %v3258
      %v3268 = vpack.c.b16 %v3263, %v3262
      %v3269 = vpack.c.b16 %v3264, %v3264
      %v3270 = vpack.c.b16 %v3266, %v3265
      %v3271 = vpack.c.b16 %v3267, %v3267
      %3276 = vst [vmem:[#allocation2 + $0x78] sm:$0xff] %v3268
      %3277 = vst.msk [vmem:[#allocation2 + $0x80] sm:$0xf] %vm500, %v3269
      %3278 = vst [vmem:[#allocation2 + $0x84] sm:$0xff] %v3270
      %3279 = vst.msk [vmem:[#allocation2 + $0x8c] sm:$0xf] %vm500, %v3271
      %3280 = vrot.lane.b32.xlu0 %v3216, 127
      %v3281 = vpop.permute.xlu0 %3280
      %3282 = vrot.lane.b32.xlu0 %v3217, 127
      %v3283 = vpop.permute.xlu0 %3282
      %3284 = vrot.lane.b32.xlu0 %v3218, 127
      %v3285 = vpop.permute.xlu0 %3284
      %v3286 = vsel %vm643, %v3281, %v3283
      %v3287 = vsel %vm643, %v3283, %v3285
      %3290 = vrot.lane.b32.xlu0 %v3216, 31
      %v3291 = vpop.permute.xlu0 %3290
      %v3294 = vsel %vm656, %v3285, %v3291
      %v3296 = vmul.bf16 %v670, %v3286
      %v3297 = vmul.bf16 %v676, %v3287
      %v3298 = vmul.bf16 %v682, %v3294
      %v3302 = vunpack.c.l.b16 %v3296
      %v3303 = vunpack.c.l.b16 %v3297
      %v3304 = vunpack.c.l.b16 %v3298
      %v3305 = vunpack.c.h.b16 %v3296
      %v3306 = vunpack.c.h.b16 %v3297
      %v3307 = vunpack.c.h.b16 %v3298
      %v3308 = vpack.c.b16 %v3303, %v3302
      %v3309 = vpack.c.b16 %v3304, %v3304
      %v3310 = vpack.c.b16 %v3306, %v3305
      %v3311 = vpack.c.b16 %v3307, %v3307
      %3316 = vst [vmem:[#allocation4 + $0x78] sm:$0xff] %v3308
      %3317 = vst.msk [vmem:[#allocation4 + $0x80] sm:$0xf] %vm500, %v3309
      %3318 = vst [vmem:[#allocation4 + $0x84] sm:$0xff] %v3310
      %3319 = vst.msk [vmem:[#allocation4 + $0x8c] sm:$0xf] %vm500, %v3311
      %s3320 = scalar_lea.vmem %s6, 4
      %v3321 = vld [vmem:[%s3320] sm:$0xf]
      %v3322 = vld [vmem:[#allocation3] sm:$0xff]
      %v3323 = vld [vmem:[#allocation3 + $0x8] sm:$0xf]
      %v3324 = vld [vmem:[#allocation3 + $0xc] sm:$0xff]
      %v3325 = vld [vmem:[#allocation3 + $0x14] sm:$0xf]
      %v3326 = vld [vmem:[#allocation3 + $0x18] sm:$0xff]
      %v3327 = vld [vmem:[#allocation3 + $0x20] sm:$0xf]
      %v3328 = vld [vmem:[#allocation3 + $0x24] sm:$0xff]
      %v3329 = vld [vmem:[#allocation3 + $0x2c] sm:$0xf]
      %v3330 = vld [vmem:[#allocation3 + $0x30] sm:$0xff]
      %v3331 = vld [vmem:[#allocation3 + $0x38] sm:$0xf]
      %v3332 = vld [vmem:[#allocation3 + $0x3c] sm:$0xff]
      %v3333 = vld [vmem:[#allocation3 + $0x44] sm:$0xf]
      %v3334 = vld [vmem:[#allocation3 + $0x48] sm:$0xff]
      %v3335 = vld [vmem:[#allocation3 + $0x50] sm:$0xf]
      %v3336 = vld [vmem:[#allocation3 + $0x54] sm:$0xff]
      %v3337 = vld [vmem:[#allocation3 + $0x5c] sm:$0xf]
      %v3338 = vld [vmem:[#allocation3 + $0x60] sm:$0xff]
      %v3339 = vld [vmem:[#allocation3 + $0x68] sm:$0xf]
      %v3340 = vld [vmem:[#allocation3 + $0x6c] sm:$0xff]
      %v3341 = vld [vmem:[#allocation3 + $0x74] sm:$0xf]
      %v3342 = vld [vmem:[#allocation3 + $0x78] sm:$0xff]
      %v3343 = vld [vmem:[#allocation3 + $0x80] sm:$0xf]
      %v3344 = vld [vmem:[#allocation3 + $0x84] sm:$0xff]
      %v3345 = vld [vmem:[#allocation3 + $0x8c] sm:$0xf]
      %v3346 = vld [vmem:[%s6] sm:$0xf]
      %v3347 = vld [vmem:[#allocation2] sm:$0xff]
      %v3348 = vld [vmem:[#allocation2 + $0x8] sm:$0xf]
      %v3349 = vld [vmem:[#allocation2 + $0xc] sm:$0xff]
      %v3350 = vld [vmem:[#allocation2 + $0x14] sm:$0xf]
      %v3351 = vld [vmem:[#allocation2 + $0x18] sm:$0xff]
      %v3352 = vld [vmem:[#allocation2 + $0x20] sm:$0xf]
      %v3353 = vld [vmem:[#allocation2 + $0x24] sm:$0xff]
      %v3354 = vld [vmem:[#allocation2 + $0x2c] sm:$0xf]
      %v3355 = vld [vmem:[#allocation2 + $0x30] sm:$0xff]
      %v3356 = vld [vmem:[#allocation2 + $0x38] sm:$0xf]
      %v3357 = vld [vmem:[#allocation2 + $0x3c] sm:$0xff]
      %v3358 = vld [vmem:[#allocation2 + $0x44] sm:$0xf]
      %v3359 = vld [vmem:[#allocation2 + $0x48] sm:$0xff]
      %v3360 = vld [vmem:[#allocation2 + $0x50] sm:$0xf]
      %v3361 = vld [vmem:[#allocation2 + $0x54] sm:$0xff]
      %v3362 = vld [vmem:[#allocation2 + $0x5c] sm:$0xf]
      %v3363 = vld [vmem:[#allocation2 + $0x60] sm:$0xff]
      %v3364 = vld [vmem:[#allocation2 + $0x68] sm:$0xf]
      %v3365 = vld [vmem:[#allocation2 + $0x6c] sm:$0xff]
      %v3366 = vld [vmem:[#allocation2 + $0x74] sm:$0xf]
      %v3367 = vld [vmem:[#allocation2 + $0x78] sm:$0xff]
      %v3368 = vld [vmem:[#allocation2 + $0x80] sm:$0xf]
      %v3369 = vld [vmem:[#allocation2 + $0x84] sm:$0xff]
      %v3370 = vld [vmem:[#allocation2 + $0x8c] sm:$0xf]
      %v3395 = vunpack.c.l.b16 %v3347
      %v3396 = vunpack.c.h.b16 %v3347
      %v3397 = vunpack.c.l.b16 %v3348
      %v3398 = vunpack.c.l.b16 %v3349
      %v3399 = vunpack.c.h.b16 %v3349
      %v3400 = vunpack.c.l.b16 %v3350
      %v3401 = vunpack.c.l.b16 %v3351
      %v3402 = vunpack.c.h.b16 %v3351
      %v3403 = vunpack.c.l.b16 %v3352
      %v3404 = vunpack.c.l.b16 %v3353
      %v3405 = vunpack.c.h.b16 %v3353
      %v3406 = vunpack.c.l.b16 %v3354
      %v3407 = vunpack.c.l.b16 %v3355
      %v3408 = vunpack.c.h.b16 %v3355
      %v3409 = vunpack.c.l.b16 %v3356
      %v3410 = vunpack.c.l.b16 %v3357
      %v3411 = vunpack.c.h.b16 %v3357
      %v3412 = vunpack.c.l.b16 %v3358
      %v3413 = vunpack.c.l.b16 %v3359
      %v3414 = vunpack.c.h.b16 %v3359
      %v3415 = vunpack.c.l.b16 %v3360
      %v3416 = vunpack.c.l.b16 %v3361
      %v3417 = vunpack.c.h.b16 %v3361
      %v3418 = vunpack.c.l.b16 %v3362
      %v3419 = vunpack.c.l.b16 %v3363
      %v3420 = vunpack.c.h.b16 %v3363
      %v3421 = vunpack.c.l.b16 %v3364
      %v3422 = vunpack.c.l.b16 %v3365
      %v3423 = vunpack.c.h.b16 %v3365
      %v3424 = vunpack.c.l.b16 %v3366
      %v3425 = vunpack.c.l.b16 %v3367
      %v3426 = vunpack.c.h.b16 %v3367
      %v3427 = vunpack.c.l.b16 %v3368
      %v3428 = vunpack.c.l.b16 %v3369
      %v3429 = vunpack.c.h.b16 %v3369
      %v3430 = vunpack.c.l.b16 %v3370
      %v3431 = vpack.c.b16 %v3398, %v3395
      %v3432 = vpack.c.b16 %v3399, %v3396
      %v3433 = vpack.c.b16 %v3400, %v3397
      %v3434 = vpack.c.b16 %v3404, %v3401
      %v3435 = vpack.c.b16 %v3405, %v3402
      %v3436 = vpack.c.b16 %v3406, %v3403
      %v3437 = vpack.c.b16 %v3410, %v3407
      %v3438 = vpack.c.b16 %v3411, %v3408
      %v3439 = vpack.c.b16 %v3412, %v3409
      %v3440 = vpack.c.b16 %v3416, %v3413
      %v3441 = vpack.c.b16 %v3417, %v3414
      %v3442 = vpack.c.b16 %v3418, %v3415
      %v3443 = vpack.c.b16 %v3422, %v3419
      %v3444 = vpack.c.b16 %v3423, %v3420
      %v3445 = vpack.c.b16 %v3424, %v3421
      %v3446 = vpack.c.b16 %v3428, %v3425
      %v3447 = vpack.c.b16 %v3429, %v3426
      %v3448 = vpack.c.b16 %v3430, %v3427
      %vm3467 = vcmask 785408
      %v3469 = vsel %vm3467, %v3346, 0
      %3471 = vmatprep.subr.bf16.mxu0 0
      %3472 = vmatpush1.bf16.msra.mxu0 0
      %3473 = vmatprep.subr.bf16.mxu0 0
      %3474 = vmatpush1.bf16.msra.mxu0 0
      %3475 = vmatprep.subr.bf16.mxu0 %v3447
      %3476 = vmatpush1.bf16.msra.mxu0 %v3446
      %3477 = vmatprep.subr.bf16.mxu0 %v3444
      %3478 = vmatpush1.bf16.msra.mxu0 %v3443
      %3479 = vmatprep.subr.bf16.mxu0 %v3441
      %3480 = vmatpush1.bf16.msra.mxu0 %v3440
      %3481 = vmatprep.subr.bf16.mxu0 %v3438
      %3482 = vmatpush1.bf16.msra.mxu0 %v3437
      %3483 = vmatprep.subr.bf16.mxu0 %v3435
      %3484 = vmatpush1.bf16.msra.mxu0 %v3434
      %3485 = vmatprep.subr.bf16.mxu0 %v3432
      %3486 = vmatpush1.bf16.msra.mxu0 %v3431
      %3487 = vmatprep.subr.bf16.mxu0 0
      %3488 = vmatpush2.bf16.msra.mxu0 0
      %3489 = vmatprep.subr.bf16.mxu0 0
      %3490 = vmatpush2.bf16.msra.mxu0 0
      %3491 = vmatprep.subr.bf16.mxu0 0
      %3492 = vmatpush2.bf16.msra.mxu0 0
      %3493 = vmatprep.subr.bf16.mxu0 0
      %3494 = vmatpush2.bf16.msra.mxu0 0
      %3495 = vmatprep.subr.bf16.mxu0 0
      %3496 = vmatpush2.bf16.msra.mxu0 0
      %3497 = vmatprep.subr.bf16.mxu0 0
      %3498 = vmatpush2.bf16.msra.mxu0 0
      %3499 = vmatprep.subr.bf16.mxu0 0
      %3500 = vmatpush2.bf16.msra.mxu0 0
      %3501 = vmatprep.subr.bf16.mxu0 0
      %3502 = vmatpush2.bf16.msra.mxu0 0
      %3503 = vmatprep.mubr.bf16.mxu0 0
      %3504 = vmatmul.mubr.bf16.gmra.mxu0 %v3469
      %v3505 = vpop.f32.mrf.mxu0
      %v3506 = vadd.f32 0.0, %v3505
      %v3507 = vpop.f32.mrf.mxu0
      %v3508 = vadd.f32 0.0, %v3507
      %v3509 = vpop.f32.mrf.mxu0
      %v3510 = vpop.f32.mrf.mxu0
      %3511 = vdwg.mxu0
      %3512 = vmatprep.subr.bf16.mxu0 0
      %3513 = vmatpush1.bf16.msra.mxu0 0
      %3514 = vmatprep.subr.bf16.mxu0 0
      %3515 = vmatpush1.bf16.msra.mxu0 0
      %3516 = vmatprep.subr.bf16.mxu0 0
      %3517 = vmatpush1.bf16.msra.mxu0 %v3448
      %3518 = vmatprep.subr.bf16.mxu0 0
      %3519 = vmatpush1.bf16.msra.mxu0 %v3445
      %3520 = vmatprep.subr.bf16.mxu0 0
      %3521 = vmatpush1.bf16.msra.mxu0 %v3442
      %3522 = vmatprep.subr.bf16.mxu0 0
      %3523 = vmatpush1.bf16.msra.mxu0 %v3439
      %3524 = vmatprep.subr.bf16.mxu0 0
      %3525 = vmatpush1.bf16.msra.mxu0 %v3436
      %3526 = vmatprep.subr.bf16.mxu0 0
      %3527 = vmatpush1.bf16.msra.mxu0 %v3433
      %3528 = vmatprep.subr.bf16.mxu0 0
      %3529 = vmatpush2.bf16.msra.mxu0 0
      %3530 = vmatprep.subr.bf16.mxu0 0
      %3531 = vmatpush2.bf16.msra.mxu0 0
      %3532 = vmatprep.subr.bf16.mxu0 0
      %3533 = vmatpush2.bf16.msra.mxu0 0
      %3534 = vmatprep.subr.bf16.mxu0 0
      %3535 = vmatpush2.bf16.msra.mxu0 0
      %3536 = vmatprep.subr.bf16.mxu0 0
      %3537 = vmatpush2.bf16.msra.mxu0 0
      %3538 = vmatprep.subr.bf16.mxu0 0
      %3539 = vmatpush2.bf16.msra.mxu0 0
      %3540 = vmatprep.subr.bf16.mxu0 0
      %3541 = vmatpush2.bf16.msra.mxu0 0
      %3542 = vmatprep.subr.bf16.mxu0 0
      %3543 = vmatpush2.bf16.msra.mxu0 0
      %3544 = vmatprep.mubr.bf16.mxu0 0
      %3545 = vmatmul.mubr.bf16.gmra.mxu0 %v3469
      %v3546 = vpop.f32.mrf.mxu0
      %v3547 = vadd.f32 0.0, %v3546
      %v3548 = vpop.f32.mrf.mxu0
      %v3549 = vpop.f32.mrf.mxu0
      %v3550 = vpop.f32.mrf.mxu0
      %3551 = vdwg.mxu0
      %v3576 = vunpack.c.l.b16 %v3322
      %v3577 = vunpack.c.h.b16 %v3322
      %v3578 = vunpack.c.l.b16 %v3323
      %v3579 = vunpack.c.l.b16 %v3324
      %v3580 = vunpack.c.h.b16 %v3324
      %v3581 = vunpack.c.l.b16 %v3325
      %v3582 = vunpack.c.l.b16 %v3326
      %v3583 = vunpack.c.h.b16 %v3326
      %v3584 = vunpack.c.l.b16 %v3327
      %v3585 = vunpack.c.l.b16 %v3328
      %v3586 = vunpack.c.h.b16 %v3328
      %v3587 = vunpack.c.l.b16 %v3329
      %v3588 = vunpack.c.l.b16 %v3330
      %v3589 = vunpack.c.h.b16 %v3330
      %v3590 = vunpack.c.l.b16 %v3331
      %v3591 = vunpack.c.l.b16 %v3332
      %v3592 = vunpack.c.h.b16 %v3332
      %v3593 = vunpack.c.l.b16 %v3333
      %v3594 = vunpack.c.l.b16 %v3334
      %v3595 = vunpack.c.h.b16 %v3334
      %v3596 = vunpack.c.l.b16 %v3335
      %v3597 = vunpack.c.l.b16 %v3336
      %v3598 = vunpack.c.h.b16 %v3336
      %v3599 = vunpack.c.l.b16 %v3337
      %v3600 = vunpack.c.l.b16 %v3338
      %v3601 = vunpack.c.h.b16 %v3338
      %v3602 = vunpack.c.l.b16 %v3339
      %v3603 = vunpack.c.l.b16 %v3340
      %v3604 = vunpack.c.h.b16 %v3340
      %v3605 = vunpack.c.l.b16 %v3341
      %v3606 = vunpack.c.l.b16 %v3342
      %v3607 = vunpack.c.h.b16 %v3342
      %v3608 = vunpack.c.l.b16 %v3343
      %v3609 = vunpack.c.l.b16 %v3344
      %v3610 = vunpack.c.h.b16 %v3344
      %v3611 = vunpack.c.l.b16 %v3345
      %v3612 = vpack.c.b16 %v3579, %v3576
      %v3613 = vpack.c.b16 %v3580, %v3577
      %v3614 = vpack.c.b16 %v3581, %v3578
      %v3615 = vpack.c.b16 %v3585, %v3582
      %v3616 = vpack.c.b16 %v3586, %v3583
      %v3617 = vpack.c.b16 %v3587, %v3584
      %v3618 = vpack.c.b16 %v3591, %v3588
      %v3619 = vpack.c.b16 %v3592, %v3589
      %v3620 = vpack.c.b16 %v3593, %v3590
      %v3621 = vpack.c.b16 %v3597, %v3594
      %v3622 = vpack.c.b16 %v3598, %v3595
      %v3623 = vpack.c.b16 %v3599, %v3596
      %v3624 = vpack.c.b16 %v3603, %v3600
      %v3625 = vpack.c.b16 %v3604, %v3601
      %v3626 = vpack.c.b16 %v3605, %v3602
      %v3627 = vpack.c.b16 %v3609, %v3606
      %v3628 = vpack.c.b16 %v3610, %v3607
      %v3629 = vpack.c.b16 %v3611, %v3608
      %v3649 = vsel %vm3467, %v3321, 0
      %3651 = vmatprep.subr.bf16.mxu0 0
      %3652 = vmatpush1.bf16.msra.mxu0 0
      %3653 = vmatprep.subr.bf16.mxu0 0
      %3654 = vmatpush1.bf16.msra.mxu0 0
      %3655 = vmatprep.subr.bf16.mxu0 %v3628
      %3656 = vmatpush1.bf16.msra.mxu0 %v3627
      %3657 = vmatprep.subr.bf16.mxu0 %v3625
      %3658 = vmatpush1.bf16.msra.mxu0 %v3624
      %3659 = vmatprep.subr.bf16.mxu0 %v3622
      %3660 = vmatpush1.bf16.msra.mxu0 %v3621
      %3661 = vmatprep.subr.bf16.mxu0 %v3619
      %3662 = vmatpush1.bf16.msra.mxu0 %v3618
      %3663 = vmatprep.subr.bf16.mxu0 %v3616
      %3664 = vmatpush1.bf16.msra.mxu0 %v3615
      %3665 = vmatprep.subr.bf16.mxu0 %v3613
      %3666 = vmatpush1.bf16.msra.mxu0 %v3612
      %3667 = vmatprep.subr.bf16.mxu0 0
      %3668 = vmatpush2.bf16.msra.mxu0 0
      %3669 = vmatprep.subr.bf16.mxu0 0
      %3670 = vmatpush2.bf16.msra.mxu0 0
      %3671 = vmatprep.subr.bf16.mxu0 0
      %3672 = vmatpush2.bf16.msra.mxu0 0
      %3673 = vmatprep.subr.bf16.mxu0 0
      %3674 = vmatpush2.bf16.msra.mxu0 0
      %3675 = vmatprep.subr.bf16.mxu0 0
      %3676 = vmatpush2.bf16.msra.mxu0 0
      %3677 = vmatprep.subr.bf16.mxu0 0
      %3678 = vmatpush2.bf16.msra.mxu0 0
      %3679 = vmatprep.subr.bf16.mxu0 0
      %3680 = vmatpush2.bf16.msra.mxu0 0
      %3681 = vmatprep.subr.bf16.mxu0 0
      %3682 = vmatpush2.bf16.msra.mxu0 0
      %3683 = vmatprep.mubr.bf16.mxu0 0
      %3684 = vmatmul.mubr.bf16.gmra.mxu0 %v3649
      %v3685 = vpop.f32.mrf.mxu0
      %v3686 = vadd.f32 %v3506, %v3685
      %v3687 = vpop.f32.mrf.mxu0
      %v3688 = vadd.f32 %v3508, %v3687
      %v3689 = vpop.f32.mrf.mxu0
      %v3690 = vpop.f32.mrf.mxu0
      %3691 = vdwg.mxu0
      %3692 = vmatprep.subr.bf16.mxu0 0
      %3693 = vmatpush1.bf16.msra.mxu0 0
      %3694 = vmatprep.subr.bf16.mxu0 0
      %3695 = vmatpush1.bf16.msra.mxu0 0
      %3696 = vmatprep.subr.bf16.mxu0 0
      %3697 = vmatpush1.bf16.msra.mxu0 %v3629
      %3698 = vmatprep.subr.bf16.mxu0 0
      %3699 = vmatpush1.bf16.msra.mxu0 %v3626
      %3700 = vmatprep.subr.bf16.mxu0 0
      %3701 = vmatpush1.bf16.msra.mxu0 %v3623
      %3702 = vmatprep.subr.bf16.mxu0 0
      %3703 = vmatpush1.bf16.msra.mxu0 %v3620
      %3704 = vmatprep.subr.bf16.mxu0 0
      %3705 = vmatpush1.bf16.msra.mxu0 %v3617
      %3706 = vmatprep.subr.bf16.mxu0 0
      %3707 = vmatpush1.bf16.msra.mxu0 %v3614
      %3708 = vmatprep.subr.bf16.mxu0 0
      %3709 = vmatpush2.bf16.msra.mxu0 0
      %3710 = vmatprep.subr.bf16.mxu0 0
      %3711 = vmatpush2.bf16.msra.mxu0 0
      %3712 = vmatprep.subr.bf16.mxu0 0
      %3713 = vmatpush2.bf16.msra.mxu0 0
      %3714 = vmatprep.subr.bf16.mxu0 0
      %3715 = vmatpush2.bf16.msra.mxu0 0
      %3716 = vmatprep.subr.bf16.mxu0 0
      %3717 = vmatpush2.bf16.msra.mxu0 0
      %3718 = vmatprep.subr.bf16.mxu0 0
      %3719 = vmatpush2.bf16.msra.mxu0 0
      %3720 = vmatprep.subr.bf16.mxu0 0
      %3721 = vmatpush2.bf16.msra.mxu0 0
      %3722 = vmatprep.subr.bf16.mxu0 0
      %3723 = vmatpush2.bf16.msra.mxu0 0
      %3724 = vmatprep.mubr.bf16.mxu0 0
      %3725 = vmatmul.mubr.bf16.gmra.mxu0 %v3649
      %v3726 = vpop.f32.mrf.mxu0
      %v3727 = vadd.f32 %v3547, %v3726
      %v3728 = vpop.f32.mrf.mxu0
      %v3729 = vpop.f32.mrf.mxu0
      %v3730 = vpop.f32.mrf.mxu0
      %3731 = vdwg.mxu0
      %s3732 = scalar_lea.vmem %s6, 8
      %v3733 = vld [vmem:[%s3732] sm:$0xf]
      %v3734 = vld [vmem:[#allocation4] sm:$0xff]
      %v3735 = vld [vmem:[#allocation4 + $0x8] sm:$0xf]
      %v3736 = vld [vmem:[#allocation4 + $0xc] sm:$0xff]
      %v3737 = vld [vmem:[#allocation4 + $0x14] sm:$0xf]
      %v3738 = vld [vmem:[#allocation4 + $0x18] sm:$0xff]
      %v3739 = vld [vmem:[#allocation4 + $0x20] sm:$0xf]
      %v3740 = vld [vmem:[#allocation4 + $0x24] sm:$0xff]
      %v3741 = vld [vmem:[#allocation4 + $0x2c] sm:$0xf]
      %v3742 = vld [vmem:[#allocation4 + $0x30] sm:$0xff]
      %v3743 = vld [vmem:[#allocation4 + $0x38] sm:$0xf]
      %v3744 = vld [vmem:[#allocation4 + $0x3c] sm:$0xff]
      %v3745 = vld [vmem:[#allocation4 + $0x44] sm:$0xf]
      %v3746 = vld [vmem:[#allocation4 + $0x48] sm:$0xff]
      %v3747 = vld [vmem:[#allocation4 + $0x50] sm:$0xf]
      %v3748 = vld [vmem:[#allocation4 + $0x54] sm:$0xff]
      %v3749 = vld [vmem:[#allocation4 + $0x5c] sm:$0xf]
      %v3750 = vld [vmem:[#allocation4 + $0x60] sm:$0xff]
      %v3751 = vld [vmem:[#allocation4 + $0x68] sm:$0xf]
      %v3752 = vld [vmem:[#allocation4 + $0x6c] sm:$0xff]
      %v3753 = vld [vmem:[#allocation4 + $0x74] sm:$0xf]
      %v3754 = vld [vmem:[#allocation4 + $0x78] sm:$0xff]
      %v3755 = vld [vmem:[#allocation4 + $0x80] sm:$0xf]
      %v3756 = vld [vmem:[#allocation4 + $0x84] sm:$0xff]
      %v3757 = vld [vmem:[#allocation4 + $0x8c] sm:$0xf]
      %v3782 = vunpack.c.l.b16 %v3734
      %v3783 = vunpack.c.h.b16 %v3734
      %v3784 = vunpack.c.l.b16 %v3735
      %v3785 = vunpack.c.l.b16 %v3736
      %v3786 = vunpack.c.h.b16 %v3736
      %v3787 = vunpack.c.l.b16 %v3737
      %v3788 = vunpack.c.l.b16 %v3738
      %v3789 = vunpack.c.h.b16 %v3738
      %v3790 = vunpack.c.l.b16 %v3739
      %v3791 = vunpack.c.l.b16 %v3740
      %v3792 = vunpack.c.h.b16 %v3740
      %v3793 = vunpack.c.l.b16 %v3741
      %v3794 = vunpack.c.l.b16 %v3742
      %v3795 = vunpack.c.h.b16 %v3742
      %v3796 = vunpack.c.l.b16 %v3743
      %v3797 = vunpack.c.l.b16 %v3744
      %v3798 = vunpack.c.h.b16 %v3744
      %v3799 = vunpack.c.l.b16 %v3745
      %v3800 = vunpack.c.l.b16 %v3746
      %v3801 = vunpack.c.h.b16 %v3746
      %v3802 = vunpack.c.l.b16 %v3747
      %v3803 = vunpack.c.l.b16 %v3748
      %v3804 = vunpack.c.h.b16 %v3748
      %v3805 = vunpack.c.l.b16 %v3749
      %v3806 = vunpack.c.l.b16 %v3750
      %v3807 = vunpack.c.h.b16 %v3750
      %v3808 = vunpack.c.l.b16 %v3751
      %v3809 = vunpack.c.l.b16 %v3752
      %v3810 = vunpack.c.h.b16 %v3752
      %v3811 = vunpack.c.l.b16 %v3753
      %v3812 = vunpack.c.l.b16 %v3754
      %v3813 = vunpack.c.h.b16 %v3754
      %v3814 = vunpack.c.l.b16 %v3755
      %v3815 = vunpack.c.l.b16 %v3756
      %v3816 = vunpack.c.h.b16 %v3756
      %v3817 = vunpack.c.l.b16 %v3757
      %v3818 = vpack.c.b16 %v3785, %v3782
      %v3819 = vpack.c.b16 %v3786, %v3783
      %v3820 = vpack.c.b16 %v3787, %v3784
      %v3821 = vpack.c.b16 %v3791, %v3788
      %v3822 = vpack.c.b16 %v3792, %v3789
      %v3823 = vpack.c.b16 %v3793, %v3790
      %v3824 = vpack.c.b16 %v3797, %v3794
      %v3825 = vpack.c.b16 %v3798, %v3795
      %v3826 = vpack.c.b16 %v3799, %v3796
      %v3827 = vpack.c.b16 %v3803, %v3800
      %v3828 = vpack.c.b16 %v3804, %v3801
      %v3829 = vpack.c.b16 %v3805, %v3802
      %v3830 = vpack.c.b16 %v3809, %v3806
      %v3831 = vpack.c.b16 %v3810, %v3807
      %v3832 = vpack.c.b16 %v3811, %v3808
      %v3833 = vpack.c.b16 %v3815, %v3812
      %v3834 = vpack.c.b16 %v3816, %v3813
      %v3835 = vpack.c.b16 %v3817, %v3814
      %v3855 = vsel %vm3467, %v3733, 0
      %3857 = vmatprep.subr.bf16.mxu0 0
      %3858 = vmatpush1.bf16.msra.mxu0 0
      %3859 = vmatprep.subr.bf16.mxu0 0
      %3860 = vmatpush1.bf16.msra.mxu0 0
      %3861 = vmatprep.subr.bf16.mxu0 %v3834
      %3862 = vmatpush1.bf16.msra.mxu0 %v3833
      %3863 = vmatprep.subr.bf16.mxu0 %v3831
      %3864 = vmatpush1.bf16.msra.mxu0 %v3830
      %3865 = vmatprep.subr.bf16.mxu0 %v3828
      %3866 = vmatpush1.bf16.msra.mxu0 %v3827
      %3867 = vmatprep.subr.bf16.mxu0 %v3825
      %3868 = vmatpush1.bf16.msra.mxu0 %v3824
      %3869 = vmatprep.subr.bf16.mxu0 %v3822
      %3870 = vmatpush1.bf16.msra.mxu0 %v3821
      %3871 = vmatprep.subr.bf16.mxu0 %v3819
      %3872 = vmatpush1.bf16.msra.mxu0 %v3818
      %3873 = vmatprep.subr.bf16.mxu0 0
      %3874 = vmatpush2.bf16.msra.mxu0 0
      %3875 = vmatprep.subr.bf16.mxu0 0
      %3876 = vmatpush2.bf16.msra.mxu0 0
      %3877 = vmatprep.subr.bf16.mxu0 0
      %3878 = vmatpush2.bf16.msra.mxu0 0
      %3879 = vmatprep.subr.bf16.mxu0 0
      %3880 = vmatpush2.bf16.msra.mxu0 0
      %3881 = vmatprep.subr.bf16.mxu0 0
      %3882 = vmatpush2.bf16.msra.mxu0 0
      %3883 = vmatprep.subr.bf16.mxu0 0
      %3884 = vmatpush2.bf16.msra.mxu0 0
      %3885 = vmatprep.subr.bf16.mxu0 0
      %3886 = vmatpush2.bf16.msra.mxu0 0
      %3887 = vmatprep.subr.bf16.mxu0 0
      %3888 = vmatpush2.bf16.msra.mxu0 0
      %3889 = vmatprep.mubr.bf16.mxu0 0
      %3890 = vmatmul.mubr.bf16.gmra.mxu0 %v3855
      %v3891 = vpop.f32.mrf.mxu0
      %v3892 = vadd.f32 0.0, %v3891
      %v3893 = vpop.f32.mrf.mxu0
      %v3894 = vadd.f32 0.0, %v3893
      %v3895 = vpop.f32.mrf.mxu0
      %v3896 = vpop.f32.mrf.mxu0
      %3897 = vdwg.mxu0
      %3898 = vmatprep.subr.bf16.mxu0 0
      %3899 = vmatpush1.bf16.msra.mxu0 0
      %3900 = vmatprep.subr.bf16.mxu0 0
      %3901 = vmatpush1.bf16.msra.mxu0 0
      %3902 = vmatprep.subr.bf16.mxu0 0
      %3903 = vmatpush1.bf16.msra.mxu0 %v3835
      %3904 = vmatprep.subr.bf16.mxu0 0
      %3905 = vmatpush1.bf16.msra.mxu0 %v3832
      %3906 = vmatprep.subr.bf16.mxu0 0
      %3907 = vmatpush1.bf16.msra.mxu0 %v3829
      %3908 = vmatprep.subr.bf16.mxu0 0
      %3909 = vmatpush1.bf16.msra.mxu0 %v3826
      %3910 = vmatprep.subr.bf16.mxu0 0
      %3911 = vmatpush1.bf16.msra.mxu0 %v3823
      %3912 = vmatprep.subr.bf16.mxu0 0
      %3913 = vmatpush1.bf16.msra.mxu0 %v3820
      %3914 = vmatprep.subr.bf16.mxu0 0
      %3915 = vmatpush2.bf16.msra.mxu0 0
      %3916 = vmatprep.subr.bf16.mxu0 0
      %3917 = vmatpush2.bf16.msra.mxu0 0
      %3918 = vmatprep.subr.bf16.mxu0 0
      %3919 = vmatpush2.bf16.msra.mxu0 0
      %3920 = vmatprep.subr.bf16.mxu0 0
      %3921 = vmatpush2.bf16.msra.mxu0 0
      %3922 = vmatprep.subr.bf16.mxu0 0
      %3923 = vmatpush2.bf16.msra.mxu0 0
      %3924 = vmatprep.subr.bf16.mxu0 0
      %3925 = vmatpush2.bf16.msra.mxu0 0
      %3926 = vmatprep.subr.bf16.mxu0 0
      %3927 = vmatpush2.bf16.msra.mxu0 0
      %3928 = vmatprep.subr.bf16.mxu0 0
      %3929 = vmatpush2.bf16.msra.mxu0 0
      %3930 = vmatprep.mubr.bf16.mxu0 0
      %3931 = vmatmul.mubr.bf16.gmra.mxu0 %v3855
      %v3932 = vpop.f32.mrf.mxu0
      %v3933 = vadd.f32 0.0, %v3932
      %v3934 = vpop.f32.mrf.mxu0
      %v3935 = vpop.f32.mrf.mxu0
      %v3936 = vpop.f32.mrf.mxu0
      %3937 = vdwg.mxu0
      %v3938 = vadd.f32 %v3686, %v3892
      %v3939 = vadd.f32 %v3688, %v3894
      %v3940 = vadd.f32 %v3727, %v3933
      %v3941 = vld [vmem:[%s11] sm:$0xff]
      %3943 = vset.pattern.permute.xlu0 0
      %3944 = vperm.xlu0 %3943, %v3941
      %v3945 = vpop.permute.xlu0 %3944
      %v3947 = vadd.f32 %v3938, %v3945
      %v3948 = vadd.f32 %v3939, %v3945
      %v3949 = vadd.f32 %v3940, %v3945
      %v3950 = vmul.f32 %v3947, 0.2
      %v3951 = vmul.f32 %v3948, 0.2
      %v3952 = vmul.f32 %v3949, 0.2
      %v3953 = vadd.f32 %v3950, %v415
      %v3954 = vadd.f32 %v3951, %v416
      %v3955 = vadd.f32 %v3952, %v417
      %3959 = vrot.lane.b32.xlu0 %v3953, 112
      %v3960 = vpop.permute.xlu0 %3959
      %3961 = vrot.lane.b32.xlu0 %v3954, 112
      %v3962 = vpop.permute.xlu0 %3961
      %3963 = vrot.lane.b32.xlu0 %v3955, 112
      %v3964 = vpop.permute.xlu0 %3963
      %vm3965 = vcmask 916480
      %v3966 = vsel %vm3965, %v3960, %v3962
      %v3967 = vsel %vm3965, %v3962, %v3964
      %3970 = vst [vmem:[%s413] sm:$0xff] %v3966
      %3971 = vst [vmem:[%s413 + $0x8] sm:$0xff] %v3967
      %p3972 = scmp.lt.s32.totalorder %s23, 1
      %s3973 = scalar_select %p3972, %s23, 1
      %s3974 = smul.addr %s3973, 2
      %s3975 = smul.addr %s3974, 8
      %s3976 = scalar_lea.vmem %s12, %s3975
      // Predicated region
      $region69: #{rdb5c_forward.1} parent=67 // pred_check
        %p3977 = pneg %p298
      $region70: #{rdb5c_forward.1} parent=67 // pred_check_branch
        %3979 = sbr.rel (%p3977) target = $region72
      $region71: #{rdb5c_forward.1} parent=67 // pred_region
        _
      $region72: #{rdb5c_forward.1} parent=67 // pred_fallthru
        _
    $region68: #{rdb5c_forward.1} parent=5 // pred_fallthru
      _
    %p3980 = scmp.le.s32.totalorder 2, %s18
    // Predicated region
    $region73: #{rdb5c_forward.1} parent=5 // pred_check
      %p3981 = pneg %p3980
    $region74: #{rdb5c_forward.1} parent=5 // pred_check_branch
      %3983 = sbr.rel (%p3981) target = $region76
    $region75: #{rdb5c_forward.1} parent=5 // pred_region
      %s3984 = ssub.s32 %s18, 2
      // Predicated region
      $region77: #{rdb5c_forward.1} parent=75 // pred_check
        %p3985 = pneg %p304
      $region78: #{rdb5c_forward.1} parent=75 // pred_check_branch
        %3987 = sbr.rel (%p3985) target = $region80
      $region79: #{rdb5c_forward.1} parent=75 // pred_region
        %p3988 = scmp.lt.s32.totalorder %s24, 1
        %s3989 = scalar_select %p3988, %s24, 1
        %s3990 = smul.addr %s3989, 2
        %s3991 = smul.addr %s3990, 8
        %s3992 = scalar_lea.vmem %s12, %s3991
      $region80: #{rdb5c_forward.1} parent=75 // pred_fallthru
        _
    $region76: #{rdb5c_forward.1} parent=5 // pred_fallthru
      _
  $region6: #{rdb5c_forward.1} parent=0 // loop_footer
    %s22 = sadd.s32 1, %s18
  $region7: #{rdb5c_forward.1} parent=0 // loop_footer_branch
    %17 = sbr.rel target = $region3
  $region8: #{rdb5c_forward.1} parent=0 // loop_exit
    _

</llo_original>
